<compile_context>
chip_gen: v6e
topology: v6e:2x2x1
jax: 0.10.0
libtpu: 0.0.40
codegen_flags: <defaults>
</compile_context>

<pallas_src>
import functools

import jax
import jax.numpy as jnp
from jax.experimental import pallas as pl
from jax.experimental.pallas import tpu as pltpu


# ----------------------------- tiling / limits ------------------------------
@functools.lru_cache(maxsize=None)
def _vmem_limit_bytes():
    """Per-generation VMEM limit (v7x: 64 MiB physical; v5e/v6e: 128 MiB)."""
    try:
        cap = int(pltpu.get_tpu_info().vmem_capacity_bytes)
    except Exception:
        cap = 0
    if cap <= 0:
        return 40 * 1024 * 1024  # conservative fallback, safe on every generation
    return max(32 * 1024 * 1024, min((cap * 3) // 4, 100 * 1024 * 1024))


def _pick_tiles(n):
    """Return (padded_n, tm, tk, lstm_tile).

    dst tile tm stays <= 512; src (lane) tile tk grows to 2048 when it divides
    the padded node count (longer contiguous adj DMA rows, fewer grid steps).
    The LSTM node tile is decoupled from the conv tiles and also grows.
    """
    if n <= 512:
        return n, n, n, n
    np_ = ((n + 511) // 512) * 512
    tm = 512
    if np_ % 2048 == 0:
        tk = 2048
    elif np_ % 1024 == 0:
        tk = 1024
    else:
        tk = 512
    return np_, tm, tk, tk


# --------------------------- fused LSTM encoder -----------------------------
def _permute_gates(w, h):
    """PyTorch packed gate order (i, f, g, o) -> (i, f, o, g) along axis 0."""
    return jnp.concatenate([w[:h], w[h:2 * h], w[3 * h:4 * h], w[2 * h:3 * h]], axis=0)


def _lstm_encoder_kernel(x_ref, w1_ref, wh1_ref, b1_ref,
                         wi2_ref, wh2_ref, b2_ref, y_ref, *, hid, emb):
    """Two stacked LSTM layers over the full sequence for one tile of nodes.

    Gate columns are pre-permuted to (i, f, o | g): one sigmoid pass over the
    first 3*H columns and one tanh pass over the last H columns per layer/step.
    x_ref: (tn, T) raw scalar sequence (n_features == 1).
    y_ref: (tn, T*emb), time-major along lanes == PyTorch reshape(N, -1).
    """
    tn, T = x_ref.shape
    x = x_ref[...]                                   # (tn, T)
    w1 = w1_ref[...]                                 # (1, 4*hid)   W_ih1^T (C_in=1)
    wh1 = wh1_ref[...]                               # (hid, 4*hid)
    b1 = b1_ref[...]                                 # (1, 4*hid)   b_ih1 + b_hh1
    wi2 = wi2_ref[...]                               # (hid, 4*emb)
    wh2 = wh2_ref[...]                               # (emb, 4*emb)
    b2 = b2_ref[...]                                 # (1, 4*emb)   b_ih2 + b_hh2

    h1 = jnp.zeros((tn, hid), jnp.float32)
    c1 = jnp.zeros((tn, hid), jnp.float32)
    h2 = jnp.zeros((tn, emb), jnp.float32)
    c2 = jnp.zeros((tn, emb), jnp.float32)

    # T is static and short: fully unroll so the LLO scheduler overlaps the
    # tiny recurrent matmuls, the EUP activations and the per-step stores.
    for t in range(T):
        # Layer 1. Input projection is an outer product (C_in == 1): a cheap
        # VPU broadcast multiply, off the MXU / recurrent-matmul path.
        g1 = x[:, t:t + 1] * w1 + b1 + jnp.dot(h1, wh1,
                                               preferred_element_type=jnp.float32)
        s1 = jax.nn.sigmoid(g1[:, :3 * hid])
        i1 = s1[:, :hid]
        f1 = s1[:, hid:2 * hid]
        o1 = s1[:, 2 * hid:3 * hid]
        gg1 = jnp.tanh(g1[:, 3 * hid:])
        c1 = f1 * c1 + i1 * gg1
        h1 = o1 * jnp.tanh(c1)

        # Layer 2.
        g2 = (jnp.dot(h1, wi2, preferred_element_type=jnp.float32)
              + jnp.dot(h2, wh2, preferred_element_type=jnp.float32) + b2)
        s2 = jax.nn.sigmoid(g2[:, :3 * emb])
        i2 = s2[:, :emb]
        f2 = s2[:, emb:2 * emb]
        o2 = s2[:, 2 * emb:3 * emb]
        gg2 = jnp.tanh(g2[:, 3 * emb:])
        c2 = f2 * c2 + i2 * gg2
        h2 = o2 * jnp.tanh(c2)

        # Per-timestep store (static slice): no concat, low live-vreg count.
        y_ref[:, t * emb:(t + 1) * emb] = h2


def lstm_encoder(x, params, *, node_tile):
    """x: (Np, T) float32 (unsqueeze(2) is implicit since n_features == 1)."""
    N, T = x.shape
    hid = params['lstm1_w_hh'].shape[1]
    emb = params['lstm2_w_hh'].shape[1]

    w1 = jnp.transpose(_permute_gates(params['lstm1_w_ih'], hid)).astype(jnp.float32)
    wh1 = jnp.transpose(_permute_gates(params['lstm1_w_hh'], hid)).astype(jnp.float32)
    b1 = _permute_gates(params['lstm1_b_ih'] + params['lstm1_b_hh'],
                        hid).reshape(1, -1).astype(jnp.float32)
    wi2 = jnp.transpose(_permute_gates(params['lstm2_w_ih'], emb)).astype(jnp.float32)
    wh2 = jnp.transpose(_permute_gates(params['lstm2_w_hh'], emb)).astype(jnp.float32)
    b2 = _permute_gates(params['lstm2_b_ih'] + params['lstm2_b_hh'],
                        emb).reshape(1, -1).astype(jnp.float32)

    tn = node_tile
    full = lambda i: (0, 0)
    return pl.pallas_call(
        functools.partial(_lstm_encoder_kernel, hid=hid, emb=emb),
        out_shape=jax.ShapeDtypeStruct((N, T * emb), jnp.float32),
        grid_spec=pltpu.PrefetchScalarGridSpec(
            num_scalar_prefetch=0,
            grid=(N // tn,),
            in_specs=[
                pl.BlockSpec((tn, T), lambda i: (i, 0)),       # x
                pl.BlockSpec((1, 4 * hid), full),              # W_ih1^T
                pl.BlockSpec((hid, 4 * hid), full),            # W_hh1^T
                pl.BlockSpec((1, 4 * hid), full),              # b1
                pl.BlockSpec((hid, 4 * emb), full),            # W_ih2^T
                pl.BlockSpec((emb, 4 * emb), full),            # W_hh2^T
                pl.BlockSpec((1, 4 * emb), full),              # b2
            ],
            out_specs=pl.BlockSpec((tn, T * emb), lambda i: (i, 0)),
        ),
        compiler_params=pltpu.CompilerParams(
            dimension_semantics=("parallel",),
            vmem_limit_bytes=_vmem_limit_bytes(),
        ),
    )(x, w1, wh1, b1, wi2, wh2, b2)


# --------------------------- SAGEConv 'gcn' kernels --------------------------
def _sage_gcn_first_kernel(adj_ref, hw_ref, hwd_ref, b_ref,
                           o_ref, inv_ref, acc_ref, *, f_out):
    """Layer 1: hw has an extra ones column, so its last acc column is the
    in-degree; emits inv_norm = 1/(deg+1) as a second output for later layers.
    """
    k = pl.program_id(1)

    @pl.when(k == 0)
    def _():
        acc_ref[...] = jnp.zeros_like(acc_ref)

    # bf16 adj @ bf16 [hW^T | 1], f32 accumulation (native bf16 MXU path).
    acc_ref[...] += jnp.dot(adj_ref[...], hw_ref[...],
                            preferred_element_type=jnp.float32)

    @pl.when(k == pl.num_programs(1) - 1)
    def _():
        acc = acc_ref[...]
        deg = acc[:, f_out:f_out + 1]                      # (tm, 1) in-degree
        inv = pl.reciprocal(deg + 1.0, approx=True)        # EUP, off the VPU path
        self_term = hwd_ref[...][:, :f_out].astype(jnp.float32)
        o_ref[...] = (acc[:, :f_out] + self_term) * inv + b_ref[...]
        inv_ref[...] = inv


def _sage_gcn_kernel(adj_ref, hw_ref, hwd_ref, b_ref, inv_ref,
                     o_ref, acc_ref, *, apply_relu):
    """Layers 2/3: reuse inv_norm from layer 1; optional fused ReLU."""
    k = pl.program_id(1)

    @pl.when(k == 0)
    def _():
        acc_ref[...] = jnp.zeros_like(acc_ref)

    acc_ref[...] += jnp.dot(adj_ref[...], hw_ref[...],
                            preferred_element_type=jnp.float32)

    @pl.when(k == pl.num_programs(1) - 1)
    def _():
        out = (acc_ref[...] + hwd_ref[...].astype(jnp.float32)) * inv_ref[...] \
            + b_ref[...]
        if apply_relu:
            out = jnp.maximum(out, 0.0)
        o_ref[...] = out


def _sage_compiler_params():
    # dst axis "parallel" -> shards across TensorCores on megacore parts.
    # (If profiling on v7x shows the dst loop staying serial, switch this axis
    #  to pltpu.CORE_PARALLEL.)
    return pltpu.CompilerParams(
        dimension_semantics=("parallel", "arbitrary"),
        vmem_limit_bytes=_vmem_limit_bytes(),
    )


def sage_conv_first(adj_b, hw_aug, b, *, tm, tk):
    """adj_b: (Np, Np) bf16; hw_aug: (Np, f_out+1) bf16 = [h@W^T | ones]."""
    Np, f_aug = hw_aug.shape
    f_out = f_aug - 1
    b2d = b.reshape(1, f_out).astype(jnp.float32)
    grid = (Np // tm, Np // tk)
    return pl.pallas_call(
        functools.partial(_sage_gcn_first_kernel, f_out=f_out),
        out_shape=(jax.ShapeDtypeStruct((Np, f_out), jnp.float32),
                   jax.ShapeDtypeStruct((Np, 1), jnp.float32)),
        grid_spec=pltpu.PrefetchScalarGridSpec(
            num_scalar_prefetch=0,
            grid=grid,
            in_specs=[
                pl.BlockSpec((tm, tk), lambda i, k: (i, k)),      # adj (bf16)
                pl.BlockSpec((tk, f_aug), lambda i, k: (k, 0)),   # [hW^T|1] src
                pl.BlockSpec((tm, f_aug), lambda i, k: (i, 0)),   # [hW^T|1] dst (self)
                pl.BlockSpec((1, f_out), lambda i, k: (0, 0)),    # bias
            ],
            out_specs=(pl.BlockSpec((tm, f_out), lambda i, k: (i, 0)),
                       pl.BlockSpec((tm, 1), lambda i, k: (i, 0))),
            scratch_shapes=[pltpu.VMEM((tm, f_aug), jnp.float32)],
        ),
        compiler_params=_sage_compiler_params(),
    )(adj_b, hw_aug, hw_aug, b2d)


def sage_conv(adj_b, hw, inv_norm, b, *, tm, tk, apply_relu=False):
    """adj_b: (Np, Np) bf16; hw: (Np, f_out) bf16 pre-projected features;
    inv_norm: (Np, 1) f32 = 1/(in_deg+1) from layer 1."""
    Np, f_out = hw.shape
    b2d = b.reshape(1, f_out).astype(jnp.float32)
    grid = (Np // tm, Np // tk)
    return pl.pallas_call(
        functools.partial(_sage_gcn_kernel, apply_relu=apply_relu),
        out_shape=jax.ShapeDtypeStruct((Np, f_out), jnp.float32),
        grid_spec=pltpu.PrefetchScalarGridSpec(
            num_scalar_prefetch=0,
            grid=grid,
            in_specs=[
                pl.BlockSpec((tm, tk), lambda i, k: (i, k)),      # adj (bf16)
                pl.BlockSpec((tk, f_out), lambda i, k: (k, 0)),   # hW^T src
                pl.BlockSpec((tm, f_out), lambda i, k: (i, 0)),   # hW^T dst (self)
                pl.BlockSpec((1, f_out), lambda i, k: (0, 0)),    # bias
                pl.BlockSpec((tm, 1), lambda i, k: (i, 0)),       # 1/(deg+1)
            ],
            out_specs=pl.BlockSpec((tm, f_out), lambda i, k: (i, 0)),
            scratch_shapes=[pltpu.VMEM((tm, f_out), jnp.float32)],
        ),
        compiler_params=_sage_compiler_params(),
    )(adj_b, hw, hw, b2d, inv_norm)


# ------------------------------- GraphSAGE ----------------------------------
def init_params(key, seq_len, emb):
    """PyTorch-layout parameters. n_features == 1 (forced by unsqueeze(2))."""
    hid = 2 * emb
    in_feats = seq_len * emb
    ks = jax.random.split(key, 11)

    def u(k, shape, scale):
        return jax.random.uniform(k, shape, jnp.float32, -scale, scale)

    s1 = 1.0 / float(jnp.sqrt(hid))
    s2 = 1.0 / float(jnp.sqrt(emb))
    s3 = 1.0 / float(jnp.sqrt(in_feats))
    return dict(
        lstm1_w_ih=u(ks[0], (4 * hid, 1), s1),
        lstm1_w_hh=u(ks[1], (4 * hid, hid), s1),
        lstm1_b_ih=u(ks[2], (4 * hid,), s1),
        lstm1_b_hh=u(ks[3], (4 * hid,), s1),
        lstm2_w_ih=u(ks[4], (4 * emb, hid), s2),
        lstm2_w_hh=u(ks[5], (4 * emb, emb), s2),
        lstm2_b_ih=u(ks[6], (4 * emb,), s2),
        lstm2_b_hh=u(ks[7], (4 * emb,), s2),
        conv1_w=u(ks[8], (emb, in_feats), s3),
        conv1_b=jnp.zeros((emb,), jnp.float32),
        conv2_w=u(ks[9], (emb, emb), s2),
        conv2_b=jnp.zeros((emb,), jnp.float32),
        conv3_w=u(ks[10], (emb, emb), s2),
        conv3_b=jnp.zeros((emb,), jnp.float32),
    )


def graphsage_forward(params, adj, in_feat):
    """adj: (N, N) dense 0/1 adjacency (adj[dst, src]) standing in for the DGL
    graph `g`; in_feat: (N, seq_len)."""
    N = in_feat.shape[0]
    Np, tm, tk, lstm_tile = _pick_tiles(N)
    if Np != N:  # zero-pad nodes so all tiles are full (padded rows are inert)
        in_feat = jnp.pad(in_feat, ((0, Np - N), (0, 0)))
        adj = jnp.pad(adj, ((0, Np - N), (0, Np - N)))

    # 0/1 adjacency is exact in bf16; half the HBM stream of f32.
    # TODO(synk): store adj as int8 (v5e/v6e) or fp8-e4m3 (v7x) for a further
    # 2x cut of the dominant HBM stream; kept bf16 here for portability.
    adj_b = adj.astype(jnp.bfloat16)

    # Encoder (both LSTM layers fused; output already (Np, seq_len*emb)).
    x = lstm_encoder(in_feat.astype(jnp.float32), params, node_tile=lstm_tile)

    # Pre-project once per layer (tiny XLA matmuls) and stream bf16 into the
    # aggregation kernels. Layer 1 carries an extra ones column so its kernel
    # also produces the in-degree (no separate N^2 pass for the degree).
    ones = jnp.ones((Np, 1), jnp.float32)
    hw1 = jnp.concatenate([x @ params['conv1_w'].T, ones], axis=1).astype(jnp.bfloat16)
    h, inv_norm = sage_conv_first(adj_b, hw1, params['conv1_b'], tm=tm, tk=tk)

    hw2 = (h @ params['conv2_w'].T).astype(jnp.bfloat16)
    h = sage_conv(adj_b, hw2, inv_norm, params['conv2_b'], tm=tm, tk=tk)

    hw3 = (h @ params['conv3_w'].T).astype(jnp.bfloat16)
    h = sage_conv(adj_b, hw3, inv_norm, params['conv3_b'], tm=tm, tk=tk,
                  apply_relu=True)

    # TODO(synk): nn.Dropout is constructed in __init__ but never applied in
    # forward(), so it is intentionally omitted here.
    return h[:N]


if __name__ == "__main__":
    key = jax.random.PRNGKey(0)
    N, seq_len, emb = 8, 8, 4            # n_features = 1 (from unsqueeze(2))
    k_feat, k_adj, k_param = jax.random.split(key, 3)

    in_feat = jax.random.normal(k_feat, (N, seq_len), jnp.float32)
    # Dense adjacency standing in for the DGL graph `g`; adj[dst, src] = 1.
    adj = (jax.random.uniform(k_adj, (N, N)) < 0.4).astype(jnp.float32)
    adj = adj * (1.0 - jnp.eye(N, dtype=jnp.float32))   # no self-loops

    params = init_params(k_param, seq_len, emb)

    fwd = jax.jit(graphsage_forward)
    out = jax.block_until_ready(fwd(params, adj, in_feat))
    assert out.shape == (N, emb)
    assert bool(jnp.all(jnp.isfinite(out)))
    print("KERNEL_OK")
</pallas_src>

<mosaic_0001>
module attributes {stable_mosaic.version = 11 : i64} {
  func.func @_sage_gcn_kernel(%arg0: i32, %arg1: i32, %arg2: memref<8x8xbf16, #tpu.memory_space<vmem>>, %arg3: memref<8x4xbf16, #tpu.memory_space<vmem>>, %arg4: memref<8x4xbf16, #tpu.memory_space<vmem>>, %arg5: memref<1x4xf32, #tpu.memory_space<vmem>>, %arg6: memref<8x1xf32, #tpu.memory_space<vmem>>, %arg7: memref<8x4xf32, #tpu.memory_space<vmem>>, %arg8: memref<8x4xf32, #tpu.memory_space<vmem>>) attributes {dimension_semantics = [#tpu.dimension_semantics<parallel>, #tpu.dimension_semantics<arbitrary>], iteration_bounds = array<i64: 1, 1>, scalar_prefetch = 0 : i64, scratch_operands = 1 : i64, tpu.core_type = #tpu.core_type<tc>, window_params = [{transform_indices = @transform_0, window_bounds = array<i64: 8, 8>}, {transform_indices = @transform_1, window_bounds = array<i64: 8, 4>}, {transform_indices = @transform_2, window_bounds = array<i64: 8, 4>}, {pipeline_mode = #tpu.pipeline_mode<synchronous>, transform_indices = @transform_3, window_bounds = array<i64: 1, 4>}, {transform_indices = @transform_4, window_bounds = array<i64: 8, 1>}, {transform_indices = @transform_5, window_bounds = array<i64: 8, 4>}]} {
    %c0_i32 = arith.constant 0 : i32
    %0 = arith.cmpi eq, %arg1, %c0_i32 : i32
    %1 = arith.extui %0 : i1 to i32
    %c0_i32_0 = arith.constant 0 : i32
    %2 = arith.cmpi ne, %1, %c0_i32_0 : i32
    scf.if %2 {
      %cst_10 = arith.constant 0.000000e+00 : f32
      %12 = vector.broadcast %cst_10 : f32 to vector<8x4xf32>
      %c0_11 = arith.constant 0 : index
      %c0_12 = arith.constant 0 : index
      %13 = vector.load %arg8[%c0_11, %c0_12] : memref<8x4xf32, #tpu.memory_space<vmem>>, vector<8x4xf32>
      tpu.vector_store %arg8[%c0_11, %c0_12], %12 {strides = array<i32>} : memref<8x4xf32, #tpu.memory_space<vmem>>, vector<8x4xf32>,
    } else {
    }
    %c0 = arith.constant 0 : index
    %c0_1 = arith.constant 0 : index
    %3 = vector.load %arg8[%c0, %c0_1] : memref<8x4xf32, #tpu.memory_space<vmem>>, vector<8x4xf32>
    %c0_2 = arith.constant 0 : index
    %c0_3 = arith.constant 0 : index
    %4 = vector.load %arg2[%c0_2, %c0_3] : memref<8x8xbf16, #tpu.memory_space<vmem>>, vector<8x8xbf16>
    %c0_4 = arith.constant 0 : index
    %c0_5 = arith.constant 0 : index
    %5 = vector.load %arg3[%c0_4, %c0_5] : memref<8x4xbf16, #tpu.memory_space<vmem>>, vector<8x4xbf16>
    %cst = arith.constant dense<0.000000e+00> : vector<8x4xf32>
    %6 = tpu.matmul %4, %5, %cst {dimension_numbers = #tpu.dot_dimension_numbers<[1], [0], [0], [1], [0, 0, 1, 1], [], []>} : vector<8x8xbf16>, vector<8x4xbf16>, vector<8x4xf32> -> vector<8x4xf32>
    %7 = arith.addf %3, %6 : vector<8x4xf32>
    %c0_6 = arith.constant 0 : index
    %c0_7 = arith.constant 0 : index
    %8 = vector.load %arg8[%c0_6, %c0_7] : memref<8x4xf32, #tpu.memory_space<vmem>>, vector<8x4xf32>
    tpu.vector_store %arg8[%c0_6, %c0_7], %7 {strides = array<i32>} : memref<8x4xf32, #tpu.memory_space<vmem>>, vector<8x4xf32>,
    %c0_i32_8 = arith.constant 0 : i32
    %9 = arith.cmpi eq, %arg1, %c0_i32_8 : i32
    %10 = arith.extui %9 : i1 to i32
    %c0_i32_9 = arith.constant 0 : i32
    %11 = arith.cmpi ne, %10, %c0_i32_9 : i32
    scf.if %11 {
      %c0_10 = arith.constant 0 : index
      %c0_11 = arith.constant 0 : index
      %12 = vector.load %arg8[%c0_10, %c0_11] : memref<8x4xf32, #tpu.memory_space<vmem>>, vector<8x4xf32>
      %c0_12 = arith.constant 0 : index
      %c0_13 = arith.constant 0 : index
      %13 = vector.load %arg4[%c0_12, %c0_13] : memref<8x4xbf16, #tpu.memory_space<vmem>>, vector<8x4xbf16>
      %14 = arith.extf %13 : vector<8x4xbf16> to vector<8x4xf32>
      %15 = arith.addf %12, %14 : vector<8x4xf32>
      %c0_14 = arith.constant 0 : index
      %c0_15 = arith.constant 0 : index
      %16 = vector.load %arg6[%c0_14, %c0_15] : memref<8x1xf32, #tpu.memory_space<vmem>>, vector<8x1xf32>
      %17 = vector.broadcast %16 : vector<8x1xf32> to vector<8x4xf32>
      %18 = arith.mulf %15, %17 : vector<8x4xf32>
      %c0_16 = arith.constant 0 : index
      %c0_17 = arith.constant 0 : index
      %19 = vector.load %arg5[%c0_16, %c0_17] : memref<1x4xf32, #tpu.memory_space<vmem>>, vector<1x4xf32>
      %20 = vector.broadcast %19 : vector<1x4xf32> to vector<8x4xf32>
      %21 = arith.addf %18, %20 : vector<8x4xf32>
      %c0_18 = arith.constant 0 : index
      %c0_19 = arith.constant 0 : index
      %22 = vector.load %arg7[%c0_18, %c0_19] : memref<8x4xf32, #tpu.memory_space<vmem>>, vector<8x4xf32>
      tpu.vector_store %arg7[%c0_18, %c0_19], %21 {strides = array<i32>} : memref<8x4xf32, #tpu.memory_space<vmem>>, vector<8x4xf32>,
    } else {
    }
    return
  }
  func.func @transform_0(%arg0: i32, %arg1: i32) -> (i32, i32) {
    %c0_i32 = arith.constant 0 : i32
    return %arg0, %arg1 : i32, i32
  }
  func.func @transform_1(%arg0: i32, %arg1: i32) -> (i32, i32) {
    %c0_i32 = arith.constant 0 : i32
    %c0_i32_0 = arith.constant 0 : i32
    return %arg1, %c0_i32 : i32, i32
  }
  func.func @transform_2(%arg0: i32, %arg1: i32) -> (i32, i32) {
    %c0_i32 = arith.constant 0 : i32
    %c0_i32_0 = arith.constant 0 : i32
    return %arg0, %c0_i32 : i32, i32
  }
  func.func @transform_3(%arg0: i32, %arg1: i32) -> (i32, i32) {
    %c0_i32 = arith.constant 0 : i32
    %c0_i32_0 = arith.constant 0 : i32
    %c0_i32_1 = arith.constant 0 : i32
    return %c0_i32, %c0_i32_0 : i32, i32
  }
  func.func @transform_4(%arg0: i32, %arg1: i32) -> (i32, i32) {
    %c0_i32 = arith.constant 0 : i32
    %c0_i32_0 = arith.constant 0 : i32
    return %arg0, %c0_i32 : i32, i32
  }
  func.func @transform_5(%arg0: i32, %arg1: i32) -> (i32, i32) {
    %c0_i32 = arith.constant 0 : i32
    %c0_i32_0 = arith.constant 0 : i32
    return %arg0, %c0_i32 : i32, i32
  }
}

module attributes {stable_mosaic.version = 11 : i64} {
  func.func @_sage_gcn_first_kernel(%arg0: i32, %arg1: i32, %arg2: memref<8x8xbf16, #tpu.memory_space<vmem>>, %arg3: memref<8x5xbf16, #tpu.memory_space<vmem>>, %arg4: memref<8x5xbf16, #tpu.memory_space<vmem>>, %arg5: memref<1x4xf32, #tpu.memory_space<vmem>>, %arg6: memref<8x4xf32, #tpu.memory_space<vmem>>, %arg7: memref<8x1xf32, #tpu.memory_space<vmem>>, %arg8: memref<8x5xf32, #tpu.memory_space<vmem>>) attributes {dimension_semantics = [#tpu.dimension_semantics<parallel>, #tpu.dimension_semantics<arbitrary>], iteration_bounds = array<i64: 1, 1>, scalar_prefetch = 0 : i64, scratch_operands = 1 : i64, tpu.core_type = #tpu.core_type<tc>, window_params = [{transform_indices = @transform_0, window_bounds = array<i64: 8, 8>}, {transform_indices = @transform_1, window_bounds = array<i64: 8, 5>}, {transform_indices = @transform_2, window_bounds = array<i64: 8, 5>}, {pipeline_mode = #tpu.pipeline_mode<synchronous>, transform_indices = @transform_3, window_bounds = array<i64: 1, 4>}, {transform_indices = @transform_4, window_bounds = array<i64: 8, 4>}, {transform_indices = @transform_5, window_bounds = array<i64: 8, 1>}]} {
    %c0_i32 = arith.constant 0 : i32
    %0 = arith.cmpi eq, %arg1, %c0_i32 : i32
    %1 = arith.extui %0 : i1 to i32
    %c0_i32_0 = arith.constant 0 : i32
    %2 = arith.cmpi ne, %1, %c0_i32_0 : i32
    scf.if %2 {
      %cst_10 = arith.constant 0.000000e+00 : f32
      %12 = vector.broadcast %cst_10 : f32 to vector<8x5xf32>
      %c0_11 = arith.constant 0 : index
      %c0_12 = arith.constant 0 : index
      %13 = vector.load %arg8[%c0_11, %c0_12] : memref<8x5xf32, #tpu.memory_space<vmem>>, vector<8x5xf32>
      tpu.vector_store %arg8[%c0_11, %c0_12], %12 {strides = array<i32>} : memref<8x5xf32, #tpu.memory_space<vmem>>, vector<8x5xf32>,
    } else {
    }
    %c0 = arith.constant 0 : index
    %c0_1 = arith.constant 0 : index
    %3 = vector.load %arg8[%c0, %c0_1] : memref<8x5xf32, #tpu.memory_space<vmem>>, vector<8x5xf32>
    %c0_2 = arith.constant 0 : index
    %c0_3 = arith.constant 0 : index
    %4 = vector.load %arg2[%c0_2, %c0_3] : memref<8x8xbf16, #tpu.memory_space<vmem>>, vector<8x8xbf16>
    %c0_4 = arith.constant 0 : index
    %c0_5 = arith.constant 0 : index
    %5 = vector.load %arg3[%c0_4, %c0_5] : memref<8x5xbf16, #tpu.memory_space<vmem>>, vector<8x5xbf16>
    %cst = arith.constant dense<0.000000e+00> : vector<8x5xf32>
    %6 = tpu.matmul %4, %5, %cst {dimension_numbers = #tpu.dot_dimension_numbers<[1], [0], [0], [1], [0, 0, 1, 1], [], []>} : vector<8x8xbf16>, vector<8x5xbf16>, vector<8x5xf32> -> vector<8x5xf32>
    %7 = arith.addf %3, %6 : vector<8x5xf32>
    %c0_6 = arith.constant 0 : index
    %c0_7 = arith.constant 0 : index
    %8 = vector.load %arg8[%c0_6, %c0_7] : memref<8x5xf32, #tpu.memory_space<vmem>>, vector<8x5xf32>
    tpu.vector_store %arg8[%c0_6, %c0_7], %7 {strides = array<i32>} : memref<8x5xf32, #tpu.memory_space<vmem>>, vector<8x5xf32>,
    %c0_i32_8 = arith.constant 0 : i32
    %9 = arith.cmpi eq, %arg1, %c0_i32_8 : i32
    %10 = arith.extui %9 : i1 to i32
    %c0_i32_9 = arith.constant 0 : i32
    %11 = arith.cmpi ne, %10, %c0_i32_9 : i32
    scf.if %11 {
      %c0_10 = arith.constant 0 : index
      %c0_11 = arith.constant 0 : index
      %12 = vector.load %arg8[%c0_10, %c0_11] : memref<8x5xf32, #tpu.memory_space<vmem>>, vector<8x5xf32>
      %13 = vector.extract_strided_slice %12 {offsets = [0, 4], sizes = [8, 1], strides = [1, 1]} : vector<8x5xf32> to vector<8x1xf32>
      %cst_12 = arith.constant 1.000000e+00 : f32
      %14 = vector.broadcast %cst_12 : f32 to vector<8x1xf32>
      %15 = arith.addf %13, %14 : vector<8x1xf32>
      %16 = tpu.reciprocal %15 {approx = true} : vector<8x1xf32> -> vector<8x1xf32>
      %c0_13 = arith.constant 0 : index
      %c0_14 = arith.constant 0 : index
      %17 = vector.load %arg4[%c0_13, %c0_14] : memref<8x5xbf16, #tpu.memory_space<vmem>>, vector<8x5xbf16>
      %18 = vector.extract_strided_slice %17 {offsets = [0, 0], sizes = [8, 4], strides = [1, 1]} : vector<8x5xbf16> to vector<8x4xbf16>
      %19 = arith.extf %18 : vector<8x4xbf16> to vector<8x4xf32>
      %20 = vector.extract_strided_slice %12 {offsets = [0, 0], sizes = [8, 4], strides = [1, 1]} : vector<8x5xf32> to vector<8x4xf32>
      %21 = arith.addf %20, %19 : vector<8x4xf32>
      %22 = vector.broadcast %16 : vector<8x1xf32> to vector<8x4xf32>
      %23 = arith.mulf %21, %22 : vector<8x4xf32>
      %c0_15 = arith.constant 0 : index
      %c0_16 = arith.constant 0 : index
      %24 = vector.load %arg5[%c0_15, %c0_16] : memref<1x4xf32, #tpu.memory_space<vmem>>, vector<1x4xf32>
      %25 = vector.broadcast %24 : vector<1x4xf32> to vector<8x4xf32>
      %26 = arith.addf %23, %25 : vector<8x4xf32>
      %c0_17 = arith.constant 0 : index
      %c0_18 = arith.constant 0 : index
      %27 = vector.load %arg6[%c0_17, %c0_18] : memref<8x4xf32, #tpu.memory_space<vmem>>, vector<8x4xf32>
      tpu.vector_store %arg6[%c0_17, %c0_18], %26 {strides = array<i32>} : memref<8x4xf32, #tpu.memory_space<vmem>>, vector<8x4xf32>,
      %c0_19 = arith.constant 0 : index
      %c0_20 = arith.constant 0 : index
      %28 = vector.load %arg7[%c0_19, %c0_20] : memref<8x1xf32, #tpu.memory_space<vmem>>, vector<8x1xf32>
      tpu.vector_store %arg7[%c0_19, %c0_20], %16 {strides = array<i32>} : memref<8x1xf32, #tpu.memory_space<vmem>>, vector<8x1xf32>,
    } else {
    }
    return
  }
  func.func @transform_0(%arg0: i32, %arg1: i32) -> (i32, i32) {
    %c0_i32 = arith.constant 0 : i32
    return %arg0, %arg1 : i32, i32
  }
  func.func @transform_1(%arg0: i32, %arg1: i32) -> (i32, i32) {
    %c0_i32 = arith.constant 0 : i32
    %c0_i32_0 = arith.constant 0 : i32
    return %arg1, %c0_i32 : i32, i32
  }
  func.func @transform_2(%arg0: i32, %arg1: i32) -> (i32, i32) {
    %c0_i32 = arith.constant 0 : i32
    %c0_i32_0 = arith.constant 0 : i32
    return %arg0, %c0_i32 : i32, i32
  }
  func.func @transform_3(%arg0: i32, %arg1: i32) -> (i32, i32) {
    %c0_i32 = arith.constant 0 : i32
    %c0_i32_0 = arith.constant 0 : i32
    %c0_i32_1 = arith.constant 0 : i32
    return %c0_i32, %c0_i32_0 : i32, i32
  }
  func.func @transform_4(%arg0: i32, %arg1: i32) -> (i32, i32) {
    %c0_i32 = arith.constant 0 : i32
    %c0_i32_0 = arith.constant 0 : i32
    return %arg0, %c0_i32 : i32, i32
  }
  func.func @transform_5(%arg0: i32, %arg1: i32) -> (i32, i32) {
    %c0_i32 = arith.constant 0 : i32
    %c0_i32_0 = arith.constant 0 : i32
    return %arg0, %c0_i32 : i32, i32
  }
}

module attributes {stable_mosaic.version = 11 : i64} {
  func.func @_sage_gcn_kernel(%arg0: i32, %arg1: i32, %arg2: memref<8x8xbf16, #tpu.memory_space<vmem>>, %arg3: memref<8x4xbf16, #tpu.memory_space<vmem>>, %arg4: memref<8x4xbf16, #tpu.memory_space<vmem>>, %arg5: memref<1x4xf32, #tpu.memory_space<vmem>>, %arg6: memref<8x1xf32, #tpu.memory_space<vmem>>, %arg7: memref<8x4xf32, #tpu.memory_space<vmem>>, %arg8: memref<8x4xf32, #tpu.memory_space<vmem>>) attributes {dimension_semantics = [#tpu.dimension_semantics<parallel>, #tpu.dimension_semantics<arbitrary>], iteration_bounds = array<i64: 1, 1>, scalar_prefetch = 0 : i64, scratch_operands = 1 : i64, tpu.core_type = #tpu.core_type<tc>, window_params = [{transform_indices = @transform_0, window_bounds = array<i64: 8, 8>}, {transform_indices = @transform_1, window_bounds = array<i64: 8, 4>}, {transform_indices = @transform_2, window_bounds = array<i64: 8, 4>}, {pipeline_mode = #tpu.pipeline_mode<synchronous>, transform_indices = @transform_3, window_bounds = array<i64: 1, 4>}, {transform_indices = @transform_4, window_bounds = array<i64: 8, 1>}, {transform_indices = @transform_5, window_bounds = array<i64: 8, 4>}]} {
    %c0_i32 = arith.constant 0 : i32
    %0 = arith.cmpi eq, %arg1, %c0_i32 : i32
    %1 = arith.extui %0 : i1 to i32
    %c0_i32_0 = arith.constant 0 : i32
    %2 = arith.cmpi ne, %1, %c0_i32_0 : i32
    scf.if %2 {
      %cst_10 = arith.constant 0.000000e+00 : f32
      %12 = vector.broadcast %cst_10 : f32 to vector<8x4xf32>
      %c0_11 = arith.constant 0 : index
      %c0_12 = arith.constant 0 : index
      %13 = vector.load %arg8[%c0_11, %c0_12] : memref<8x4xf32, #tpu.memory_space<vmem>>, vector<8x4xf32>
      tpu.vector_store %arg8[%c0_11, %c0_12], %12 {strides = array<i32>} : memref<8x4xf32, #tpu.memory_space<vmem>>, vector<8x4xf32>,
    } else {
    }
    %c0 = arith.constant 0 : index
    %c0_1 = arith.constant 0 : index
    %3 = vector.load %arg8[%c0, %c0_1] : memref<8x4xf32, #tpu.memory_space<vmem>>, vector<8x4xf32>
    %c0_2 = arith.constant 0 : index
    %c0_3 = arith.constant 0 : index
    %4 = vector.load %arg2[%c0_2, %c0_3] : memref<8x8xbf16, #tpu.memory_space<vmem>>, vector<8x8xbf16>
    %c0_4 = arith.constant 0 : index
    %c0_5 = arith.constant 0 : index
    %5 = vector.load %arg3[%c0_4, %c0_5] : memref<8x4xbf16, #tpu.memory_space<vmem>>, vector<8x4xbf16>
    %cst = arith.constant dense<0.000000e+00> : vector<8x4xf32>
    %6 = tpu.matmul %4, %5, %cst {dimension_numbers = #tpu.dot_dimension_numbers<[1], [0], [0], [1], [0, 0, 1, 1], [], []>} : vector<8x8xbf16>, vector<8x4xbf16>, vector<8x4xf32> -> vector<8x4xf32>
    %7 = arith.addf %3, %6 : vector<8x4xf32>
    %c0_6 = arith.constant 0 : index
    %c0_7 = arith.constant 0 : index
    %8 = vector.load %arg8[%c0_6, %c0_7] : memref<8x4xf32, #tpu.memory_space<vmem>>, vector<8x4xf32>
    tpu.vector_store %arg8[%c0_6, %c0_7], %7 {strides = array<i32>} : memref<8x4xf32, #tpu.memory_space<vmem>>, vector<8x4xf32>,
    %c0_i32_8 = arith.constant 0 : i32
    %9 = arith.cmpi eq, %arg1, %c0_i32_8 : i32
    %10 = arith.extui %9 : i1 to i32
    %c0_i32_9 = arith.constant 0 : i32
    %11 = arith.cmpi ne, %10, %c0_i32_9 : i32
    scf.if %11 {
      %c0_10 = arith.constant 0 : index
      %c0_11 = arith.constant 0 : index
      %12 = vector.load %arg8[%c0_10, %c0_11] : memref<8x4xf32, #tpu.memory_space<vmem>>, vector<8x4xf32>
      %c0_12 = arith.constant 0 : index
      %c0_13 = arith.constant 0 : index
      %13 = vector.load %arg4[%c0_12, %c0_13] : memref<8x4xbf16, #tpu.memory_space<vmem>>, vector<8x4xbf16>
      %14 = arith.extf %13 : vector<8x4xbf16> to vector<8x4xf32>
      %15 = arith.addf %12, %14 : vector<8x4xf32>
      %c0_14 = arith.constant 0 : index
      %c0_15 = arith.constant 0 : index
      %16 = vector.load %arg6[%c0_14, %c0_15] : memref<8x1xf32, #tpu.memory_space<vmem>>, vector<8x1xf32>
      %17 = vector.broadcast %16 : vector<8x1xf32> to vector<8x4xf32>
      %18 = arith.mulf %15, %17 : vector<8x4xf32>
      %c0_16 = arith.constant 0 : index
      %c0_17 = arith.constant 0 : index
      %19 = vector.load %arg5[%c0_16, %c0_17] : memref<1x4xf32, #tpu.memory_space<vmem>>, vector<1x4xf32>
      %20 = vector.broadcast %19 : vector<1x4xf32> to vector<8x4xf32>
      %21 = arith.addf %18, %20 : vector<8x4xf32>
      %cst_18 = arith.constant 0.000000e+00 : f32
      %22 = vector.broadcast %cst_18 : f32 to vector<8x4xf32>
      %23 = arith.maximumf %21, %22 : vector<8x4xf32>
      %c0_19 = arith.constant 0 : index
      %c0_20 = arith.constant 0 : index
      %24 = vector.load %arg7[%c0_19, %c0_20] : memref<8x4xf32, #tpu.memory_space<vmem>>, vector<8x4xf32>
      tpu.vector_store %arg7[%c0_19, %c0_20], %23 {strides = array<i32>} : memref<8x4xf32, #tpu.memory_space<vmem>>, vector<8x4xf32>,
    } else {
    }
    return
  }
  func.func @transform_0(%arg0: i32, %arg1: i32) -> (i32, i32) {
    %c0_i32 = arith.constant 0 : i32
    return %arg0, %arg1 : i32, i32
  }
  func.func @transform_1(%arg0: i32, %arg1: i32) -> (i32, i32) {
    %c0_i32 = arith.constant 0 : i32
    %c0_i32_0 = arith.constant 0 : i32
    return %arg1, %c0_i32 : i32, i32
  }
  func.func @transform_2(%arg0: i32, %arg1: i32) -> (i32, i32) {
    %c0_i32 = arith.constant 0 : i32
    %c0_i32_0 = arith.constant 0 : i32
    return %arg0, %c0_i32 : i32, i32
  }
  func.func @transform_3(%arg0: i32, %arg1: i32) -> (i32, i32) {
    %c0_i32 = arith.constant 0 : i32
    %c0_i32_0 = arith.constant 0 : i32
    %c0_i32_1 = arith.constant 0 : i32
    return %c0_i32, %c0_i32_0 : i32, i32
  }
  func.func @transform_4(%arg0: i32, %arg1: i32) -> (i32, i32) {
    %c0_i32 = arith.constant 0 : i32
    %c0_i32_0 = arith.constant 0 : i32
    return %arg0, %c0_i32 : i32, i32
  }
  func.func @transform_5(%arg0: i32, %arg1: i32) -> (i32, i32) {
    %c0_i32 = arith.constant 0 : i32
    %c0_i32_0 = arith.constant 0 : i32
    return %arg0, %c0_i32 : i32, i32
  }
}

module attributes {stable_mosaic.version = 11 : i64} {
  func.func @_lstm_encoder_kernel(%arg0: i32, %arg1: memref<8x8xf32, #tpu.memory_space<vmem>>, %arg2: memref<1x32xf32, #tpu.memory_space<vmem>>, %arg3: memref<8x32xf32, #tpu.memory_space<vmem>>, %arg4: memref<1x32xf32, #tpu.memory_space<vmem>>, %arg5: memref<8x16xf32, #tpu.memory_space<vmem>>, %arg6: memref<4x16xf32, #tpu.memory_space<vmem>>, %arg7: memref<1x16xf32, #tpu.memory_space<vmem>>, %arg8: memref<8x32xf32, #tpu.memory_space<vmem>>) attributes {dimension_semantics = [#tpu.dimension_semantics<parallel>], iteration_bounds = array<i64: 1>, scalar_prefetch = 0 : i64, scratch_operands = 0 : i64, tpu.core_type = #tpu.core_type<tc>, window_params = [{transform_indices = @transform_0, window_bounds = array<i64: 8, 8>}, {pipeline_mode = #tpu.pipeline_mode<synchronous>, transform_indices = @transform_1, window_bounds = array<i64: 1, 32>}, {pipeline_mode = #tpu.pipeline_mode<synchronous>, transform_indices = @transform_2, window_bounds = array<i64: 8, 32>}, {pipeline_mode = #tpu.pipeline_mode<synchronous>, transform_indices = @transform_3, window_bounds = array<i64: 1, 32>}, {pipeline_mode = #tpu.pipeline_mode<synchronous>, transform_indices = @transform_4, window_bounds = array<i64: 8, 16>}, {pipeline_mode = #tpu.pipeline_mode<synchronous>, transform_indices = @transform_5, window_bounds = array<i64: 4, 16>}, {pipeline_mode = #tpu.pipeline_mode<synchronous>, transform_indices = @transform_6, window_bounds = array<i64: 1, 16>}, {transform_indices = @transform_7, window_bounds = array<i64: 8, 32>}]} {
    %c0 = arith.constant 0 : index
    %c0_0 = arith.constant 0 : index
    %0 = vector.load %arg1[%c0, %c0_0] : memref<8x8xf32, #tpu.memory_space<vmem>>, vector<8x8xf32>
    %c0_1 = arith.constant 0 : index
    %c0_2 = arith.constant 0 : index
    %1 = vector.load %arg2[%c0_1, %c0_2] : memref<1x32xf32, #tpu.memory_space<vmem>>, vector<1x32xf32>
    %c0_3 = arith.constant 0 : index
    %c0_4 = arith.constant 0 : index
    %2 = vector.load %arg3[%c0_3, %c0_4] : memref<8x32xf32, #tpu.memory_space<vmem>>, vector<8x32xf32>
    %c0_5 = arith.constant 0 : index
    %c0_6 = arith.constant 0 : index
    %3 = vector.load %arg4[%c0_5, %c0_6] : memref<1x32xf32, #tpu.memory_space<vmem>>, vector<1x32xf32>
    %c0_7 = arith.constant 0 : index
    %c0_8 = arith.constant 0 : index
    %4 = vector.load %arg5[%c0_7, %c0_8] : memref<8x16xf32, #tpu.memory_space<vmem>>, vector<8x16xf32>
    %c0_9 = arith.constant 0 : index
    %c0_10 = arith.constant 0 : index
    %5 = vector.load %arg6[%c0_9, %c0_10] : memref<4x16xf32, #tpu.memory_space<vmem>>, vector<4x16xf32>
    %c0_11 = arith.constant 0 : index
    %c0_12 = arith.constant 0 : index
    %6 = vector.load %arg7[%c0_11, %c0_12] : memref<1x16xf32, #tpu.memory_space<vmem>>, vector<1x16xf32>
    %cst = arith.constant 0.000000e+00 : f32
    %7 = vector.broadcast %cst : f32 to vector<8x8xf32>
    %cst_13 = arith.constant 0.000000e+00 : f32
    %8 = vector.broadcast %cst_13 : f32 to vector<8x8xf32>
    %cst_14 = arith.constant 0.000000e+00 : f32
    %9 = vector.broadcast %cst_14 : f32 to vector<8x4xf32>
    %cst_15 = arith.constant 0.000000e+00 : f32
    %10 = vector.broadcast %cst_15 : f32 to vector<8x4xf32>
    %11 = vector.extract_strided_slice %0 {offsets = [0, 0], sizes = [8, 1], strides = [1, 1]} : vector<8x8xf32> to vector<8x1xf32>
    %12 = vector.broadcast %11 : vector<8x1xf32> to vector<8x32xf32>
    %13 = vector.broadcast %1 : vector<1x32xf32> to vector<8x32xf32>
    %14 = arith.mulf %12, %13 : vector<8x32xf32>
    %15 = vector.broadcast %3 : vector<1x32xf32> to vector<8x32xf32>
    %16 = arith.addf %14, %15 : vector<8x32xf32>
    %cst_16 = arith.constant dense<0.000000e+00> : vector<8x32xf32>
    %17 = tpu.matmul %7, %2, %cst_16 {dimension_numbers = #tpu.dot_dimension_numbers<[1], [0], [0], [1], [0, 0, 1, 1], [], []>} : vector<8x8xf32>, vector<8x32xf32>, vector<8x32xf32> -> vector<8x32xf32>
    %18 = arith.addf %16, %17 : vector<8x32xf32>
    %19 = vector.extract_strided_slice %18 {offsets = [0, 0], sizes = [8, 24], strides = [1, 1]} : vector<8x32xf32> to vector<8x24xf32>
    %20 = arith.negf %19 : vector<8x24xf32>
    %21 = math.exp %20 : vector<8x24xf32>
    %cst_17 = arith.constant 1.000000e+00 : f32
    %22 = vector.broadcast %cst_17 : f32 to vector<8x24xf32>
    %23 = arith.addf %22, %21 : vector<8x24xf32>
    %24 = arith.divf %22, %23 : vector<8x24xf32>
    %25 = vector.extract_strided_slice %24 {offsets = [0, 0], sizes = [8, 8], strides = [1, 1]} : vector<8x24xf32> to vector<8x8xf32>
    %26 = vector.extract_strided_slice %24 {offsets = [0, 8], sizes = [8, 8], strides = [1, 1]} : vector<8x24xf32> to vector<8x8xf32>
    %27 = vector.extract_strided_slice %24 {offsets = [0, 16], sizes = [8, 8], strides = [1, 1]} : vector<8x24xf32> to vector<8x8xf32>
    %28 = vector.extract_strided_slice %18 {offsets = [0, 24], sizes = [8, 8], strides = [1, 1]} : vector<8x32xf32> to vector<8x8xf32>
    %29 = math.tanh %28 : vector<8x8xf32>
    %30 = arith.mulf %26, %8 : vector<8x8xf32>
    %31 = arith.mulf %25, %29 : vector<8x8xf32>
    %32 = arith.addf %30, %31 : vector<8x8xf32>
    %33 = math.tanh %32 : vector<8x8xf32>
    %34 = arith.mulf %27, %33 : vector<8x8xf32>
    %cst_18 = arith.constant dense<0.000000e+00> : vector<8x16xf32>
    %35 = tpu.matmul %34, %4, %cst_18 {dimension_numbers = #tpu.dot_dimension_numbers<[1], [0], [0], [1], [0, 0, 1, 1], [], []>} : vector<8x8xf32>, vector<8x16xf32>, vector<8x16xf32> -> vector<8x16xf32>
    %cst_19 = arith.constant dense<0.000000e+00> : vector<8x16xf32>
    %36 = tpu.matmul %9, %5, %cst_19 {dimension_numbers = #tpu.dot_dimension_numbers<[1], [0], [0], [1], [0, 0, 1, 1], [], []>} : vector<8x4xf32>, vector<4x16xf32>, vector<8x16xf32> -> vector<8x16xf32>
    %37 = arith.addf %35, %36 : vector<8x16xf32>
    %38 = vector.broadcast %6 : vector<1x16xf32> to vector<8x16xf32>
    %39 = arith.addf %37, %38 : vector<8x16xf32>
    %40 = vector.extract_strided_slice %39 {offsets = [0, 0], sizes = [8, 12], strides = [1, 1]} : vector<8x16xf32> to vector<8x12xf32>
    %41 = arith.negf %40 : vector<8x12xf32>
    %42 = math.exp %41 : vector<8x12xf32>
    %cst_20 = arith.constant 1.000000e+00 : f32
    %43 = vector.broadcast %cst_20 : f32 to vector<8x12xf32>
    %44 = arith.addf %43, %42 : vector<8x12xf32>
    %45 = arith.divf %43, %44 : vector<8x12xf32>
    %46 = vector.extract_strided_slice %45 {offsets = [0, 0], sizes = [8, 4], strides = [1, 1]} : vector<8x12xf32> to vector<8x4xf32>
    %47 = vector.extract_strided_slice %45 {offsets = [0, 4], sizes = [8, 4], strides = [1, 1]} : vector<8x12xf32> to vector<8x4xf32>
    %48 = vector.extract_strided_slice %45 {offsets = [0, 8], sizes = [8, 4], strides = [1, 1]} : vector<8x12xf32> to vector<8x4xf32>
    %49 = vector.extract_strided_slice %39 {offsets = [0, 12], sizes = [8, 4], strides = [1, 1]} : vector<8x16xf32> to vector<8x4xf32>
    %50 = math.tanh %49 : vector<8x4xf32>
    %51 = arith.mulf %47, %10 : vector<8x4xf32>
    %52 = arith.mulf %46, %50 : vector<8x4xf32>
    %53 = arith.addf %51, %52 : vector<8x4xf32>
    %54 = math.tanh %53 : vector<8x4xf32>
    %55 = arith.mulf %48, %54 : vector<8x4xf32>
    %c0_21 = arith.constant 0 : index
    %c0_22 = arith.constant 0 : index
    %56 = vector.load %arg8[%c0_21, %c0_22] : memref<8x32xf32, #tpu.memory_space<vmem>>, vector<8x4xf32>
    tpu.vector_store %arg8[%c0_21, %c0_22], %55 {strides = array<i32>} : memref<8x32xf32, #tpu.memory_space<vmem>>, vector<8x4xf32>,
    %57 = vector.extract_strided_slice %0 {offsets = [0, 1], sizes = [8, 1], strides = [1, 1]} : vector<8x8xf32> to vector<8x1xf32>
    %58 = vector.broadcast %57 : vector<8x1xf32> to vector<8x32xf32>
    %59 = vector.broadcast %1 : vector<1x32xf32> to vector<8x32xf32>
    %60 = arith.mulf %58, %59 : vector<8x32xf32>
    %61 = vector.broadcast %3 : vector<1x32xf32> to vector<8x32xf32>
    %62 = arith.addf %60, %61 : vector<8x32xf32>
    %cst_23 = arith.constant dense<0.000000e+00> : vector<8x32xf32>
    %63 = tpu.matmul %34, %2, %cst_23 {dimension_numbers = #tpu.dot_dimension_numbers<[1], [0], [0], [1], [0, 0, 1, 1], [], []>} : vector<8x8xf32>, vector<8x32xf32>, vector<8x32xf32> -> vector<8x32xf32>
    %64 = arith.addf %62, %63 : vector<8x32xf32>
    %65 = vector.extract_strided_slice %64 {offsets = [0, 0], sizes = [8, 24], strides = [1, 1]} : vector<8x32xf32> to vector<8x24xf32>
    %66 = arith.negf %65 : vector<8x24xf32>
    %67 = math.exp %66 : vector<8x24xf32>
    %cst_24 = arith.constant 1.000000e+00 : f32
    %68 = vector.broadcast %cst_24 : f32 to vector<8x24xf32>
    %69 = arith.addf %68, %67 : vector<8x24xf32>
    %70 = arith.divf %68, %69 : vector<8x24xf32>
    %71 = vector.extract_strided_slice %70 {offsets = [0, 0], sizes = [8, 8], strides = [1, 1]} : vector<8x24xf32> to vector<8x8xf32>
    %72 = vector.extract_strided_slice %70 {offsets = [0, 8], sizes = [8, 8], strides = [1, 1]} : vector<8x24xf32> to vector<8x8xf32>
    %73 = vector.extract_strided_slice %70 {offsets = [0, 16], sizes = [8, 8], strides = [1, 1]} : vector<8x24xf32> to vector<8x8xf32>
    %74 = vector.extract_strided_slice %64 {offsets = [0, 24], sizes = [8, 8], strides = [1, 1]} : vector<8x32xf32> to vector<8x8xf32>
    %75 = math.tanh %74 : vector<8x8xf32>
    %76 = arith.mulf %72, %32 : vector<8x8xf32>
    %77 = arith.mulf %71, %75 : vector<8x8xf32>
    %78 = arith.addf %76, %77 : vector<8x8xf32>
    %79 = math.tanh %78 : vector<8x8xf32>
    %80 = arith.mulf %73, %79 : vector<8x8xf32>
    %cst_25 = arith.constant dense<0.000000e+00> : vector<8x16xf32>
    %81 = tpu.matmul %80, %4, %cst_25 {dimension_numbers = #tpu.dot_dimension_numbers<[1], [0], [0], [1], [0, 0, 1, 1], [], []>} : vector<8x8xf32>, vector<8x16xf32>, vector<8x16xf32> -> vector<8x16xf32>
    %cst_26 = arith.constant dense<0.000000e+00> : vector<8x16xf32>
    %82 = tpu.matmul %55, %5, %cst_26 {dimension_numbers = #tpu.dot_dimension_numbers<[1], [0], [0], [1], [0, 0, 1, 1], [], []>} : vector<8x4xf32>, vector<4x16xf32>, vector<8x16xf32> -> vector<8x16xf32>
    %83 = arith.addf %81, %82 : vector<8x16xf32>
    %84 = vector.broadcast %6 : vector<1x16xf32> to vector<8x16xf32>
    %85 = arith.addf %83, %84 : vector<8x16xf32>
    %86 = vector.extract_strided_slice %85 {offsets = [0, 0], sizes = [8, 12], strides = [1, 1]} : vector<8x16xf32> to vector<8x12xf32>
    %87 = arith.negf %86 : vector<8x12xf32>
    %88 = math.exp %87 : vector<8x12xf32>
    %cst_27 = arith.constant 1.000000e+00 : f32
    %89 = vector.broadcast %cst_27 : f32 to vector<8x12xf32>
    %90 = arith.addf %89, %88 : vector<8x12xf32>
    %91 = arith.divf %89, %90 : vector<8x12xf32>
    %92 = vector.extract_strided_slice %91 {offsets = [0, 0], sizes = [8, 4], strides = [1, 1]} : vector<8x12xf32> to vector<8x4xf32>
    %93 = vector.extract_strided_slice %91 {offsets = [0, 4], sizes = [8, 4], strides = [1, 1]} : vector<8x12xf32> to vector<8x4xf32>
    %94 = vector.extract_strided_slice %91 {offsets = [0, 8], sizes = [8, 4], strides = [1, 1]} : vector<8x12xf32> to vector<8x4xf32>
    %95 = vector.extract_strided_slice %85 {offsets = [0, 12], sizes = [8, 4], strides = [1, 1]} : vector<8x16xf32> to vector<8x4xf32>
    %96 = math.tanh %95 : vector<8x4xf32>
    %97 = arith.mulf %93, %53 : vector<8x4xf32>
    %98 = arith.mulf %92, %96 : vector<8x4xf32>
    %99 = arith.addf %97, %98 : vector<8x4xf32>
    %100 = math.tanh %99 : vector<8x4xf32>
    %101 = arith.mulf %94, %100 : vector<8x4xf32>
    %c0_28 = arith.constant 0 : index
    %c4 = arith.constant 4 : index
    %102 = vector.load %arg8[%c0_28, %c4] : memref<8x32xf32, #tpu.memory_space<vmem>>, vector<8x4xf32>
    tpu.vector_store %arg8[%c0_28, %c4], %101 {strides = array<i32>} : memref<8x32xf32, #tpu.memory_space<vmem>>, vector<8x4xf32>,
    %103 = vector.extract_strided_slice %0 {offsets = [0, 2], sizes = [8, 1], strides = [1, 1]} : vector<8x8xf32> to vector<8x1xf32>
    %104 = vector.broadcast %103 : vector<8x1xf32> to vector<8x32xf32>
    %105 = vector.broadcast %1 : vector<1x32xf32> to vector<8x32xf32>
    %106 = arith.mulf %104, %105 : vector<8x32xf32>
    %107 = vector.broadcast %3 : vector<1x32xf32> to vector<8x32xf32>
    %108 = arith.addf %106, %107 : vector<8x32xf32>
    %cst_29 = arith.constant dense<0.000000e+00> : vector<8x32xf32>
    %109 = tpu.matmul %80, %2, %cst_29 {dimension_numbers = #tpu.dot_dimension_numbers<[1], [0], [0], [1], [0, 0, 1, 1], [], []>} : vector<8x8xf32>, vector<8x32xf32>, vector<8x32xf32> -> vector<8x32xf32>
    %110 = arith.addf %108, %109 : vector<8x32xf32>
    %111 = vector.extract_strided_slice %110 {offsets = [0, 0], sizes = [8, 24], strides = [1, 1]} : vector<8x32xf32> to vector<8x24xf32>
    %112 = arith.negf %111 : vector<8x24xf32>
    %113 = math.exp %112 : vector<8x24xf32>
    %cst_30 = arith.constant 1.000000e+00 : f32
    %114 = vector.broadcast %cst_30 : f32 to vector<8x24xf32>
    %115 = arith.addf %114, %113 : vector<8x24xf32>
    %116 = arith.divf %114, %115 : vector<8x24xf32>
    %117 = vector.extract_strided_slice %116 {offsets = [0, 0], sizes = [8, 8], strides = [1, 1]} : vector<8x24xf32> to vector<8x8xf32>
    %118 = vector.extract_strided_slice %116 {offsets = [0, 8], sizes = [8, 8], strides = [1, 1]} : vector<8x24xf32> to vector<8x8xf32>
    %119 = vector.extract_strided_slice %116 {offsets = [0, 16], sizes = [8, 8], strides = [1, 1]} : vector<8x24xf32> to vector<8x8xf32>
    %120 = vector.extract_strided_slice %110 {offsets = [0, 24], sizes = [8, 8], strides = [1, 1]} : vector<8x32xf32> to vector<8x8xf32>
    %121 = math.tanh %120 : vector<8x8xf32>
    %122 = arith.mulf %118, %78 : vector<8x8xf32>
    %123 = arith.mulf %117, %121 : vector<8x8xf32>
    %124 = arith.addf %122, %123 : vector<8x8xf32>
    %125 = math.tanh %124 : vector<8x8xf32>
    %126 = arith.mulf %119, %125 : vector<8x8xf32>
    %cst_31 = arith.constant dense<0.000000e+00> : vector<8x16xf32>
    %127 = tpu.matmul %126, %4, %cst_31 {dimension_numbers = #tpu.dot_dimension_numbers<[1], [0], [0], [1], [0, 0, 1, 1], [], []>} : vector<8x8xf32>, vector<8x16xf32>, vector<8x16xf32> -> vector<8x16xf32>
    %cst_32 = arith.constant dense<0.000000e+00> : vector<8x16xf32>
    %128 = tpu.matmul %101, %5, %cst_32 {dimension_numbers = #tpu.dot_dimension_numbers<[1], [0], [0], [1], [0, 0, 1, 1], [], []>} : vector<8x4xf32>, vector<4x16xf32>, vector<8x16xf32> -> vector<8x16xf32>
    %129 = arith.addf %127, %128 : vector<8x16xf32>
    %130 = vector.broadcast %6 : vector<1x16xf32> to vector<8x16xf32>
    %131 = arith.addf %129, %130 : vector<8x16xf32>
    %132 = vector.extract_strided_slice %131 {offsets = [0, 0], sizes = [8, 12], strides = [1, 1]} : vector<8x16xf32> to vector<8x12xf32>
    %133 = arith.negf %132 : vector<8x12xf32>
    %134 = math.exp %133 : vector<8x12xf32>
    %cst_33 = arith.constant 1.000000e+00 : f32
    %135 = vector.broadcast %cst_33 : f32 to vector<8x12xf32>
    %136 = arith.addf %135, %134 : vector<8x12xf32>
    %137 = arith.divf %135, %136 : vector<8x12xf32>
    %138 = vector.extract_strided_slice %137 {offsets = [0, 0], sizes = [8, 4], strides = [1, 1]} : vector<8x12xf32> to vector<8x4xf32>
    %139 = vector.extract_strided_slice %137 {offsets = [0, 4], sizes = [8, 4], strides = [1, 1]} : vector<8x12xf32> to vector<8x4xf32>
    %140 = vector.extract_strided_slice %137 {offsets = [0, 8], sizes = [8, 4], strides = [1, 1]} : vector<8x12xf32> to vector<8x4xf32>
    %141 = vector.extract_strided_slice %131 {offsets = [0, 12], sizes = [8, 4], strides = [1, 1]} : vector<8x16xf32> to vector<8x4xf32>
    %142 = math.tanh %141 : vector<8x4xf32>
    %143 = arith.mulf %139, %99 : vector<8x4xf32>
    %144 = arith.mulf %138, %142 : vector<8x4xf32>
    %145 = arith.addf %143, %144 : vector<8x4xf32>
    %146 = math.tanh %145 : vector<8x4xf32>
    %147 = arith.mulf %140, %146 : vector<8x4xf32>
    %c0_34 = arith.constant 0 : index
    %c8 = arith.constant 8 : index
    %148 = vector.load %arg8[%c0_34, %c8] : memref<8x32xf32, #tpu.memory_space<vmem>>, vector<8x4xf32>
    tpu.vector_store %arg8[%c0_34, %c8], %147 {strides = array<i32>} : memref<8x32xf32, #tpu.memory_space<vmem>>, vector<8x4xf32>,
    %149 = vector.extract_strided_slice %0 {offsets = [0, 3], sizes = [8, 1], strides = [1, 1]} : vector<8x8xf32> to vector<8x1xf32>
    %150 = vector.broadcast %149 : vector<8x1xf32> to vector<8x32xf32>
    %151 = vector.broadcast %1 : vector<1x32xf32> to vector<8x32xf32>
    %152 = arith.mulf %150, %151 : vector<8x32xf32>
    %153 = vector.broadcast %3 : vector<1x32xf32> to vector<8x32xf32>
    %154 = arith.addf %152, %153 : vector<8x32xf32>
    %cst_35 = arith.constant dense<0.000000e+00> : vector<8x32xf32>
    %155 = tpu.matmul %126, %2, %cst_35 {dimension_numbers = #tpu.dot_dimension_numbers<[1], [0], [0], [1], [0, 0, 1, 1], [], []>} : vector<8x8xf32>, vector<8x32xf32>, vector<8x32xf32> -> vector<8x32xf32>
    %156 = arith.addf %154, %155 : vector<8x32xf32>
    %157 = vector.extract_strided_slice %156 {offsets = [0, 0], sizes = [8, 24], strides = [1, 1]} : vector<8x32xf32> to vector<8x24xf32>
    %158 = arith.negf %157 : vector<8x24xf32>
    %159 = math.exp %158 : vector<8x24xf32>
    %cst_36 = arith.constant 1.000000e+00 : f32
    %160 = vector.broadcast %cst_36 : f32 to vector<8x24xf32>
    %161 = arith.addf %160, %159 : vector<8x24xf32>
    %162 = arith.divf %160, %161 : vector<8x24xf32>
    %163 = vector.extract_strided_slice %162 {offsets = [0, 0], sizes = [8, 8], strides = [1, 1]} : vector<8x24xf32> to vector<8x8xf32>
    %164 = vector.extract_strided_slice %162 {offsets = [0, 8], sizes = [8, 8], strides = [1, 1]} : vector<8x24xf32> to vector<8x8xf32>
    %165 = vector.extract_strided_slice %162 {offsets = [0, 16], sizes = [8, 8], strides = [1, 1]} : vector<8x24xf32> to vector<8x8xf32>
    %166 = vector.extract_strided_slice %156 {offsets = [0, 24], sizes = [8, 8], strides = [1, 1]} : vector<8x32xf32> to vector<8x8xf32>
    %167 = math.tanh %166 : vector<8x8xf32>
    %168 = arith.mulf %164, %124 : vector<8x8xf32>
    %169 = arith.mulf %163, %167 : vector<8x8xf32>
    %170 = arith.addf %168, %169 : vector<8x8xf32>
    %171 = math.tanh %170 : vector<8x8xf32>
    %172 = arith.mulf %165, %171 : vector<8x8xf32>
    %cst_37 = arith.constant dense<0.000000e+00> : vector<8x16xf32>
    %173 = tpu.matmul %172, %4, %cst_37 {dimension_numbers = #tpu.dot_dimension_numbers<[1], [0], [0], [1], [0, 0, 1, 1], [], []>} : vector<8x8xf32>, vector<8x16xf32>, vector<8x16xf32> -> vector<8x16xf32>
    %cst_38 = arith.constant dense<0.000000e+00> : vector<8x16xf32>
    %174 = tpu.matmul %147, %5, %cst_38 {dimension_numbers = #tpu.dot_dimension_numbers<[1], [0], [0], [1], [0, 0, 1, 1], [], []>} : vector<8x4xf32>, vector<4x16xf32>, vector<8x16xf32> -> vector<8x16xf32>
    %175 = arith.addf %173, %174 : vector<8x16xf32>
    %176 = vector.broadcast %6 : vector<1x16xf32> to vector<8x16xf32>
    %177 = arith.addf %175, %176 : vector<8x16xf32>
    %178 = vector.extract_strided_slice %177 {offsets = [0, 0], sizes = [8, 12], strides = [1, 1]} : vector<8x16xf32> to vector<8x12xf32>
    %179 = arith.negf %178 : vector<8x12xf32>
    %180 = math.exp %179 : vector<8x12xf32>
    %cst_39 = arith.constant 1.000000e+00 : f32
    %181 = vector.broadcast %cst_39 : f32 to vector<8x12xf32>
    %182 = arith.addf %181, %180 : vector<8x12xf32>
    %183 = arith.divf %181, %182 : vector<8x12xf32>
    %184 = vector.extract_strided_slice %183 {offsets = [0, 0], sizes = [8, 4], strides = [1, 1]} : vector<8x12xf32> to vector<8x4xf32>
    %185 = vector.extract_strided_slice %183 {offsets = [0, 4], sizes = [8, 4], strides = [1, 1]} : vector<8x12xf32> to vector<8x4xf32>
    %186 = vector.extract_strided_slice %183 {offsets = [0, 8], sizes = [8, 4], strides = [1, 1]} : vector<8x12xf32> to vector<8x4xf32>
    %187 = vector.extract_strided_slice %177 {offsets = [0, 12], sizes = [8, 4], strides = [1, 1]} : vector<8x16xf32> to vector<8x4xf32>
    %188 = math.tanh %187 : vector<8x4xf32>
    %189 = arith.mulf %185, %145 : vector<8x4xf32>
    %190 = arith.mulf %184, %188 : vector<8x4xf32>
    %191 = arith.addf %189, %190 : vector<8x4xf32>
    %192 = math.tanh %191 : vector<8x4xf32>
    %193 = arith.mulf %186, %192 : vector<8x4xf32>
    %c0_40 = arith.constant 0 : index
    %c12 = arith.constant 12 : index
    %194 = vector.load %arg8[%c0_40, %c12] : memref<8x32xf32, #tpu.memory_space<vmem>>, vector<8x4xf32>
    tpu.vector_store %arg8[%c0_40, %c12], %193 {strides = array<i32>} : memref<8x32xf32, #tpu.memory_space<vmem>>, vector<8x4xf32>,
    %195 = vector.extract_strided_slice %0 {offsets = [0, 4], sizes = [8, 1], strides = [1, 1]} : vector<8x8xf32> to vector<8x1xf32>
    %196 = vector.broadcast %195 : vector<8x1xf32> to vector<8x32xf32>
    %197 = vector.broadcast %1 : vector<1x32xf32> to vector<8x32xf32>
    %198 = arith.mulf %196, %197 : vector<8x32xf32>
    %199 = vector.broadcast %3 : vector<1x32xf32> to vector<8x32xf32>
    %200 = arith.addf %198, %199 : vector<8x32xf32>
    %cst_41 = arith.constant dense<0.000000e+00> : vector<8x32xf32>
    %201 = tpu.matmul %172, %2, %cst_41 {dimension_numbers = #tpu.dot_dimension_numbers<[1], [0], [0], [1], [0, 0, 1, 1], [], []>} : vector<8x8xf32>, vector<8x32xf32>, vector<8x32xf32> -> vector<8x32xf32>
    %202 = arith.addf %200, %201 : vector<8x32xf32>
    %203 = vector.extract_strided_slice %202 {offsets = [0, 0], sizes = [8, 24], strides = [1, 1]} : vector<8x32xf32> to vector<8x24xf32>
    %204 = arith.negf %203 : vector<8x24xf32>
    %205 = math.exp %204 : vector<8x24xf32>
    %cst_42 = arith.constant 1.000000e+00 : f32
    %206 = vector.broadcast %cst_42 : f32 to vector<8x24xf32>
    %207 = arith.addf %206, %205 : vector<8x24xf32>
    %208 = arith.divf %206, %207 : vector<8x24xf32>
    %209 = vector.extract_strided_slice %208 {offsets = [0, 0], sizes = [8, 8], strides = [1, 1]} : vector<8x24xf32> to vector<8x8xf32>
    %210 = vector.extract_strided_slice %208 {offsets = [0, 8], sizes = [8, 8], strides = [1, 1]} : vector<8x24xf32> to vector<8x8xf32>
    %211 = vector.extract_strided_slice %208 {offsets = [0, 16], sizes = [8, 8], strides = [1, 1]} : vector<8x24xf32> to vector<8x8xf32>
    %212 = vector.extract_strided_slice %202 {offsets = [0, 24], sizes = [8, 8], strides = [1, 1]} : vector<8x32xf32> to vector<8x8xf32>
    %213 = math.tanh %212 : vector<8x8xf32>
    %214 = arith.mulf %210, %170 : vector<8x8xf32>
    %215 = arith.mulf %209, %213 : vector<8x8xf32>
    %216 = arith.addf %214, %215 : vector<8x8xf32>
    %217 = math.tanh %216 : vector<8x8xf32>
    %218 = arith.mulf %211, %217 : vector<8x8xf32>
    %cst_43 = arith.constant dense<0.000000e+00> : vector<8x16xf32>
    %219 = tpu.matmul %218, %4, %cst_43 {dimension_numbers = #tpu.dot_dimension_numbers<[1], [0], [0], [1], [0, 0, 1, 1], [], []>} : vector<8x8xf32>, vector<8x16xf32>, vector<8x16xf32> -> vector<8x16xf32>
    %cst_44 = arith.constant dense<0.000000e+00> : vector<8x16xf32>
    %220 = tpu.matmul %193, %5, %cst_44 {dimension_numbers = #tpu.dot_dimension_numbers<[1], [0], [0], [1], [0, 0, 1, 1], [], []>} : vector<8x4xf32>, vector<4x16xf32>, vector<8x16xf32> -> vector<8x16xf32>
    %221 = arith.addf %219, %220 : vector<8x16xf32>
    %222 = vector.broadcast %6 : vector<1x16xf32> to vector<8x16xf32>
    %223 = arith.addf %221, %222 : vector<8x16xf32>
    %224 = vector.extract_strided_slice %223 {offsets = [0, 0], sizes = [8, 12], strides = [1, 1]} : vector<8x16xf32> to vector<8x12xf32>
    %225 = arith.negf %224 : vector<8x12xf32>
    %226 = math.exp %225 : vector<8x12xf32>
    %cst_45 = arith.constant 1.000000e+00 : f32
    %227 = vector.broadcast %cst_45 : f32 to vector<8x12xf32>
    %228 = arith.addf %227, %226 : vector<8x12xf32>
    %229 = arith.divf %227, %228 : vector<8x12xf32>
    %230 = vector.extract_strided_slice %229 {offsets = [0, 0], sizes = [8, 4], strides = [1, 1]} : vector<8x12xf32> to vector<8x4xf32>
    %231 = vector.extract_strided_slice %229 {offsets = [0, 4], sizes = [8, 4], strides = [1, 1]} : vector<8x12xf32> to vector<8x4xf32>
    %232 = vector.extract_strided_slice %229 {offsets = [0, 8], sizes = [8, 4], strides = [1, 1]} : vector<8x12xf32> to vector<8x4xf32>
    %233 = vector.extract_strided_slice %223 {offsets = [0, 12], sizes = [8, 4], strides = [1, 1]} : vector<8x16xf32> to vector<8x4xf32>
    %234 = math.tanh %233 : vector<8x4xf32>
    %235 = arith.mulf %231, %191 : vector<8x4xf32>
    %236 = arith.mulf %230, %234 : vector<8x4xf32>
    %237 = arith.addf %235, %236 : vector<8x4xf32>
    %238 = math.tanh %237 : vector<8x4xf32>
    %239 = arith.mulf %232, %238 : vector<8x4xf32>
    %c0_46 = arith.constant 0 : index
    %c16 = arith.constant 16 : index
    %240 = vector.load %arg8[%c0_46, %c16] : memref<8x32xf32, #tpu.memory_space<vmem>>, vector<8x4xf32>
    tpu.vector_store %arg8[%c0_46, %c16], %239 {strides = array<i32>} : memref<8x32xf32, #tpu.memory_space<vmem>>, vector<8x4xf32>,
    %241 = vector.extract_strided_slice %0 {offsets = [0, 5], sizes = [8, 1], strides = [1, 1]} : vector<8x8xf32> to vector<8x1xf32>
    %242 = vector.broadcast %241 : vector<8x1xf32> to vector<8x32xf32>
    %243 = vector.broadcast %1 : vector<1x32xf32> to vector<8x32xf32>
    %244 = arith.mulf %242, %243 : vector<8x32xf32>
    %245 = vector.broadcast %3 : vector<1x32xf32> to vector<8x32xf32>
    %246 = arith.addf %244, %245 : vector<8x32xf32>
    %cst_47 = arith.constant dense<0.000000e+00> : vector<8x32xf32>
    %247 = tpu.matmul %218, %2, %cst_47 {dimension_numbers = #tpu.dot_dimension_numbers<[1], [0], [0], [1], [0, 0, 1, 1], [], []>} : vector<8x8xf32>, vector<8x32xf32>, vector<8x32xf32> -> vector<8x32xf32>
    %248 = arith.addf %246, %247 : vector<8x32xf32>
    %249 = vector.extract_strided_slice %248 {offsets = [0, 0], sizes = [8, 24], strides = [1, 1]} : vector<8x32xf32> to vector<8x24xf32>
    %250 = arith.negf %249 : vector<8x24xf32>
    %251 = math.exp %250 : vector<8x24xf32>
    %cst_48 = arith.constant 1.000000e+00 : f32
    %252 = vector.broadcast %cst_48 : f32 to vector<8x24xf32>
    %253 = arith.addf %252, %251 : vector<8x24xf32>
    %254 = arith.divf %252, %253 : vector<8x24xf32>
    %255 = vector.extract_strided_slice %254 {offsets = [0, 0], sizes = [8, 8], strides = [1, 1]} : vector<8x24xf32> to vector<8x8xf32>
    %256 = vector.extract_strided_slice %254 {offsets = [0, 8], sizes = [8, 8], strides = [1, 1]} : vector<8x24xf32> to vector<8x8xf32>
    %257 = vector.extract_strided_slice %254 {offsets = [0, 16], sizes = [8, 8], strides = [1, 1]} : vector<8x24xf32> to vector<8x8xf32>
    %258 = vector.extract_strided_slice %248 {offsets = [0, 24], sizes = [8, 8], strides = [1, 1]} : vector<8x32xf32> to vector<8x8xf32>
    %259 = math.tanh %258 : vector<8x8xf32>
    %260 = arith.mulf %256, %216 : vector<8x8xf32>
    %261 = arith.mulf %255, %259 : vector<8x8xf32>
    %262 = arith.addf %260, %261 : vector<8x8xf32>
    %263 = math.tanh %262 : vector<8x8xf32>
    %264 = arith.mulf %257, %263 : vector<8x8xf32>
    %cst_49 = arith.constant dense<0.000000e+00> : vector<8x16xf32>
    %265 = tpu.matmul %264, %4, %cst_49 {dimension_numbers = #tpu.dot_dimension_numbers<[1], [0], [0], [1], [0, 0, 1, 1], [], []>} : vector<8x8xf32>, vector<8x16xf32>, vector<8x16xf32> -> vector<8x16xf32>
    %cst_50 = arith.constant dense<0.000000e+00> : vector<8x16xf32>
    %266 = tpu.matmul %239, %5, %cst_50 {dimension_numbers = #tpu.dot_dimension_numbers<[1], [0], [0], [1], [0, 0, 1, 1], [], []>} : vector<8x4xf32>, vector<4x16xf32>, vector<8x16xf32> -> vector<8x16xf32>
    %267 = arith.addf %265, %266 : vector<8x16xf32>
    %268 = vector.broadcast %6 : vector<1x16xf32> to vector<8x16xf32>
    %269 = arith.addf %267, %268 : vector<8x16xf32>
    %270 = vector.extract_strided_slice %269 {offsets = [0, 0], sizes = [8, 12], strides = [1, 1]} : vector<8x16xf32> to vector<8x12xf32>
    %271 = arith.negf %270 : vector<8x12xf32>
    %272 = math.exp %271 : vector<8x12xf32>
    %cst_51 = arith.constant 1.000000e+00 : f32
    %273 = vector.broadcast %cst_51 : f32 to vector<8x12xf32>
    %274 = arith.addf %273, %272 : vector<8x12xf32>
    %275 = arith.divf %273, %274 : vector<8x12xf32>
    %276 = vector.extract_strided_slice %275 {offsets = [0, 0], sizes = [8, 4], strides = [1, 1]} : vector<8x12xf32> to vector<8x4xf32>
    %277 = vector.extract_strided_slice %275 {offsets = [0, 4], sizes = [8, 4], strides = [1, 1]} : vector<8x12xf32> to vector<8x4xf32>
    %278 = vector.extract_strided_slice %275 {offsets = [0, 8], sizes = [8, 4], strides = [1, 1]} : vector<8x12xf32> to vector<8x4xf32>
    %279 = vector.extract_strided_slice %269 {offsets = [0, 12], sizes = [8, 4], strides = [1, 1]} : vector<8x16xf32> to vector<8x4xf32>
    %280 = math.tanh %279 : vector<8x4xf32>
    %281 = arith.mulf %277, %237 : vector<8x4xf32>
    %282 = arith.mulf %276, %280 : vector<8x4xf32>
    %283 = arith.addf %281, %282 : vector<8x4xf32>
    %284 = math.tanh %283 : vector<8x4xf32>
    %285 = arith.mulf %278, %284 : vector<8x4xf32>
    %c0_52 = arith.constant 0 : index
    %c20 = arith.constant 20 : index
    %286 = vector.load %arg8[%c0_52, %c20] : memref<8x32xf32, #tpu.memory_space<vmem>>, vector<8x4xf32>
    tpu.vector_store %arg8[%c0_52, %c20], %285 {strides = array<i32>} : memref<8x32xf32, #tpu.memory_space<vmem>>, vector<8x4xf32>,
    %287 = vector.extract_strided_slice %0 {offsets = [0, 6], sizes = [8, 1], strides = [1, 1]} : vector<8x8xf32> to vector<8x1xf32>
    %288 = vector.broadcast %287 : vector<8x1xf32> to vector<8x32xf32>
    %289 = vector.broadcast %1 : vector<1x32xf32> to vector<8x32xf32>
    %290 = arith.mulf %288, %289 : vector<8x32xf32>
    %291 = vector.broadcast %3 : vector<1x32xf32> to vector<8x32xf32>
    %292 = arith.addf %290, %291 : vector<8x32xf32>
    %cst_53 = arith.constant dense<0.000000e+00> : vector<8x32xf32>
    %293 = tpu.matmul %264, %2, %cst_53 {dimension_numbers = #tpu.dot_dimension_numbers<[1], [0], [0], [1], [0, 0, 1, 1], [], []>} : vector<8x8xf32>, vector<8x32xf32>, vector<8x32xf32> -> vector<8x32xf32>
    %294 = arith.addf %292, %293 : vector<8x32xf32>
    %295 = vector.extract_strided_slice %294 {offsets = [0, 0], sizes = [8, 24], strides = [1, 1]} : vector<8x32xf32> to vector<8x24xf32>
    %296 = arith.negf %295 : vector<8x24xf32>
    %297 = math.exp %296 : vector<8x24xf32>
    %cst_54 = arith.constant 1.000000e+00 : f32
    %298 = vector.broadcast %cst_54 : f32 to vector<8x24xf32>
    %299 = arith.addf %298, %297 : vector<8x24xf32>
    %300 = arith.divf %298, %299 : vector<8x24xf32>
    %301 = vector.extract_strided_slice %300 {offsets = [0, 0], sizes = [8, 8], strides = [1, 1]} : vector<8x24xf32> to vector<8x8xf32>
    %302 = vector.extract_strided_slice %300 {offsets = [0, 8], sizes = [8, 8], strides = [1, 1]} : vector<8x24xf32> to vector<8x8xf32>
    %303 = vector.extract_strided_slice %300 {offsets = [0, 16], sizes = [8, 8], strides = [1, 1]} : vector<8x24xf32> to vector<8x8xf32>
    %304 = vector.extract_strided_slice %294 {offsets = [0, 24], sizes = [8, 8], strides = [1, 1]} : vector<8x32xf32> to vector<8x8xf32>
    %305 = math.tanh %304 : vector<8x8xf32>
    %306 = arith.mulf %302, %262 : vector<8x8xf32>
    %307 = arith.mulf %301, %305 : vector<8x8xf32>
    %308 = arith.addf %306, %307 : vector<8x8xf32>
    %309 = math.tanh %308 : vector<8x8xf32>
    %310 = arith.mulf %303, %309 : vector<8x8xf32>
    %cst_55 = arith.constant dense<0.000000e+00> : vector<8x16xf32>
    %311 = tpu.matmul %310, %4, %cst_55 {dimension_numbers = #tpu.dot_dimension_numbers<[1], [0], [0], [1], [0, 0, 1, 1], [], []>} : vector<8x8xf32>, vector<8x16xf32>, vector<8x16xf32> -> vector<8x16xf32>
    %cst_56 = arith.constant dense<0.000000e+00> : vector<8x16xf32>
    %312 = tpu.matmul %285, %5, %cst_56 {dimension_numbers = #tpu.dot_dimension_numbers<[1], [0], [0], [1], [0, 0, 1, 1], [], []>} : vector<8x4xf32>, vector<4x16xf32>, vector<8x16xf32> -> vector<8x16xf32>
    %313 = arith.addf %311, %312 : vector<8x16xf32>
    %314 = vector.broadcast %6 : vector<1x16xf32> to vector<8x16xf32>
    %315 = arith.addf %313, %314 : vector<8x16xf32>
    %316 = vector.extract_strided_slice %315 {offsets = [0, 0], sizes = [8, 12], strides = [1, 1]} : vector<8x16xf32> to vector<8x12xf32>
    %317 = arith.negf %316 : vector<8x12xf32>
    %318 = math.exp %317 : vector<8x12xf32>
    %cst_57 = arith.constant 1.000000e+00 : f32
    %319 = vector.broadcast %cst_57 : f32 to vector<8x12xf32>
    %320 = arith.addf %319, %318 : vector<8x12xf32>
    %321 = arith.divf %319, %320 : vector<8x12xf32>
    %322 = vector.extract_strided_slice %321 {offsets = [0, 0], sizes = [8, 4], strides = [1, 1]} : vector<8x12xf32> to vector<8x4xf32>
    %323 = vector.extract_strided_slice %321 {offsets = [0, 4], sizes = [8, 4], strides = [1, 1]} : vector<8x12xf32> to vector<8x4xf32>
    %324 = vector.extract_strided_slice %321 {offsets = [0, 8], sizes = [8, 4], strides = [1, 1]} : vector<8x12xf32> to vector<8x4xf32>
    %325 = vector.extract_strided_slice %315 {offsets = [0, 12], sizes = [8, 4], strides = [1, 1]} : vector<8x16xf32> to vector<8x4xf32>
    %326 = math.tanh %325 : vector<8x4xf32>
    %327 = arith.mulf %323, %283 : vector<8x4xf32>
    %328 = arith.mulf %322, %326 : vector<8x4xf32>
    %329 = arith.addf %327, %328 : vector<8x4xf32>
    %330 = math.tanh %329 : vector<8x4xf32>
    %331 = arith.mulf %324, %330 : vector<8x4xf32>
    %c0_58 = arith.constant 0 : index
    %c24 = arith.constant 24 : index
    %332 = vector.load %arg8[%c0_58, %c24] : memref<8x32xf32, #tpu.memory_space<vmem>>, vector<8x4xf32>
    tpu.vector_store %arg8[%c0_58, %c24], %331 {strides = array<i32>} : memref<8x32xf32, #tpu.memory_space<vmem>>, vector<8x4xf32>,
    %333 = vector.extract_strided_slice %0 {offsets = [0, 7], sizes = [8, 1], strides = [1, 1]} : vector<8x8xf32> to vector<8x1xf32>
    %334 = vector.broadcast %333 : vector<8x1xf32> to vector<8x32xf32>
    %335 = vector.broadcast %1 : vector<1x32xf32> to vector<8x32xf32>
    %336 = arith.mulf %334, %335 : vector<8x32xf32>
    %337 = vector.broadcast %3 : vector<1x32xf32> to vector<8x32xf32>
    %338 = arith.addf %336, %337 : vector<8x32xf32>
    %cst_59 = arith.constant dense<0.000000e+00> : vector<8x32xf32>
    %339 = tpu.matmul %310, %2, %cst_59 {dimension_numbers = #tpu.dot_dimension_numbers<[1], [0], [0], [1], [0, 0, 1, 1], [], []>} : vector<8x8xf32>, vector<8x32xf32>, vector<8x32xf32> -> vector<8x32xf32>
    %340 = arith.addf %338, %339 : vector<8x32xf32>
    %341 = vector.extract_strided_slice %340 {offsets = [0, 0], sizes = [8, 24], strides = [1, 1]} : vector<8x32xf32> to vector<8x24xf32>
    %342 = arith.negf %341 : vector<8x24xf32>
    %343 = math.exp %342 : vector<8x24xf32>
    %cst_60 = arith.constant 1.000000e+00 : f32
    %344 = vector.broadcast %cst_60 : f32 to vector<8x24xf32>
    %345 = arith.addf %344, %343 : vector<8x24xf32>
    %346 = arith.divf %344, %345 : vector<8x24xf32>
    %347 = vector.extract_strided_slice %346 {offsets = [0, 0], sizes = [8, 8], strides = [1, 1]} : vector<8x24xf32> to vector<8x8xf32>
    %348 = vector.extract_strided_slice %346 {offsets = [0, 8], sizes = [8, 8], strides = [1, 1]} : vector<8x24xf32> to vector<8x8xf32>
    %349 = vector.extract_strided_slice %346 {offsets = [0, 16], sizes = [8, 8], strides = [1, 1]} : vector<8x24xf32> to vector<8x8xf32>
    %350 = vector.extract_strided_slice %340 {offsets = [0, 24], sizes = [8, 8], strides = [1, 1]} : vector<8x32xf32> to vector<8x8xf32>
    %351 = math.tanh %350 : vector<8x8xf32>
    %352 = arith.mulf %348, %308 : vector<8x8xf32>
    %353 = arith.mulf %347, %351 : vector<8x8xf32>
    %354 = arith.addf %352, %353 : vector<8x8xf32>
    %355 = math.tanh %354 : vector<8x8xf32>
    %356 = arith.mulf %349, %355 : vector<8x8xf32>
    %cst_61 = arith.constant dense<0.000000e+00> : vector<8x16xf32>
    %357 = tpu.matmul %356, %4, %cst_61 {dimension_numbers = #tpu.dot_dimension_numbers<[1], [0], [0], [1], [0, 0, 1, 1], [], []>} : vector<8x8xf32>, vector<8x16xf32>, vector<8x16xf32> -> vector<8x16xf32>
    %cst_62 = arith.constant dense<0.000000e+00> : vector<8x16xf32>
    %358 = tpu.matmul %331, %5, %cst_62 {dimension_numbers = #tpu.dot_dimension_numbers<[1], [0], [0], [1], [0, 0, 1, 1], [], []>} : vector<8x4xf32>, vector<4x16xf32>, vector<8x16xf32> -> vector<8x16xf32>
    %359 = arith.addf %357, %358 : vector<8x16xf32>
    %360 = vector.broadcast %6 : vector<1x16xf32> to vector<8x16xf32>
    %361 = arith.addf %359, %360 : vector<8x16xf32>
    %362 = vector.extract_strided_slice %361 {offsets = [0, 0], sizes = [8, 12], strides = [1, 1]} : vector<8x16xf32> to vector<8x12xf32>
    %363 = arith.negf %362 : vector<8x12xf32>
    %364 = math.exp %363 : vector<8x12xf32>
    %cst_63 = arith.constant 1.000000e+00 : f32
    %365 = vector.broadcast %cst_63 : f32 to vector<8x12xf32>
    %366 = arith.addf %365, %364 : vector<8x12xf32>
    %367 = arith.divf %365, %366 : vector<8x12xf32>
    %368 = vector.extract_strided_slice %367 {offsets = [0, 0], sizes = [8, 4], strides = [1, 1]} : vector<8x12xf32> to vector<8x4xf32>
    %369 = vector.extract_strided_slice %367 {offsets = [0, 4], sizes = [8, 4], strides = [1, 1]} : vector<8x12xf32> to vector<8x4xf32>
    %370 = vector.extract_strided_slice %367 {offsets = [0, 8], sizes = [8, 4], strides = [1, 1]} : vector<8x12xf32> to vector<8x4xf32>
    %371 = vector.extract_strided_slice %361 {offsets = [0, 12], sizes = [8, 4], strides = [1, 1]} : vector<8x16xf32> to vector<8x4xf32>
    %372 = math.tanh %371 : vector<8x4xf32>
    %373 = arith.mulf %369, %329 : vector<8x4xf32>
    %374 = arith.mulf %368, %372 : vector<8x4xf32>
    %375 = arith.addf %373, %374 : vector<8x4xf32>
    %376 = math.tanh %375 : vector<8x4xf32>
    %377 = arith.mulf %370, %376 : vector<8x4xf32>
    %c0_64 = arith.constant 0 : index
    %c28 = arith.constant 28 : index
    %378 = vector.load %arg8[%c0_64, %c28] : memref<8x32xf32, #tpu.memory_space<vmem>>, vector<8x4xf32>
    tpu.vector_store %arg8[%c0_64, %c28], %377 {strides = array<i32>} : memref<8x32xf32, #tpu.memory_space<vmem>>, vector<8x4xf32>,
    return
  }
  func.func @transform_0(%arg0: i32) -> (i32, i32) {
    %c0_i32 = arith.constant 0 : i32
    %c0_i32_0 = arith.constant 0 : i32
    return %arg0, %c0_i32 : i32, i32
  }
  func.func @transform_1(%arg0: i32) -> (i32, i32) {
    %c0_i32 = arith.constant 0 : i32
    %c0_i32_0 = arith.constant 0 : i32
    %c0_i32_1 = arith.constant 0 : i32
    return %c0_i32, %c0_i32_0 : i32, i32
  }
  func.func @transform_2(%arg0: i32) -> (i32, i32) {
    %c0_i32 = arith.constant 0 : i32
    %c0_i32_0 = arith.constant 0 : i32
    %c0_i32_1 = arith.constant 0 : i32
    return %c0_i32, %c0_i32_0 : i32, i32
  }
  func.func @transform_3(%arg0: i32) -> (i32, i32) {
    %c0_i32 = arith.constant 0 : i32
    %c0_i32_0 = arith.constant 0 : i32
    %c0_i32_1 = arith.constant 0 : i32
    return %c0_i32, %c0_i32_0 : i32, i32
  }
  func.func @transform_4(%arg0: i32) -> (i32, i32) {
    %c0_i32 = arith.constant 0 : i32
    %c0_i32_0 = arith.constant 0 : i32
    %c0_i32_1 = arith.constant 0 : i32
    return %c0_i32, %c0_i32_0 : i32, i32
  }
  func.func @transform_5(%arg0: i32) -> (i32, i32) {
    %c0_i32 = arith.constant 0 : i32
    %c0_i32_0 = arith.constant 0 : i32
    %c0_i32_1 = arith.constant 0 : i32
    return %c0_i32, %c0_i32_0 : i32, i32
  }
  func.func @transform_6(%arg0: i32) -> (i32, i32) {
    %c0_i32 = arith.constant 0 : i32
    %c0_i32_0 = arith.constant 0 : i32
    %c0_i32_1 = arith.constant 0 : i32
    return %c0_i32, %c0_i32_0 : i32, i32
  }
  func.func @transform_7(%arg0: i32) -> (i32, i32) {
    %c0_i32 = arith.constant 0 : i32
    %c0_i32_0 = arith.constant 0 : i32
    return %arg0, %c0_i32 : i32, i32
  }
}

</mosaic_0001>

<llo_original>
// kernel: graphsage_forward.6
$region0: #{graphsage_forward.6}
  #allocation0 [shape = 'u32[]', space=smem, size = 0x4, offset = 0x4, fixed_abs, tag = 'smem constant byte address 0x4 - core index']
  #allocation1 [shape = 'u32[144,128]{1,0:T(1,128)}', space=vmem, size = 0x12000, scoped, tag = 'internal scratch']
  #allocation2 [shape = 'f32[8,4]{1,0:T(8,128)}', space=vmem, size = 0x1000, scoped, tag = 'scratch operand']
  %s0 = inlined_call_operand.vmem [shape: bf16[8,8], index: 0, kind: input, shape index: {}]
  %s1 = inlined_call_operand.vmem [shape: bf16[8,4], index: 1, kind: input, shape index: {}, may-alias: {1,2}]
  %s2 = inlined_call_operand.vmem [shape: bf16[8,4], index: 2, kind: input, shape index: {}, may-alias: {1,2}]
  %s3 = inlined_call_operand.vmem [shape: f32[1,4], index: 3, kind: input, shape index: {}]
  %s4 = inlined_call_operand.vmem [shape: f32[8,1], index: 4, kind: input, shape index: {}]
  %s5 = inlined_call_operand.vmem [shape: f32[8,4], index: 5, kind: output, shape index: {}]
  %s6 = sld [smem:[#allocation0]]
  $region38: #{graphsage_forward.6} parent=0
    _
  %s8 = ssub.s32 1, %s6
  %s9 = scalar_select 0, %s8, %s6
  // Predicated region
  $region2: #{graphsage_forward.6} parent=0 // pred_check
    _
  $region3: #{graphsage_forward.6} parent=0 // pred_check_branch
    %11 = sbr.rel (0) target = $region5
  $region4: #{graphsage_forward.6} parent=0 // pred_region
    _
  $region5: #{graphsage_forward.6} parent=0 // pred_fallthru
    _
  // Predicated region
  $region6: #{graphsage_forward.6} parent=0 // pred_check
    _
  $region7: #{graphsage_forward.6} parent=0 // pred_check_branch
    %13 = sbr.rel (0) target = $region9
  $region8: #{graphsage_forward.6} parent=0 // pred_region
    _
  $region9: #{graphsage_forward.6} parent=0 // pred_fallthru
    _
  // Predicated region
  $region10: #{graphsage_forward.6} parent=0 // pred_check
    _
  $region11: #{graphsage_forward.6} parent=0 // pred_check_branch
    %15 = sbr.rel (0) target = $region13
  $region12: #{graphsage_forward.6} parent=0 // pred_region
    _
  $region13: #{graphsage_forward.6} parent=0 // pred_fallthru
    _
  // Predicated region
  $region14: #{graphsage_forward.6} parent=0 // pred_check
    _
  $region15: #{graphsage_forward.6} parent=0 // pred_check_branch
    %17 = sbr.rel (0) target = $region17
  $region16: #{graphsage_forward.6} parent=0 // pred_region
    _
  $region17: #{graphsage_forward.6} parent=0 // pred_fallthru
    _
  // Predicated region
  $region18: #{graphsage_forward.6} parent=0 // pred_check
    _
  $region19: #{graphsage_forward.6} parent=0 // pred_check_branch
    %19 = sbr.rel (0) target = $region21
  $region20: #{graphsage_forward.6} parent=0 // pred_region
    _
  $region21: #{graphsage_forward.6} parent=0 // pred_fallthru
    _
  %p21 = scmp.eq.s32.totalorder 0, 0
  // Predicated region
  $region22: #{graphsage_forward.6} parent=0 // pred_check
    %p22 = pneg %p21
  $region23: #{graphsage_forward.6} parent=0 // pred_check_branch
    %24 = sbr.rel (%p22) target = $region25
  $region24: #{graphsage_forward.6} parent=0 // pred_region
    %vm25 = vcmask 31744
    %26 = vst.msk [vmem:[#allocation2] sm:$0xff] %vm25, 0.0
  $region25: #{graphsage_forward.6} parent=0 // pred_fallthru
    _
  %v27 = vld [vmem:[#allocation2] sm:$0xff]
  %v28 = vld [vmem:[%s0] sm:$0xf]
  %v29 = vld [vmem:[%s1] sm:$0xf]
  %vm30 = vcmask 64512
  %v32 = vsel %vm30, %v28, 0
  %vm34 = vcmask 1043456
  %v36 = vsel %vm34, %v29, 0
  %38 = vmatprep.subr.bf16.mxu0 0
  %39 = vmatpush1.bf16.msra.mxu0 0
  %40 = vmatprep.subr.bf16.mxu0 0
  %41 = vmatpush1.bf16.msra.mxu0 0
  %42 = vmatprep.subr.bf16.mxu0 0
  %43 = vmatpush1.bf16.msra.mxu0 0
  %44 = vmatprep.subr.bf16.mxu0 0
  %45 = vmatpush1.bf16.msra.mxu0 0
  %46 = vmatprep.subr.bf16.mxu0 0
  %47 = vmatpush1.bf16.msra.mxu0 0
  %48 = vmatprep.subr.bf16.mxu0 0
  %49 = vmatpush1.bf16.msra.mxu0 0
  %50 = vmatprep.subr.bf16.mxu0 0
  %51 = vmatpush1.bf16.msra.mxu0 0
  %52 = vmatprep.subr.bf16.mxu0 0
  %53 = vmatpush1.bf16.msra.mxu0 %v36
  %54 = vmatprep.subr.bf16.mxu0 0
  %55 = vmatpush2.bf16.msra.mxu0 0
  %56 = vmatprep.subr.bf16.mxu0 0
  %57 = vmatpush2.bf16.msra.mxu0 0
  %58 = vmatprep.subr.bf16.mxu0 0
  %59 = vmatpush2.bf16.msra.mxu0 0
  %60 = vmatprep.subr.bf16.mxu0 0
  %61 = vmatpush2.bf16.msra.mxu0 0
  %62 = vmatprep.subr.bf16.mxu0 0
  %63 = vmatpush2.bf16.msra.mxu0 0
  %64 = vmatprep.subr.bf16.mxu0 0
  %65 = vmatpush2.bf16.msra.mxu0 0
  %66 = vmatprep.subr.bf16.mxu0 0
  %67 = vmatpush2.bf16.msra.mxu0 0
  %68 = vmatprep.subr.bf16.mxu0 0
  %69 = vmatpush2.bf16.msra.mxu0 0
  %70 = vmatprep.mubr.bf16.mxu0 0
  %71 = vmatmul.mubr.bf16.gmra.mxu0 %v32
  %v72 = vpop.f32.mrf.mxu0
  %v73 = vadd.f32 0.0, %v72
  %v74 = vpop.f32.mrf.mxu0
  %v75 = vpop.f32.mrf.mxu0
  %v76 = vpop.f32.mrf.mxu0
  %77 = vdwg.mxu0
  %v78 = vadd.f32 %v27, %v73
  %vm79 = vcmask 31744
  %80 = vst.msk [vmem:[#allocation2] sm:$0xff] %vm79, %v78
  // Predicated region
  $region26: #{graphsage_forward.6} parent=0 // pred_check
    %p81 = pneg %p21
  $region27: #{graphsage_forward.6} parent=0 // pred_check_branch
    %83 = sbr.rel (%p81) target = $region29
  $region28: #{graphsage_forward.6} parent=0 // pred_region
    %v84 = vld [vmem:[#allocation2] sm:$0xff]
    %v85 = vld [vmem:[%s2] sm:$0xf]
    %v86 = vunpack.c.l.bf16 %v85
    %v87 = vadd.f32 %v84, %v86
    %v88 = vld [vmem:[%s4] sm:$0xff]
    %90 = vset.pattern.permute.xlu0 0
    %91 = vperm.xlu0 %90, %v88
    %v92 = vpop.permute.xlu0 %91
    %v94 = vmul.f32 %v87, %v92
    %v95 = vld [vmem:[%s3] sm:$0x1]
    %v97 = vlaneseq
    %v98 = vshrl.u32 %v97, 7
    %v99 = vsub.s32 0, %v98
    %v100 = vrot.slane %v95, %v99
    %v102 = vadd.f32 %v94, %v100
    %103 = vst.msk [vmem:[%s5] sm:$0xff] %vm79, %v102
  $region29: #{graphsage_forward.6} parent=0 // pred_fallthru
    _
  // Predicated region
  $region30: #{graphsage_forward.6} parent=0 // pred_check
    _
  $region31: #{graphsage_forward.6} parent=0 // pred_check_branch
    %105 = sbr.rel (0) target = $region33
  $region32: #{graphsage_forward.6} parent=0 // pred_region
    _
  $region33: #{graphsage_forward.6} parent=0 // pred_fallthru
    _
  // Predicated region
  $region34: #{graphsage_forward.6} parent=0 // pred_check
    _
  $region35: #{graphsage_forward.6} parent=0 // pred_check_branch
    %107 = sbr.rel (0) target = $region37
  $region36: #{graphsage_forward.6} parent=0 // pred_region
    _
  $region37: #{graphsage_forward.6} parent=0 // pred_fallthru
    _

// kernel: graphsage_forward.5
$region0: #{graphsage_forward.5}
  #allocation0 [shape = 'u32[]', space=smem, size = 0x4, offset = 0x4, fixed_abs, tag = 'smem constant byte address 0x4 - core index']
  #allocation1 [shape = 'u32[144,128]{1,0:T(1,128)}', space=vmem, size = 0x12000, scoped, tag = 'internal scratch']
  #allocation2 [shape = 'f32[8,5]{1,0:T(8,128)}', space=vmem, size = 0x1000, scoped, tag = 'scratch operand']
  %s0 = inlined_call_operand.vmem [shape: bf16[8,8], index: 0, kind: input, shape index: {}]
  %s1 = inlined_call_operand.vmem [shape: bf16[8,5], index: 1, kind: input, shape index: {}, may-alias: {1,2}]
  %s2 = inlined_call_operand.vmem [shape: bf16[8,5], index: 2, kind: input, shape index: {}, may-alias: {1,2}]
  %s3 = inlined_call_operand.vmem [shape: f32[1,4], index: 3, kind: input, shape index: {}]
  %s4 = inlined_call_operand.vmem [shape: f32[8,4], index: 4, kind: output, shape index: {0}]
  %s5 = inlined_call_operand.vmem [shape: f32[8,1], index: 5, kind: output, shape index: {1}]
  %6 = xla_tuple %s4, %s5
  %s7 = sld [smem:[#allocation0]]
  $region42: #{graphsage_forward.5} parent=0
    _
  %s9 = ssub.s32 1, %s7
  %s10 = scalar_select 0, %s9, %s7
  // Predicated region
  $region2: #{graphsage_forward.5} parent=0 // pred_check
    _
  $region3: #{graphsage_forward.5} parent=0 // pred_check_branch
    %12 = sbr.rel (0) target = $region5
  $region4: #{graphsage_forward.5} parent=0 // pred_region
    _
  $region5: #{graphsage_forward.5} parent=0 // pred_fallthru
    _
  // Predicated region
  $region6: #{graphsage_forward.5} parent=0 // pred_check
    _
  $region7: #{graphsage_forward.5} parent=0 // pred_check_branch
    %14 = sbr.rel (0) target = $region9
  $region8: #{graphsage_forward.5} parent=0 // pred_region
    _
  $region9: #{graphsage_forward.5} parent=0 // pred_fallthru
    _
  // Predicated region
  $region10: #{graphsage_forward.5} parent=0 // pred_check
    _
  $region11: #{graphsage_forward.5} parent=0 // pred_check_branch
    %16 = sbr.rel (0) target = $region13
  $region12: #{graphsage_forward.5} parent=0 // pred_region
    _
  $region13: #{graphsage_forward.5} parent=0 // pred_fallthru
    _
  // Predicated region
  $region14: #{graphsage_forward.5} parent=0 // pred_check
    _
  $region15: #{graphsage_forward.5} parent=0 // pred_check_branch
    %18 = sbr.rel (0) target = $region17
  $region16: #{graphsage_forward.5} parent=0 // pred_region
    _
  $region17: #{graphsage_forward.5} parent=0 // pred_fallthru
    _
  %p20 = scmp.eq.s32.totalorder 0, 0
  // Predicated region
  $region18: #{graphsage_forward.5} parent=0 // pred_check
    %p21 = pneg %p20
  $region19: #{graphsage_forward.5} parent=0 // pred_check_branch
    %23 = sbr.rel (%p21) target = $region21
  $region20: #{graphsage_forward.5} parent=0 // pred_region
    %vm24 = vcmask 39936
    %25 = vst.msk [vmem:[#allocation2] sm:$0xff] %vm24, 0.0
  $region21: #{graphsage_forward.5} parent=0 // pred_fallthru
    _
  %v26 = vld [vmem:[#allocation2] sm:$0xff]
  %v27 = vld [vmem:[%s0] sm:$0xf]
  %v28 = vld [vmem:[%s1] sm:$0xf]
  %vm29 = vcmask 64512
  %v31 = vsel %vm29, %v27, 0
  %vm33 = vcmask 1043456
  %v35 = vsel %vm33, %v28, 0
  %37 = vmatprep.subr.bf16.mxu0 0
  %38 = vmatpush1.bf16.msra.mxu0 0
  %39 = vmatprep.subr.bf16.mxu0 0
  %40 = vmatpush1.bf16.msra.mxu0 0
  %41 = vmatprep.subr.bf16.mxu0 0
  %42 = vmatpush1.bf16.msra.mxu0 0
  %43 = vmatprep.subr.bf16.mxu0 0
  %44 = vmatpush1.bf16.msra.mxu0 0
  %45 = vmatprep.subr.bf16.mxu0 0
  %46 = vmatpush1.bf16.msra.mxu0 0
  %47 = vmatprep.subr.bf16.mxu0 0
  %48 = vmatpush1.bf16.msra.mxu0 0
  %49 = vmatprep.subr.bf16.mxu0 0
  %50 = vmatpush1.bf16.msra.mxu0 0
  %51 = vmatprep.subr.bf16.mxu0 0
  %52 = vmatpush1.bf16.msra.mxu0 %v35
  %53 = vmatprep.subr.bf16.mxu0 0
  %54 = vmatpush2.bf16.msra.mxu0 0
  %55 = vmatprep.subr.bf16.mxu0 0
  %56 = vmatpush2.bf16.msra.mxu0 0
  %57 = vmatprep.subr.bf16.mxu0 0
  %58 = vmatpush2.bf16.msra.mxu0 0
  %59 = vmatprep.subr.bf16.mxu0 0
  %60 = vmatpush2.bf16.msra.mxu0 0
  %61 = vmatprep.subr.bf16.mxu0 0
  %62 = vmatpush2.bf16.msra.mxu0 0
  %63 = vmatprep.subr.bf16.mxu0 0
  %64 = vmatpush2.bf16.msra.mxu0 0
  %65 = vmatprep.subr.bf16.mxu0 0
  %66 = vmatpush2.bf16.msra.mxu0 0
  %67 = vmatprep.subr.bf16.mxu0 0
  %68 = vmatpush2.bf16.msra.mxu0 0
  %69 = vmatprep.mubr.bf16.mxu0 0
  %70 = vmatmul.mubr.bf16.gmra.mxu0 %v31
  %v71 = vpop.f32.mrf.mxu0
  %v72 = vadd.f32 0.0, %v71
  %v73 = vpop.f32.mrf.mxu0
  %v74 = vpop.f32.mrf.mxu0
  %v75 = vpop.f32.mrf.mxu0
  %76 = vdwg.mxu0
  %v77 = vadd.f32 %v26, %v72
  %vm78 = vcmask 39936
  %79 = vst.msk [vmem:[#allocation2] sm:$0xff] %vm78, %v77
  // Predicated region
  $region22: #{graphsage_forward.5} parent=0 // pred_check
    %p80 = pneg %p20
  $region23: #{graphsage_forward.5} parent=0 // pred_check_branch
    %82 = sbr.rel (%p80) target = $region25
  $region24: #{graphsage_forward.5} parent=0 // pred_region
    %v83 = vld [vmem:[#allocation2] sm:$0xff]
    %v84 = vadd.f32 %v83, 1.0
    %v85 = vrcp.pop %v84
    %v86 = vld [vmem:[%s2] sm:$0xf]
    %v87 = vunpack.c.l.bf16 %v86
    %v88 = vadd.f32 %v83, %v87
    %90 = vset.pattern.permute.xlu0 4
    %91 = vperm.xlu0 %90, %v85
    %v92 = vpop.permute.xlu0 %91
    %v94 = vmul.f32 %v88, %v92
    %v95 = vld [vmem:[%s3] sm:$0x1]
    %v97 = vlaneseq
    %v98 = vshrl.u32 %v97, 7
    %v99 = vsub.s32 0, %v98
    %v100 = vrot.slane %v95, %v99
    %v102 = vadd.f32 %v94, %v100
    %vm103 = vcmask 31744
    %104 = vst.msk [vmem:[%s4] sm:$0xff] %vm103, %v102
    %105 = vrot.lane.b32.xlu0 %v85, 124
    %v106 = vpop.permute.xlu0 %105
    %vm108 = vcmask 7168
    %109 = vst.msk [vmem:[%s5] sm:$0xff] %vm108, %v106
  $region25: #{graphsage_forward.5} parent=0 // pred_fallthru
    _
  // Predicated region
  $region26: #{graphsage_forward.5} parent=0 // pred_check
    _
  $region27: #{graphsage_forward.5} parent=0 // pred_check_branch
    %111 = sbr.rel (0) target = $region29
  $region28: #{graphsage_forward.5} parent=0 // pred_region
    _
  $region29: #{graphsage_forward.5} parent=0 // pred_fallthru
    _
  // Predicated region
  $region30: #{graphsage_forward.5} parent=0 // pred_check
    _
  $region31: #{graphsage_forward.5} parent=0 // pred_check_branch
    %113 = sbr.rel (0) target = $region33
  $region32: #{graphsage_forward.5} parent=0 // pred_region
    _
  $region33: #{graphsage_forward.5} parent=0 // pred_fallthru
    _
  // Predicated region
  $region34: #{graphsage_forward.5} parent=0 // pred_check
    _
  $region35: #{graphsage_forward.5} parent=0 // pred_check_branch
    %115 = sbr.rel (0) target = $region37
  $region36: #{graphsage_forward.5} parent=0 // pred_region
    _
  $region37: #{graphsage_forward.5} parent=0 // pred_fallthru
    _
  // Predicated region
  $region38: #{graphsage_forward.5} parent=0 // pred_check
    _
  $region39: #{graphsage_forward.5} parent=0 // pred_check_branch
    %117 = sbr.rel (0) target = $region41
  $region40: #{graphsage_forward.5} parent=0 // pred_region
    _
  $region41: #{graphsage_forward.5} parent=0 // pred_fallthru
    _

// kernel: graphsage_forward.7
$region0: #{graphsage_forward.7}
  #allocation0 [shape = 'u32[]', space=smem, size = 0x4, offset = 0x4, fixed_abs, tag = 'smem constant byte address 0x4 - core index']
  #allocation1 [shape = 'u32[144,128]{1,0:T(1,128)}', space=vmem, size = 0x12000, scoped, tag = 'internal scratch']
  #allocation2 [shape = 'f32[8,4]{1,0:T(8,128)}', space=vmem, size = 0x1000, scoped, tag = 'scratch operand']
  %s0 = inlined_call_operand.vmem [shape: bf16[8,8], index: 0, kind: input, shape index: {}]
  %s1 = inlined_call_operand.vmem [shape: bf16[8,4], index: 1, kind: input, shape index: {}, may-alias: {1,2}]
  %s2 = inlined_call_operand.vmem [shape: bf16[8,4], index: 2, kind: input, shape index: {}, may-alias: {1,2}]
  %s3 = inlined_call_operand.vmem [shape: f32[1,4], index: 3, kind: input, shape index: {}]
  %s4 = inlined_call_operand.vmem [shape: f32[8,1], index: 4, kind: input, shape index: {}]
  %s5 = inlined_call_operand.vmem [shape: f32[8,4], index: 5, kind: output, shape index: {}]
  %s6 = sld [smem:[#allocation0]]
  $region38: #{graphsage_forward.7} parent=0
    _
  %s8 = ssub.s32 1, %s6
  %s9 = scalar_select 0, %s8, %s6
  // Predicated region
  $region2: #{graphsage_forward.7} parent=0 // pred_check
    _
  $region3: #{graphsage_forward.7} parent=0 // pred_check_branch
    %11 = sbr.rel (0) target = $region5
  $region4: #{graphsage_forward.7} parent=0 // pred_region
    _
  $region5: #{graphsage_forward.7} parent=0 // pred_fallthru
    _
  // Predicated region
  $region6: #{graphsage_forward.7} parent=0 // pred_check
    _
  $region7: #{graphsage_forward.7} parent=0 // pred_check_branch
    %13 = sbr.rel (0) target = $region9
  $region8: #{graphsage_forward.7} parent=0 // pred_region
    _
  $region9: #{graphsage_forward.7} parent=0 // pred_fallthru
    _
  // Predicated region
  $region10: #{graphsage_forward.7} parent=0 // pred_check
    _
  $region11: #{graphsage_forward.7} parent=0 // pred_check_branch
    %15 = sbr.rel (0) target = $region13
  $region12: #{graphsage_forward.7} parent=0 // pred_region
    _
  $region13: #{graphsage_forward.7} parent=0 // pred_fallthru
    _
  // Predicated region
  $region14: #{graphsage_forward.7} parent=0 // pred_check
    _
  $region15: #{graphsage_forward.7} parent=0 // pred_check_branch
    %17 = sbr.rel (0) target = $region17
  $region16: #{graphsage_forward.7} parent=0 // pred_region
    _
  $region17: #{graphsage_forward.7} parent=0 // pred_fallthru
    _
  // Predicated region
  $region18: #{graphsage_forward.7} parent=0 // pred_check
    _
  $region19: #{graphsage_forward.7} parent=0 // pred_check_branch
    %19 = sbr.rel (0) target = $region21
  $region20: #{graphsage_forward.7} parent=0 // pred_region
    _
  $region21: #{graphsage_forward.7} parent=0 // pred_fallthru
    _
  %p21 = scmp.eq.s32.totalorder 0, 0
  // Predicated region
  $region22: #{graphsage_forward.7} parent=0 // pred_check
    %p22 = pneg %p21
  $region23: #{graphsage_forward.7} parent=0 // pred_check_branch
    %24 = sbr.rel (%p22) target = $region25
  $region24: #{graphsage_forward.7} parent=0 // pred_region
    %vm25 = vcmask 31744
    %26 = vst.msk [vmem:[#allocation2] sm:$0xff] %vm25, 0.0
  $region25: #{graphsage_forward.7} parent=0 // pred_fallthru
    _
  %v27 = vld [vmem:[#allocation2] sm:$0xff]
  %v28 = vld [vmem:[%s0] sm:$0xf]
  %v29 = vld [vmem:[%s1] sm:$0xf]
  %vm30 = vcmask 64512
  %v32 = vsel %vm30, %v28, 0
  %vm34 = vcmask 1043456
  %v36 = vsel %vm34, %v29, 0
  %38 = vmatprep.subr.bf16.mxu0 0
  %39 = vmatpush1.bf16.msra.mxu0 0
  %40 = vmatprep.subr.bf16.mxu0 0
  %41 = vmatpush1.bf16.msra.mxu0 0
  %42 = vmatprep.subr.bf16.mxu0 0
  %43 = vmatpush1.bf16.msra.mxu0 0
  %44 = vmatprep.subr.bf16.mxu0 0
  %45 = vmatpush1.bf16.msra.mxu0 0
  %46 = vmatprep.subr.bf16.mxu0 0
  %47 = vmatpush1.bf16.msra.mxu0 0
  %48 = vmatprep.subr.bf16.mxu0 0
  %49 = vmatpush1.bf16.msra.mxu0 0
  %50 = vmatprep.subr.bf16.mxu0 0
  %51 = vmatpush1.bf16.msra.mxu0 0
  %52 = vmatprep.subr.bf16.mxu0 0
  %53 = vmatpush1.bf16.msra.mxu0 %v36
  %54 = vmatprep.subr.bf16.mxu0 0
  %55 = vmatpush2.bf16.msra.mxu0 0
  %56 = vmatprep.subr.bf16.mxu0 0
  %57 = vmatpush2.bf16.msra.mxu0 0
  %58 = vmatprep.subr.bf16.mxu0 0
  %59 = vmatpush2.bf16.msra.mxu0 0
  %60 = vmatprep.subr.bf16.mxu0 0
  %61 = vmatpush2.bf16.msra.mxu0 0
  %62 = vmatprep.subr.bf16.mxu0 0
  %63 = vmatpush2.bf16.msra.mxu0 0
  %64 = vmatprep.subr.bf16.mxu0 0
  %65 = vmatpush2.bf16.msra.mxu0 0
  %66 = vmatprep.subr.bf16.mxu0 0
  %67 = vmatpush2.bf16.msra.mxu0 0
  %68 = vmatprep.subr.bf16.mxu0 0
  %69 = vmatpush2.bf16.msra.mxu0 0
  %70 = vmatprep.mubr.bf16.mxu0 0
  %71 = vmatmul.mubr.bf16.gmra.mxu0 %v32
  %v72 = vpop.f32.mrf.mxu0
  %v73 = vadd.f32 0.0, %v72
  %v74 = vpop.f32.mrf.mxu0
  %v75 = vpop.f32.mrf.mxu0
  %v76 = vpop.f32.mrf.mxu0
  %77 = vdwg.mxu0
  %v78 = vadd.f32 %v27, %v73
  %vm79 = vcmask 31744
  %80 = vst.msk [vmem:[#allocation2] sm:$0xff] %vm79, %v78
  // Predicated region
  $region26: #{graphsage_forward.7} parent=0 // pred_check
    %p81 = pneg %p21
  $region27: #{graphsage_forward.7} parent=0 // pred_check_branch
    %83 = sbr.rel (%p81) target = $region29
  $region28: #{graphsage_forward.7} parent=0 // pred_region
    %v84 = vld [vmem:[#allocation2] sm:$0xff]
    %v85 = vld [vmem:[%s2] sm:$0xf]
    %v86 = vunpack.c.l.bf16 %v85
    %v87 = vadd.f32 %v84, %v86
    %v88 = vld [vmem:[%s4] sm:$0xff]
    %90 = vset.pattern.permute.xlu0 0
    %91 = vperm.xlu0 %90, %v88
    %v92 = vpop.permute.xlu0 %91
    %v94 = vmul.f32 %v87, %v92
    %v95 = vld [vmem:[%s3] sm:$0x1]
    %v97 = vlaneseq
    %v98 = vshrl.u32 %v97, 7
    %v99 = vsub.s32 0, %v98
    %v100 = vrot.slane %v95, %v99
    %v102 = vadd.f32 %v94, %v100
    %v103 = vmax.f32 %v102, 0.0
    %104 = vst.msk [vmem:[%s5] sm:$0xff] %vm79, %v103
  $region29: #{graphsage_forward.7} parent=0 // pred_fallthru
    _
  // Predicated region
  $region30: #{graphsage_forward.7} parent=0 // pred_check
    _
  $region31: #{graphsage_forward.7} parent=0 // pred_check_branch
    %106 = sbr.rel (0) target = $region33
  $region32: #{graphsage_forward.7} parent=0 // pred_region
    _
  $region33: #{graphsage_forward.7} parent=0 // pred_fallthru
    _
  // Predicated region
  $region34: #{graphsage_forward.7} parent=0 // pred_check
    _
  $region35: #{graphsage_forward.7} parent=0 // pred_check_branch
    %108 = sbr.rel (0) target = $region37
  $region36: #{graphsage_forward.7} parent=0 // pred_region
    _
  $region37: #{graphsage_forward.7} parent=0 // pred_fallthru
    _

// kernel: graphsage_forward.4
$region0: #{graphsage_forward.4}
  #allocation0 [shape = 'u32[]', space=smem, size = 0x4, offset = 0x4, fixed_abs, tag = 'smem constant byte address 0x4 - core index']
  #allocation1 [shape = 'u32[144,128]{1,0:T(1,128)}', space=vmem, size = 0x12000, scoped, tag = 'internal scratch']
  %s0 = inlined_call_operand.vmem [shape: f32[8,8], index: 0, kind: input, shape index: {}]
  %s1 = inlined_call_operand.vmem [shape: f32[1,32], index: 1, kind: input, shape index: {}]
  %s2 = inlined_call_operand.vmem [shape: f32[8,32], index: 2, kind: input, shape index: {}]
  %s3 = inlined_call_operand.vmem [shape: f32[1,32], index: 3, kind: input, shape index: {}]
  %s4 = inlined_call_operand.vmem [shape: f32[8,16], index: 4, kind: input, shape index: {}]
  %s5 = inlined_call_operand.vmem [shape: f32[4,16], index: 5, kind: input, shape index: {}]
  %s6 = inlined_call_operand.vmem [shape: f32[1,16], index: 6, kind: input, shape index: {}]
  %s7 = inlined_call_operand.vmem [shape: f32[8,32], index: 7, kind: output, shape index: {}]
  %s8 = sld [smem:[#allocation0]]
  $region38: #{graphsage_forward.4} parent=0
    _
  %s10 = ssub.s32 1, %s8
  %s11 = scalar_select 0, %s10, %s8
  // Predicated region
  $region2: #{graphsage_forward.4} parent=0 // pred_check
    _
  $region3: #{graphsage_forward.4} parent=0 // pred_check_branch
    %13 = sbr.rel (0) target = $region5
  $region4: #{graphsage_forward.4} parent=0 // pred_region
    _
  $region5: #{graphsage_forward.4} parent=0 // pred_fallthru
    _
  // Predicated region
  $region6: #{graphsage_forward.4} parent=0 // pred_check
    _
  $region7: #{graphsage_forward.4} parent=0 // pred_check_branch
    %15 = sbr.rel (0) target = $region9
  $region8: #{graphsage_forward.4} parent=0 // pred_region
    _
  $region9: #{graphsage_forward.4} parent=0 // pred_fallthru
    _
  // Predicated region
  $region10: #{graphsage_forward.4} parent=0 // pred_check
    _
  $region11: #{graphsage_forward.4} parent=0 // pred_check_branch
    %17 = sbr.rel (0) target = $region13
  $region12: #{graphsage_forward.4} parent=0 // pred_region
    _
  $region13: #{graphsage_forward.4} parent=0 // pred_fallthru
    _
  // Predicated region
  $region14: #{graphsage_forward.4} parent=0 // pred_check
    _
  $region15: #{graphsage_forward.4} parent=0 // pred_check_branch
    %19 = sbr.rel (0) target = $region17
  $region16: #{graphsage_forward.4} parent=0 // pred_region
    _
  $region17: #{graphsage_forward.4} parent=0 // pred_fallthru
    _
  // Predicated region
  $region18: #{graphsage_forward.4} parent=0 // pred_check
    _
  $region19: #{graphsage_forward.4} parent=0 // pred_check_branch
    %21 = sbr.rel (0) target = $region21
  $region20: #{graphsage_forward.4} parent=0 // pred_region
    _
  $region21: #{graphsage_forward.4} parent=0 // pred_fallthru
    _
  // Predicated region
  $region22: #{graphsage_forward.4} parent=0 // pred_check
    _
  $region23: #{graphsage_forward.4} parent=0 // pred_check_branch
    %23 = sbr.rel (0) target = $region25
  $region24: #{graphsage_forward.4} parent=0 // pred_region
    _
  $region25: #{graphsage_forward.4} parent=0 // pred_fallthru
    _
  // Predicated region
  $region26: #{graphsage_forward.4} parent=0 // pred_check
    _
  $region27: #{graphsage_forward.4} parent=0 // pred_check_branch
    %25 = sbr.rel (0) target = $region29
  $region28: #{graphsage_forward.4} parent=0 // pred_region
    _
  $region29: #{graphsage_forward.4} parent=0 // pred_fallthru
    _
  %v26 = vld [vmem:[%s0] sm:$0xff]
  %v27 = vld [vmem:[%s1] sm:$0x1]
  %v28 = vld [vmem:[%s2] sm:$0xff]
  %v29 = vld [vmem:[%s3] sm:$0x1]
  %v30 = vld [vmem:[%s4] sm:$0xff]
  %v31 = vld [vmem:[%s5] sm:$0xf]
  %v32 = vld [vmem:[%s6] sm:$0x1]
  %34 = vset.pattern.permute.xlu0 0
  %35 = vperm.xlu0 %34, %v26
  %v36 = vpop.permute.xlu0 %35
  %v39 = vlaneseq
  %v40 = vshrl.u32 %v39, 7
  %v41 = vsub.s32 0, %v40
  %v42 = vrot.slane %v27, %v41
  %v44 = vmul.f32 %v36, %v42
  %v46 = vlaneseq
  %v47 = vshrl.u32 %v46, 7
  %v48 = vsub.s32 0, %v47
  %v49 = vrot.slane %v29, %v48
  %v51 = vadd.f32 %v44, %v49
  %vm52 = vcmask 64512
  %v54 = vsel %vm52, 0.0, 0
  %56 = vmatprep.subr.mxu0 0.0
  %57 = vmatpush1.msra.mxu0 0.0
  %58 = vmatprep.subr.mxu0 0.0
  %59 = vmatpush1.msra.mxu0 0.0
  %60 = vmatprep.subr.mxu0 0.0
  %61 = vmatpush1.msra.mxu0 0.0
  %62 = vmatprep.subr.mxu0 0.0
  %63 = vmatpush1.msra.mxu0 0.0
  %64 = vmatprep.subr.mxu0 0.0
  %65 = vmatpush1.msra.mxu0 0.0
  %66 = vmatprep.subr.mxu0 0.0
  %67 = vmatpush1.msra.mxu0 0.0
  %68 = vmatprep.subr.mxu0 0.0
  %69 = vmatpush1.msra.mxu0 0.0
  %70 = vmatprep.subr.mxu0 0.0
  %71 = vmatpush1.msra.mxu0 0.0
  %72 = vmatprep.subr.mxu0 0.0
  %73 = vmatpush1.msra.mxu0 0.0
  %74 = vmatprep.subr.mxu0 0.0
  %75 = vmatpush1.msra.mxu0 0.0
  %76 = vmatprep.subr.mxu0 0.0
  %77 = vmatpush1.msra.mxu0 0.0
  %78 = vmatprep.subr.mxu0 0.0
  %79 = vmatpush1.msra.mxu0 0.0
  %80 = vmatprep.subr.mxu0 0.0
  %81 = vmatpush1.msra.mxu0 0.0
  %82 = vmatprep.subr.mxu0 0.0
  %83 = vmatpush1.msra.mxu0 0.0
  %84 = vmatprep.subr.mxu0 0.0
  %85 = vmatpush1.msra.mxu0 0.0
  %86 = vmatprep.subr.mxu0 0.0
  %87 = vmatpush1.msra.mxu0 %v28
  %88 = vmatprep.subr.mxu0 0.0
  %89 = vmatpush2.msra.mxu0 0.0
  %90 = vmatprep.subr.mxu0 0.0
  %91 = vmatpush2.msra.mxu0 0.0
  %92 = vmatprep.subr.mxu0 0.0
  %93 = vmatpush2.msra.mxu0 0.0
  %94 = vmatprep.subr.mxu0 0.0
  %95 = vmatpush2.msra.mxu0 0.0
  %96 = vmatprep.subr.mxu0 0.0
  %97 = vmatpush2.msra.mxu0 0.0
  %98 = vmatprep.subr.mxu0 0.0
  %99 = vmatpush2.msra.mxu0 0.0
  %100 = vmatprep.subr.mxu0 0.0
  %101 = vmatpush2.msra.mxu0 0.0
  %102 = vmatprep.subr.mxu0 0.0
  %103 = vmatpush2.msra.mxu0 0.0
  %104 = vmatprep.subr.mxu0 0.0
  %105 = vmatpush2.msra.mxu0 0.0
  %106 = vmatprep.subr.mxu0 0.0
  %107 = vmatpush2.msra.mxu0 0.0
  %108 = vmatprep.subr.mxu0 0.0
  %109 = vmatpush2.msra.mxu0 0.0
  %110 = vmatprep.subr.mxu0 0.0
  %111 = vmatpush2.msra.mxu0 0.0
  %112 = vmatprep.subr.mxu0 0.0
  %113 = vmatpush2.msra.mxu0 0.0
  %114 = vmatprep.subr.mxu0 0.0
  %115 = vmatpush2.msra.mxu0 0.0
  %116 = vmatprep.subr.mxu0 0.0
  %117 = vmatpush2.msra.mxu0 0.0
  %118 = vmatprep.subr.mxu0 0.0
  %119 = vmatpush2.msra.mxu0 0.0
  %120 = vmatprep.mubr.f32.mxu0 0.0
  %121 = vmatmul.mubr.f32.gmra.mxu0 %v54
  %v122 = vpop.f32.mrf.mxu0
  %v123 = vadd.f32 0.0, %v122
  %v124 = vpop.f32.mrf.mxu0
  %125 = vdwg.mxu0
  %v126 = vadd.f32 %v51, %v123
  %v127 = vxor.u32 %v126, 2147483648
  %v128 = vmul.f32 %v127, 1.442695
  %v129 = vpow.pop %v128
  %v130 = vadd.f32 %v129, 1.0
  %v131 = vrcp.pop %v130
  %v132 = vmul.f32 1.0, %v131
  %v133 = vtanh.pop %v126
  %v134 = vmul.f32 %v132, 0.0
  %136 = vrot.lane.b32.xlu0 %v133, 104
  %v137 = vpop.permute.xlu0 %136
  %v139 = vmul.f32 %v132, %v137
  %141 = vrot.lane.b32.xlu0 %v139, 8
  %v142 = vpop.permute.xlu0 %141
  %v144 = vadd.f32 %v134, %v142
  %v145 = vtanh.pop %v144
  %147 = vrot.lane.b32.xlu0 %v145, 8
  %v148 = vpop.permute.xlu0 %147
  %v150 = vmul.f32 %v132, %v148
  %vm151 = vcmask 31744
  %v152 = vsel %vm151, 0.0, 0
  %vm154 = vcmask 1043456
  %v156 = vsel %vm154, %v31, 0
  %158 = vmatprep.subr.mxu0 0.0
  %159 = vmatpush1.msra.mxu0 0.0
  %160 = vmatprep.subr.mxu0 0.0
  %161 = vmatpush1.msra.mxu0 0.0
  %162 = vmatprep.subr.mxu0 0.0
  %163 = vmatpush1.msra.mxu0 0.0
  %164 = vmatprep.subr.mxu0 0.0
  %165 = vmatpush1.msra.mxu0 0.0
  %166 = vmatprep.subr.mxu0 0.0
  %167 = vmatpush1.msra.mxu0 0.0
  %168 = vmatprep.subr.mxu0 0.0
  %169 = vmatpush1.msra.mxu0 0.0
  %170 = vmatprep.subr.mxu0 0.0
  %171 = vmatpush1.msra.mxu0 0.0
  %172 = vmatprep.subr.mxu0 0.0
  %173 = vmatpush1.msra.mxu0 0.0
  %174 = vmatprep.subr.mxu0 0.0
  %175 = vmatpush1.msra.mxu0 0.0
  %176 = vmatprep.subr.mxu0 0.0
  %177 = vmatpush1.msra.mxu0 0.0
  %178 = vmatprep.subr.mxu0 0.0
  %179 = vmatpush1.msra.mxu0 0.0
  %180 = vmatprep.subr.mxu0 0.0
  %181 = vmatpush1.msra.mxu0 0.0
  %182 = vmatprep.subr.mxu0 0.0
  %183 = vmatpush1.msra.mxu0 0.0
  %184 = vmatprep.subr.mxu0 0.0
  %185 = vmatpush1.msra.mxu0 0.0
  %186 = vmatprep.subr.mxu0 0.0
  %187 = vmatpush1.msra.mxu0 0.0
  %188 = vmatprep.subr.mxu0 0.0
  %189 = vmatpush1.msra.mxu0 %v156
  %190 = vmatprep.subr.mxu0 0.0
  %191 = vmatpush2.msra.mxu0 0.0
  %192 = vmatprep.subr.mxu0 0.0
  %193 = vmatpush2.msra.mxu0 0.0
  %194 = vmatprep.subr.mxu0 0.0
  %195 = vmatpush2.msra.mxu0 0.0
  %196 = vmatprep.subr.mxu0 0.0
  %197 = vmatpush2.msra.mxu0 0.0
  %198 = vmatprep.subr.mxu0 0.0
  %199 = vmatpush2.msra.mxu0 0.0
  %200 = vmatprep.subr.mxu0 0.0
  %201 = vmatpush2.msra.mxu0 0.0
  %202 = vmatprep.subr.mxu0 0.0
  %203 = vmatpush2.msra.mxu0 0.0
  %204 = vmatprep.subr.mxu0 0.0
  %205 = vmatpush2.msra.mxu0 0.0
  %206 = vmatprep.subr.mxu0 0.0
  %207 = vmatpush2.msra.mxu0 0.0
  %208 = vmatprep.subr.mxu0 0.0
  %209 = vmatpush2.msra.mxu0 0.0
  %210 = vmatprep.subr.mxu0 0.0
  %211 = vmatpush2.msra.mxu0 0.0
  %212 = vmatprep.subr.mxu0 0.0
  %213 = vmatpush2.msra.mxu0 0.0
  %214 = vmatprep.subr.mxu0 0.0
  %215 = vmatpush2.msra.mxu0 0.0
  %216 = vmatprep.subr.mxu0 0.0
  %217 = vmatpush2.msra.mxu0 0.0
  %218 = vmatprep.subr.mxu0 0.0
  %219 = vmatpush2.msra.mxu0 0.0
  %220 = vmatprep.subr.mxu0 0.0
  %221 = vmatpush2.msra.mxu0 0.0
  %222 = vmatprep.mubr.f32.mxu0 0.0
  %223 = vmatmul.mubr.f32.gmra.mxu0 %v152
  %v224 = vpop.f32.mrf.mxu0
  %v225 = vadd.f32 0.0, %v224
  %v226 = vpop.f32.mrf.mxu0
  %227 = vdwg.mxu0
  %229 = vrot.lane.b32.xlu0 %v150, 112
  %v230 = vpop.permute.xlu0 %229
  %v231 = vsel %vm52, %v230, 0
  %233 = vmatprep.subr.mxu0 0.0
  %234 = vmatpush1.msra.mxu0 0.0
  %235 = vmatprep.subr.mxu0 0.0
  %236 = vmatpush1.msra.mxu0 0.0
  %237 = vmatprep.subr.mxu0 0.0
  %238 = vmatpush1.msra.mxu0 0.0
  %239 = vmatprep.subr.mxu0 0.0
  %240 = vmatpush1.msra.mxu0 0.0
  %241 = vmatprep.subr.mxu0 0.0
  %242 = vmatpush1.msra.mxu0 0.0
  %243 = vmatprep.subr.mxu0 0.0
  %244 = vmatpush1.msra.mxu0 0.0
  %245 = vmatprep.subr.mxu0 0.0
  %246 = vmatpush1.msra.mxu0 0.0
  %247 = vmatprep.subr.mxu0 0.0
  %248 = vmatpush1.msra.mxu0 0.0
  %249 = vmatprep.subr.mxu0 0.0
  %250 = vmatpush1.msra.mxu0 0.0
  %251 = vmatprep.subr.mxu0 0.0
  %252 = vmatpush1.msra.mxu0 0.0
  %253 = vmatprep.subr.mxu0 0.0
  %254 = vmatpush1.msra.mxu0 0.0
  %255 = vmatprep.subr.mxu0 0.0
  %256 = vmatpush1.msra.mxu0 0.0
  %257 = vmatprep.subr.mxu0 0.0
  %258 = vmatpush1.msra.mxu0 0.0
  %259 = vmatprep.subr.mxu0 0.0
  %260 = vmatpush1.msra.mxu0 0.0
  %261 = vmatprep.subr.mxu0 0.0
  %262 = vmatpush1.msra.mxu0 0.0
  %263 = vmatprep.subr.mxu0 0.0
  %264 = vmatpush1.msra.mxu0 %v30
  %265 = vmatprep.subr.mxu0 0.0
  %266 = vmatpush2.msra.mxu0 0.0
  %267 = vmatprep.subr.mxu0 0.0
  %268 = vmatpush2.msra.mxu0 0.0
  %269 = vmatprep.subr.mxu0 0.0
  %270 = vmatpush2.msra.mxu0 0.0
  %271 = vmatprep.subr.mxu0 0.0
  %272 = vmatpush2.msra.mxu0 0.0
  %273 = vmatprep.subr.mxu0 0.0
  %274 = vmatpush2.msra.mxu0 0.0
  %275 = vmatprep.subr.mxu0 0.0
  %276 = vmatpush2.msra.mxu0 0.0
  %277 = vmatprep.subr.mxu0 0.0
  %278 = vmatpush2.msra.mxu0 0.0
  %279 = vmatprep.subr.mxu0 0.0
  %280 = vmatpush2.msra.mxu0 0.0
  %281 = vmatprep.subr.mxu0 0.0
  %282 = vmatpush2.msra.mxu0 0.0
  %283 = vmatprep.subr.mxu0 0.0
  %284 = vmatpush2.msra.mxu0 0.0
  %285 = vmatprep.subr.mxu0 0.0
  %286 = vmatpush2.msra.mxu0 0.0
  %287 = vmatprep.subr.mxu0 0.0
  %288 = vmatpush2.msra.mxu0 0.0
  %289 = vmatprep.subr.mxu0 0.0
  %290 = vmatpush2.msra.mxu0 0.0
  %291 = vmatprep.subr.mxu0 0.0
  %292 = vmatpush2.msra.mxu0 0.0
  %293 = vmatprep.subr.mxu0 0.0
  %294 = vmatpush2.msra.mxu0 0.0
  %295 = vmatprep.subr.mxu0 0.0
  %296 = vmatpush2.msra.mxu0 0.0
  %297 = vmatprep.mubr.f32.mxu0 0.0
  %298 = vmatmul.mubr.f32.gmra.mxu0 %v231
  %v299 = vpop.f32.mrf.mxu0
  %v300 = vadd.f32 %v225, %v299
  %v301 = vpop.f32.mrf.mxu0
  %302 = vdwg.mxu0
  %v304 = vlaneseq
  %v305 = vshrl.u32 %v304, 7
  %v306 = vsub.s32 0, %v305
  %v307 = vrot.slane %v32, %v306
  %v309 = vadd.f32 %v300, %v307
  %v310 = vxor.u32 %v309, 2147483648
  %v311 = vmul.f32 %v310, 1.442695
  %v312 = vpow.pop %v311
  %v313 = vadd.f32 %v312, 1.0
  %v314 = vrcp.pop %v313
  %v315 = vmul.f32 1.0, %v314
  %v316 = vtanh.pop %v309
  %v317 = vmul.f32 %v315, 0.0
  %319 = vrot.lane.b32.xlu0 %v316, 116
  %v320 = vpop.permute.xlu0 %319
  %v322 = vmul.f32 %v315, %v320
  %324 = vrot.lane.b32.xlu0 %v322, 4
  %v325 = vpop.permute.xlu0 %324
  %v327 = vadd.f32 %v317, %v325
  %v328 = vtanh.pop %v327
  %330 = vrot.lane.b32.xlu0 %v328, 4
  %v331 = vpop.permute.xlu0 %330
  %v333 = vmul.f32 %v315, %v331
  %335 = vrot.lane.b32.xlu0 %v333, 120
  %v336 = vpop.permute.xlu0 %335
  %338 = vst.msk [vmem:[%s7] sm:$0xff] %vm151, %v336
  %339 = vset.pattern.permute.xlu0 1
  %340 = vperm.xlu0 %339, %v26
  %v341 = vpop.permute.xlu0 %340
  %v343 = vmul.f32 %v341, %v42
  %v344 = vadd.f32 %v343, %v49
  %345 = vmatprep.subr.mxu0 0.0
  %346 = vmatpush1.msra.mxu0 0.0
  %347 = vmatprep.subr.mxu0 0.0
  %348 = vmatpush1.msra.mxu0 0.0
  %349 = vmatprep.subr.mxu0 0.0
  %350 = vmatpush1.msra.mxu0 0.0
  %351 = vmatprep.subr.mxu0 0.0
  %352 = vmatpush1.msra.mxu0 0.0
  %353 = vmatprep.subr.mxu0 0.0
  %354 = vmatpush1.msra.mxu0 0.0
  %355 = vmatprep.subr.mxu0 0.0
  %356 = vmatpush1.msra.mxu0 0.0
  %357 = vmatprep.subr.mxu0 0.0
  %358 = vmatpush1.msra.mxu0 0.0
  %359 = vmatprep.subr.mxu0 0.0
  %360 = vmatpush1.msra.mxu0 0.0
  %361 = vmatprep.subr.mxu0 0.0
  %362 = vmatpush1.msra.mxu0 0.0
  %363 = vmatprep.subr.mxu0 0.0
  %364 = vmatpush1.msra.mxu0 0.0
  %365 = vmatprep.subr.mxu0 0.0
  %366 = vmatpush1.msra.mxu0 0.0
  %367 = vmatprep.subr.mxu0 0.0
  %368 = vmatpush1.msra.mxu0 0.0
  %369 = vmatprep.subr.mxu0 0.0
  %370 = vmatpush1.msra.mxu0 0.0
  %371 = vmatprep.subr.mxu0 0.0
  %372 = vmatpush1.msra.mxu0 0.0
  %373 = vmatprep.subr.mxu0 0.0
  %374 = vmatpush1.msra.mxu0 0.0
  %375 = vmatprep.subr.mxu0 0.0
  %376 = vmatpush1.msra.mxu0 %v28
  %377 = vmatprep.subr.mxu0 0.0
  %378 = vmatpush2.msra.mxu0 0.0
  %379 = vmatprep.subr.mxu0 0.0
  %380 = vmatpush2.msra.mxu0 0.0
  %381 = vmatprep.subr.mxu0 0.0
  %382 = vmatpush2.msra.mxu0 0.0
  %383 = vmatprep.subr.mxu0 0.0
  %384 = vmatpush2.msra.mxu0 0.0
  %385 = vmatprep.subr.mxu0 0.0
  %386 = vmatpush2.msra.mxu0 0.0
  %387 = vmatprep.subr.mxu0 0.0
  %388 = vmatpush2.msra.mxu0 0.0
  %389 = vmatprep.subr.mxu0 0.0
  %390 = vmatpush2.msra.mxu0 0.0
  %391 = vmatprep.subr.mxu0 0.0
  %392 = vmatpush2.msra.mxu0 0.0
  %393 = vmatprep.subr.mxu0 0.0
  %394 = vmatpush2.msra.mxu0 0.0
  %395 = vmatprep.subr.mxu0 0.0
  %396 = vmatpush2.msra.mxu0 0.0
  %397 = vmatprep.subr.mxu0 0.0
  %398 = vmatpush2.msra.mxu0 0.0
  %399 = vmatprep.subr.mxu0 0.0
  %400 = vmatpush2.msra.mxu0 0.0
  %401 = vmatprep.subr.mxu0 0.0
  %402 = vmatpush2.msra.mxu0 0.0
  %403 = vmatprep.subr.mxu0 0.0
  %404 = vmatpush2.msra.mxu0 0.0
  %405 = vmatprep.subr.mxu0 0.0
  %406 = vmatpush2.msra.mxu0 0.0
  %407 = vmatprep.subr.mxu0 0.0
  %408 = vmatpush2.msra.mxu0 0.0
  %409 = vmatprep.mubr.f32.mxu0 0.0
  %410 = vmatmul.mubr.f32.gmra.mxu0 %v231
  %v411 = vpop.f32.mrf.mxu0
  %v412 = vadd.f32 0.0, %v411
  %v413 = vpop.f32.mrf.mxu0
  %414 = vdwg.mxu0
  %v415 = vadd.f32 %v344, %v412
  %v416 = vxor.u32 %v415, 2147483648
  %v417 = vmul.f32 %v416, 1.442695
  %v418 = vpow.pop %v417
  %v419 = vadd.f32 %v418, 1.0
  %v420 = vrcp.pop %v419
  %v421 = vmul.f32 1.0, %v420
  %v422 = vtanh.pop %v415
  %v423 = vmul.f32 %v421, %v144
  %425 = vrot.lane.b32.xlu0 %v422, 104
  %v426 = vpop.permute.xlu0 %425
  %v428 = vmul.f32 %v421, %v426
  %430 = vrot.lane.b32.xlu0 %v428, 8
  %v431 = vpop.permute.xlu0 %430
  %v433 = vadd.f32 %v423, %v431
  %v434 = vtanh.pop %v433
  %436 = vrot.lane.b32.xlu0 %v434, 8
  %v437 = vpop.permute.xlu0 %436
  %v439 = vmul.f32 %v421, %v437
  %v440 = vsel %vm151, %v336, 0
  %442 = vmatprep.subr.mxu0 0.0
  %443 = vmatpush1.msra.mxu0 0.0
  %444 = vmatprep.subr.mxu0 0.0
  %445 = vmatpush1.msra.mxu0 0.0
  %446 = vmatprep.subr.mxu0 0.0
  %447 = vmatpush1.msra.mxu0 0.0
  %448 = vmatprep.subr.mxu0 0.0
  %449 = vmatpush1.msra.mxu0 0.0
  %450 = vmatprep.subr.mxu0 0.0
  %451 = vmatpush1.msra.mxu0 0.0
  %452 = vmatprep.subr.mxu0 0.0
  %453 = vmatpush1.msra.mxu0 0.0
  %454 = vmatprep.subr.mxu0 0.0
  %455 = vmatpush1.msra.mxu0 0.0
  %456 = vmatprep.subr.mxu0 0.0
  %457 = vmatpush1.msra.mxu0 0.0
  %458 = vmatprep.subr.mxu0 0.0
  %459 = vmatpush1.msra.mxu0 0.0
  %460 = vmatprep.subr.mxu0 0.0
  %461 = vmatpush1.msra.mxu0 0.0
  %462 = vmatprep.subr.mxu0 0.0
  %463 = vmatpush1.msra.mxu0 0.0
  %464 = vmatprep.subr.mxu0 0.0
  %465 = vmatpush1.msra.mxu0 0.0
  %466 = vmatprep.subr.mxu0 0.0
  %467 = vmatpush1.msra.mxu0 0.0
  %468 = vmatprep.subr.mxu0 0.0
  %469 = vmatpush1.msra.mxu0 0.0
  %470 = vmatprep.subr.mxu0 0.0
  %471 = vmatpush1.msra.mxu0 0.0
  %472 = vmatprep.subr.mxu0 0.0
  %473 = vmatpush1.msra.mxu0 %v156
  %474 = vmatprep.subr.mxu0 0.0
  %475 = vmatpush2.msra.mxu0 0.0
  %476 = vmatprep.subr.mxu0 0.0
  %477 = vmatpush2.msra.mxu0 0.0
  %478 = vmatprep.subr.mxu0 0.0
  %479 = vmatpush2.msra.mxu0 0.0
  %480 = vmatprep.subr.mxu0 0.0
  %481 = vmatpush2.msra.mxu0 0.0
  %482 = vmatprep.subr.mxu0 0.0
  %483 = vmatpush2.msra.mxu0 0.0
  %484 = vmatprep.subr.mxu0 0.0
  %485 = vmatpush2.msra.mxu0 0.0
  %486 = vmatprep.subr.mxu0 0.0
  %487 = vmatpush2.msra.mxu0 0.0
  %488 = vmatprep.subr.mxu0 0.0
  %489 = vmatpush2.msra.mxu0 0.0
  %490 = vmatprep.subr.mxu0 0.0
  %491 = vmatpush2.msra.mxu0 0.0
  %492 = vmatprep.subr.mxu0 0.0
  %493 = vmatpush2.msra.mxu0 0.0
  %494 = vmatprep.subr.mxu0 0.0
  %495 = vmatpush2.msra.mxu0 0.0
  %496 = vmatprep.subr.mxu0 0.0
  %497 = vmatpush2.msra.mxu0 0.0
  %498 = vmatprep.subr.mxu0 0.0
  %499 = vmatpush2.msra.mxu0 0.0
  %500 = vmatprep.subr.mxu0 0.0
  %501 = vmatpush2.msra.mxu0 0.0
  %502 = vmatprep.subr.mxu0 0.0
  %503 = vmatpush2.msra.mxu0 0.0
  %504 = vmatprep.subr.mxu0 0.0
  %505 = vmatpush2.msra.mxu0 0.0
  %506 = vmatprep.mubr.f32.mxu0 0.0
  %507 = vmatmul.mubr.f32.gmra.mxu0 %v440
  %v508 = vpop.f32.mrf.mxu0
  %v509 = vadd.f32 0.0, %v508
  %v510 = vpop.f32.mrf.mxu0
  %511 = vdwg.mxu0
  %513 = vrot.lane.b32.xlu0 %v439, 112
  %v514 = vpop.permute.xlu0 %513
  %v515 = vsel %vm52, %v514, 0
  %517 = vmatprep.subr.mxu0 0.0
  %518 = vmatpush1.msra.mxu0 0.0
  %519 = vmatprep.subr.mxu0 0.0
  %520 = vmatpush1.msra.mxu0 0.0
  %521 = vmatprep.subr.mxu0 0.0
  %522 = vmatpush1.msra.mxu0 0.0
  %523 = vmatprep.subr.mxu0 0.0
  %524 = vmatpush1.msra.mxu0 0.0
  %525 = vmatprep.subr.mxu0 0.0
  %526 = vmatpush1.msra.mxu0 0.0
  %527 = vmatprep.subr.mxu0 0.0
  %528 = vmatpush1.msra.mxu0 0.0
  %529 = vmatprep.subr.mxu0 0.0
  %530 = vmatpush1.msra.mxu0 0.0
  %531 = vmatprep.subr.mxu0 0.0
  %532 = vmatpush1.msra.mxu0 0.0
  %533 = vmatprep.subr.mxu0 0.0
  %534 = vmatpush1.msra.mxu0 0.0
  %535 = vmatprep.subr.mxu0 0.0
  %536 = vmatpush1.msra.mxu0 0.0
  %537 = vmatprep.subr.mxu0 0.0
  %538 = vmatpush1.msra.mxu0 0.0
  %539 = vmatprep.subr.mxu0 0.0
  %540 = vmatpush1.msra.mxu0 0.0
  %541 = vmatprep.subr.mxu0 0.0
  %542 = vmatpush1.msra.mxu0 0.0
  %543 = vmatprep.subr.mxu0 0.0
  %544 = vmatpush1.msra.mxu0 0.0
  %545 = vmatprep.subr.mxu0 0.0
  %546 = vmatpush1.msra.mxu0 0.0
  %547 = vmatprep.subr.mxu0 0.0
  %548 = vmatpush1.msra.mxu0 %v30
  %549 = vmatprep.subr.mxu0 0.0
  %550 = vmatpush2.msra.mxu0 0.0
  %551 = vmatprep.subr.mxu0 0.0
  %552 = vmatpush2.msra.mxu0 0.0
  %553 = vmatprep.subr.mxu0 0.0
  %554 = vmatpush2.msra.mxu0 0.0
  %555 = vmatprep.subr.mxu0 0.0
  %556 = vmatpush2.msra.mxu0 0.0
  %557 = vmatprep.subr.mxu0 0.0
  %558 = vmatpush2.msra.mxu0 0.0
  %559 = vmatprep.subr.mxu0 0.0
  %560 = vmatpush2.msra.mxu0 0.0
  %561 = vmatprep.subr.mxu0 0.0
  %562 = vmatpush2.msra.mxu0 0.0
  %563 = vmatprep.subr.mxu0 0.0
  %564 = vmatpush2.msra.mxu0 0.0
  %565 = vmatprep.subr.mxu0 0.0
  %566 = vmatpush2.msra.mxu0 0.0
  %567 = vmatprep.subr.mxu0 0.0
  %568 = vmatpush2.msra.mxu0 0.0
  %569 = vmatprep.subr.mxu0 0.0
  %570 = vmatpush2.msra.mxu0 0.0
  %571 = vmatprep.subr.mxu0 0.0
  %572 = vmatpush2.msra.mxu0 0.0
  %573 = vmatprep.subr.mxu0 0.0
  %574 = vmatpush2.msra.mxu0 0.0
  %575 = vmatprep.subr.mxu0 0.0
  %576 = vmatpush2.msra.mxu0 0.0
  %577 = vmatprep.subr.mxu0 0.0
  %578 = vmatpush2.msra.mxu0 0.0
  %579 = vmatprep.subr.mxu0 0.0
  %580 = vmatpush2.msra.mxu0 0.0
  %581 = vmatprep.mubr.f32.mxu0 0.0
  %582 = vmatmul.mubr.f32.gmra.mxu0 %v515
  %v583 = vpop.f32.mrf.mxu0
  %v584 = vadd.f32 %v509, %v583
  %v585 = vpop.f32.mrf.mxu0
  %586 = vdwg.mxu0
  %v587 = vadd.f32 %v584, %v307
  %v588 = vxor.u32 %v587, 2147483648
  %v589 = vmul.f32 %v588, 1.442695
  %v590 = vpow.pop %v589
  %v591 = vadd.f32 %v590, 1.0
  %v592 = vrcp.pop %v591
  %v593 = vmul.f32 1.0, %v592
  %v594 = vtanh.pop %v587
  %v595 = vmul.f32 %v593, %v327
  %597 = vrot.lane.b32.xlu0 %v594, 116
  %v598 = vpop.permute.xlu0 %597
  %v600 = vmul.f32 %v593, %v598
  %602 = vrot.lane.b32.xlu0 %v600, 4
  %v603 = vpop.permute.xlu0 %602
  %v605 = vadd.f32 %v595, %v603
  %v606 = vtanh.pop %v605
  %608 = vrot.lane.b32.xlu0 %v606, 4
  %v609 = vpop.permute.xlu0 %608
  %v611 = vmul.f32 %v593, %v609
  %613 = vrot.lane.b32.xlu0 %v611, 124
  %v614 = vpop.permute.xlu0 %613
  %vm616 = vcmask 64544
  %617 = vst.msk [vmem:[%s7] sm:$0xff] %vm616, %v614
  %618 = vset.pattern.permute.xlu0 2
  %619 = vperm.xlu0 %618, %v26
  %v620 = vpop.permute.xlu0 %619
  %v622 = vmul.f32 %v620, %v42
  %v623 = vadd.f32 %v622, %v49
  %624 = vmatprep.subr.mxu0 0.0
  %625 = vmatpush1.msra.mxu0 0.0
  %626 = vmatprep.subr.mxu0 0.0
  %627 = vmatpush1.msra.mxu0 0.0
  %628 = vmatprep.subr.mxu0 0.0
  %629 = vmatpush1.msra.mxu0 0.0
  %630 = vmatprep.subr.mxu0 0.0
  %631 = vmatpush1.msra.mxu0 0.0
  %632 = vmatprep.subr.mxu0 0.0
  %633 = vmatpush1.msra.mxu0 0.0
  %634 = vmatprep.subr.mxu0 0.0
  %635 = vmatpush1.msra.mxu0 0.0
  %636 = vmatprep.subr.mxu0 0.0
  %637 = vmatpush1.msra.mxu0 0.0
  %638 = vmatprep.subr.mxu0 0.0
  %639 = vmatpush1.msra.mxu0 0.0
  %640 = vmatprep.subr.mxu0 0.0
  %641 = vmatpush1.msra.mxu0 0.0
  %642 = vmatprep.subr.mxu0 0.0
  %643 = vmatpush1.msra.mxu0 0.0
  %644 = vmatprep.subr.mxu0 0.0
  %645 = vmatpush1.msra.mxu0 0.0
  %646 = vmatprep.subr.mxu0 0.0
  %647 = vmatpush1.msra.mxu0 0.0
  %648 = vmatprep.subr.mxu0 0.0
  %649 = vmatpush1.msra.mxu0 0.0
  %650 = vmatprep.subr.mxu0 0.0
  %651 = vmatpush1.msra.mxu0 0.0
  %652 = vmatprep.subr.mxu0 0.0
  %653 = vmatpush1.msra.mxu0 0.0
  %654 = vmatprep.subr.mxu0 0.0
  %655 = vmatpush1.msra.mxu0 %v28
  %656 = vmatprep.subr.mxu0 0.0
  %657 = vmatpush2.msra.mxu0 0.0
  %658 = vmatprep.subr.mxu0 0.0
  %659 = vmatpush2.msra.mxu0 0.0
  %660 = vmatprep.subr.mxu0 0.0
  %661 = vmatpush2.msra.mxu0 0.0
  %662 = vmatprep.subr.mxu0 0.0
  %663 = vmatpush2.msra.mxu0 0.0
  %664 = vmatprep.subr.mxu0 0.0
  %665 = vmatpush2.msra.mxu0 0.0
  %666 = vmatprep.subr.mxu0 0.0
  %667 = vmatpush2.msra.mxu0 0.0
  %668 = vmatprep.subr.mxu0 0.0
  %669 = vmatpush2.msra.mxu0 0.0
  %670 = vmatprep.subr.mxu0 0.0
  %671 = vmatpush2.msra.mxu0 0.0
  %672 = vmatprep.subr.mxu0 0.0
  %673 = vmatpush2.msra.mxu0 0.0
  %674 = vmatprep.subr.mxu0 0.0
  %675 = vmatpush2.msra.mxu0 0.0
  %676 = vmatprep.subr.mxu0 0.0
  %677 = vmatpush2.msra.mxu0 0.0
  %678 = vmatprep.subr.mxu0 0.0
  %679 = vmatpush2.msra.mxu0 0.0
  %680 = vmatprep.subr.mxu0 0.0
  %681 = vmatpush2.msra.mxu0 0.0
  %682 = vmatprep.subr.mxu0 0.0
  %683 = vmatpush2.msra.mxu0 0.0
  %684 = vmatprep.subr.mxu0 0.0
  %685 = vmatpush2.msra.mxu0 0.0
  %686 = vmatprep.subr.mxu0 0.0
  %687 = vmatpush2.msra.mxu0 0.0
  %688 = vmatprep.mubr.f32.mxu0 0.0
  %689 = vmatmul.mubr.f32.gmra.mxu0 %v515
  %v690 = vpop.f32.mrf.mxu0
  %v691 = vadd.f32 0.0, %v690
  %v692 = vpop.f32.mrf.mxu0
  %693 = vdwg.mxu0
  %v694 = vadd.f32 %v623, %v691
  %v695 = vxor.u32 %v694, 2147483648
  %v696 = vmul.f32 %v695, 1.442695
  %v697 = vpow.pop %v696
  %v698 = vadd.f32 %v697, 1.0
  %v699 = vrcp.pop %v698
  %v700 = vmul.f32 1.0, %v699
  %v701 = vtanh.pop %v694
  %v702 = vmul.f32 %v700, %v433
  %704 = vrot.lane.b32.xlu0 %v701, 104
  %v705 = vpop.permute.xlu0 %704
  %v707 = vmul.f32 %v700, %v705
  %709 = vrot.lane.b32.xlu0 %v707, 8
  %v710 = vpop.permute.xlu0 %709
  %v712 = vadd.f32 %v702, %v710
  %v713 = vtanh.pop %v712
  %715 = vrot.lane.b32.xlu0 %v713, 8
  %v716 = vpop.permute.xlu0 %715
  %v718 = vmul.f32 %v700, %v716
  %719 = vrot.lane.b32.xlu0 %v611, 120
  %v720 = vpop.permute.xlu0 %719
  %v721 = vsel %vm151, %v720, 0
  %723 = vmatprep.subr.mxu0 0.0
  %724 = vmatpush1.msra.mxu0 0.0
  %725 = vmatprep.subr.mxu0 0.0
  %726 = vmatpush1.msra.mxu0 0.0
  %727 = vmatprep.subr.mxu0 0.0
  %728 = vmatpush1.msra.mxu0 0.0
  %729 = vmatprep.subr.mxu0 0.0
  %730 = vmatpush1.msra.mxu0 0.0
  %731 = vmatprep.subr.mxu0 0.0
  %732 = vmatpush1.msra.mxu0 0.0
  %733 = vmatprep.subr.mxu0 0.0
  %734 = vmatpush1.msra.mxu0 0.0
  %735 = vmatprep.subr.mxu0 0.0
  %736 = vmatpush1.msra.mxu0 0.0
  %737 = vmatprep.subr.mxu0 0.0
  %738 = vmatpush1.msra.mxu0 0.0
  %739 = vmatprep.subr.mxu0 0.0
  %740 = vmatpush1.msra.mxu0 0.0
  %741 = vmatprep.subr.mxu0 0.0
  %742 = vmatpush1.msra.mxu0 0.0
  %743 = vmatprep.subr.mxu0 0.0
  %744 = vmatpush1.msra.mxu0 0.0
  %745 = vmatprep.subr.mxu0 0.0
  %746 = vmatpush1.msra.mxu0 0.0
  %747 = vmatprep.subr.mxu0 0.0
  %748 = vmatpush1.msra.mxu0 0.0
  %749 = vmatprep.subr.mxu0 0.0
  %750 = vmatpush1.msra.mxu0 0.0
  %751 = vmatprep.subr.mxu0 0.0
  %752 = vmatpush1.msra.mxu0 0.0
  %753 = vmatprep.subr.mxu0 0.0
  %754 = vmatpush1.msra.mxu0 %v156
  %755 = vmatprep.subr.mxu0 0.0
  %756 = vmatpush2.msra.mxu0 0.0
  %757 = vmatprep.subr.mxu0 0.0
  %758 = vmatpush2.msra.mxu0 0.0
  %759 = vmatprep.subr.mxu0 0.0
  %760 = vmatpush2.msra.mxu0 0.0
  %761 = vmatprep.subr.mxu0 0.0
  %762 = vmatpush2.msra.mxu0 0.0
  %763 = vmatprep.subr.mxu0 0.0
  %764 = vmatpush2.msra.mxu0 0.0
  %765 = vmatprep.subr.mxu0 0.0
  %766 = vmatpush2.msra.mxu0 0.0
  %767 = vmatprep.subr.mxu0 0.0
  %768 = vmatpush2.msra.mxu0 0.0
  %769 = vmatprep.subr.mxu0 0.0
  %770 = vmatpush2.msra.mxu0 0.0
  %771 = vmatprep.subr.mxu0 0.0
  %772 = vmatpush2.msra.mxu0 0.0
  %773 = vmatprep.subr.mxu0 0.0
  %774 = vmatpush2.msra.mxu0 0.0
  %775 = vmatprep.subr.mxu0 0.0
  %776 = vmatpush2.msra.mxu0 0.0
  %777 = vmatprep.subr.mxu0 0.0
  %778 = vmatpush2.msra.mxu0 0.0
  %779 = vmatprep.subr.mxu0 0.0
  %780 = vmatpush2.msra.mxu0 0.0
  %781 = vmatprep.subr.mxu0 0.0
  %782 = vmatpush2.msra.mxu0 0.0
  %783 = vmatprep.subr.mxu0 0.0
  %784 = vmatpush2.msra.mxu0 0.0
  %785 = vmatprep.subr.mxu0 0.0
  %786 = vmatpush2.msra.mxu0 0.0
  %787 = vmatprep.mubr.f32.mxu0 0.0
  %788 = vmatmul.mubr.f32.gmra.mxu0 %v721
  %v789 = vpop.f32.mrf.mxu0
  %v790 = vadd.f32 0.0, %v789
  %v791 = vpop.f32.mrf.mxu0
  %792 = vdwg.mxu0
  %794 = vrot.lane.b32.xlu0 %v718, 112
  %v795 = vpop.permute.xlu0 %794
  %v796 = vsel %vm52, %v795, 0
  %798 = vmatprep.subr.mxu0 0.0
  %799 = vmatpush1.msra.mxu0 0.0
  %800 = vmatprep.subr.mxu0 0.0
  %801 = vmatpush1.msra.mxu0 0.0
  %802 = vmatprep.subr.mxu0 0.0
  %803 = vmatpush1.msra.mxu0 0.0
  %804 = vmatprep.subr.mxu0 0.0
  %805 = vmatpush1.msra.mxu0 0.0
  %806 = vmatprep.subr.mxu0 0.0
  %807 = vmatpush1.msra.mxu0 0.0
  %808 = vmatprep.subr.mxu0 0.0
  %809 = vmatpush1.msra.mxu0 0.0
  %810 = vmatprep.subr.mxu0 0.0
  %811 = vmatpush1.msra.mxu0 0.0
  %812 = vmatprep.subr.mxu0 0.0
  %813 = vmatpush1.msra.mxu0 0.0
  %814 = vmatprep.subr.mxu0 0.0
  %815 = vmatpush1.msra.mxu0 0.0
  %816 = vmatprep.subr.mxu0 0.0
  %817 = vmatpush1.msra.mxu0 0.0
  %818 = vmatprep.subr.mxu0 0.0
  %819 = vmatpush1.msra.mxu0 0.0
  %820 = vmatprep.subr.mxu0 0.0
  %821 = vmatpush1.msra.mxu0 0.0
  %822 = vmatprep.subr.mxu0 0.0
  %823 = vmatpush1.msra.mxu0 0.0
  %824 = vmatprep.subr.mxu0 0.0
  %825 = vmatpush1.msra.mxu0 0.0
  %826 = vmatprep.subr.mxu0 0.0
  %827 = vmatpush1.msra.mxu0 0.0
  %828 = vmatprep.subr.mxu0 0.0
  %829 = vmatpush1.msra.mxu0 %v30
  %830 = vmatprep.subr.mxu0 0.0
  %831 = vmatpush2.msra.mxu0 0.0
  %832 = vmatprep.subr.mxu0 0.0
  %833 = vmatpush2.msra.mxu0 0.0
  %834 = vmatprep.subr.mxu0 0.0
  %835 = vmatpush2.msra.mxu0 0.0
  %836 = vmatprep.subr.mxu0 0.0
  %837 = vmatpush2.msra.mxu0 0.0
  %838 = vmatprep.subr.mxu0 0.0
  %839 = vmatpush2.msra.mxu0 0.0
  %840 = vmatprep.subr.mxu0 0.0
  %841 = vmatpush2.msra.mxu0 0.0
  %842 = vmatprep.subr.mxu0 0.0
  %843 = vmatpush2.msra.mxu0 0.0
  %844 = vmatprep.subr.mxu0 0.0
  %845 = vmatpush2.msra.mxu0 0.0
  %846 = vmatprep.subr.mxu0 0.0
  %847 = vmatpush2.msra.mxu0 0.0
  %848 = vmatprep.subr.mxu0 0.0
  %849 = vmatpush2.msra.mxu0 0.0
  %850 = vmatprep.subr.mxu0 0.0
  %851 = vmatpush2.msra.mxu0 0.0
  %852 = vmatprep.subr.mxu0 0.0
  %853 = vmatpush2.msra.mxu0 0.0
  %854 = vmatprep.subr.mxu0 0.0
  %855 = vmatpush2.msra.mxu0 0.0
  %856 = vmatprep.subr.mxu0 0.0
  %857 = vmatpush2.msra.mxu0 0.0
  %858 = vmatprep.subr.mxu0 0.0
  %859 = vmatpush2.msra.mxu0 0.0
  %860 = vmatprep.subr.mxu0 0.0
  %861 = vmatpush2.msra.mxu0 0.0
  %862 = vmatprep.mubr.f32.mxu0 0.0
  %863 = vmatmul.mubr.f32.gmra.mxu0 %v796
  %v864 = vpop.f32.mrf.mxu0
  %v865 = vadd.f32 %v790, %v864
  %v866 = vpop.f32.mrf.mxu0
  %867 = vdwg.mxu0
  %v868 = vadd.f32 %v865, %v307
  %v869 = vxor.u32 %v868, 2147483648
  %v870 = vmul.f32 %v869, 1.442695
  %v871 = vpow.pop %v870
  %v872 = vadd.f32 %v871, 1.0
  %v873 = vrcp.pop %v872
  %v874 = vmul.f32 1.0, %v873
  %v875 = vtanh.pop %v868
  %v876 = vmul.f32 %v874, %v605
  %878 = vrot.lane.b32.xlu0 %v875, 116
  %v879 = vpop.permute.xlu0 %878
  %v881 = vmul.f32 %v874, %v879
  %883 = vrot.lane.b32.xlu0 %v881, 4
  %v884 = vpop.permute.xlu0 %883
  %v886 = vadd.f32 %v876, %v884
  %v887 = vtanh.pop %v886
  %889 = vrot.lane.b32.xlu0 %v887, 4
  %v890 = vpop.permute.xlu0 %889
  %v892 = vmul.f32 %v874, %v890
  %vm893 = vcmask 97344
  %894 = vst.msk [vmem:[%s7] sm:$0xff] %vm893, %v892
  %895 = vset.pattern.permute.xlu0 3
  %896 = vperm.xlu0 %895, %v26
  %v897 = vpop.permute.xlu0 %896
  %v899 = vmul.f32 %v897, %v42
  %v900 = vadd.f32 %v899, %v49
  %901 = vmatprep.subr.mxu0 0.0
  %902 = vmatpush1.msra.mxu0 0.0
  %903 = vmatprep.subr.mxu0 0.0
  %904 = vmatpush1.msra.mxu0 0.0
  %905 = vmatprep.subr.mxu0 0.0
  %906 = vmatpush1.msra.mxu0 0.0
  %907 = vmatprep.subr.mxu0 0.0
  %908 = vmatpush1.msra.mxu0 0.0
  %909 = vmatprep.subr.mxu0 0.0
  %910 = vmatpush1.msra.mxu0 0.0
  %911 = vmatprep.subr.mxu0 0.0
  %912 = vmatpush1.msra.mxu0 0.0
  %913 = vmatprep.subr.mxu0 0.0
  %914 = vmatpush1.msra.mxu0 0.0
  %915 = vmatprep.subr.mxu0 0.0
  %916 = vmatpush1.msra.mxu0 0.0
  %917 = vmatprep.subr.mxu0 0.0
  %918 = vmatpush1.msra.mxu0 0.0
  %919 = vmatprep.subr.mxu0 0.0
  %920 = vmatpush1.msra.mxu0 0.0
  %921 = vmatprep.subr.mxu0 0.0
  %922 = vmatpush1.msra.mxu0 0.0
  %923 = vmatprep.subr.mxu0 0.0
  %924 = vmatpush1.msra.mxu0 0.0
  %925 = vmatprep.subr.mxu0 0.0
  %926 = vmatpush1.msra.mxu0 0.0
  %927 = vmatprep.subr.mxu0 0.0
  %928 = vmatpush1.msra.mxu0 0.0
  %929 = vmatprep.subr.mxu0 0.0
  %930 = vmatpush1.msra.mxu0 0.0
  %931 = vmatprep.subr.mxu0 0.0
  %932 = vmatpush1.msra.mxu0 %v28
  %933 = vmatprep.subr.mxu0 0.0
  %934 = vmatpush2.msra.mxu0 0.0
  %935 = vmatprep.subr.mxu0 0.0
  %936 = vmatpush2.msra.mxu0 0.0
  %937 = vmatprep.subr.mxu0 0.0
  %938 = vmatpush2.msra.mxu0 0.0
  %939 = vmatprep.subr.mxu0 0.0
  %940 = vmatpush2.msra.mxu0 0.0
  %941 = vmatprep.subr.mxu0 0.0
  %942 = vmatpush2.msra.mxu0 0.0
  %943 = vmatprep.subr.mxu0 0.0
  %944 = vmatpush2.msra.mxu0 0.0
  %945 = vmatprep.subr.mxu0 0.0
  %946 = vmatpush2.msra.mxu0 0.0
  %947 = vmatprep.subr.mxu0 0.0
  %948 = vmatpush2.msra.mxu0 0.0
  %949 = vmatprep.subr.mxu0 0.0
  %950 = vmatpush2.msra.mxu0 0.0
  %951 = vmatprep.subr.mxu0 0.0
  %952 = vmatpush2.msra.mxu0 0.0
  %953 = vmatprep.subr.mxu0 0.0
  %954 = vmatpush2.msra.mxu0 0.0
  %955 = vmatprep.subr.mxu0 0.0
  %956 = vmatpush2.msra.mxu0 0.0
  %957 = vmatprep.subr.mxu0 0.0
  %958 = vmatpush2.msra.mxu0 0.0
  %959 = vmatprep.subr.mxu0 0.0
  %960 = vmatpush2.msra.mxu0 0.0
  %961 = vmatprep.subr.mxu0 0.0
  %962 = vmatpush2.msra.mxu0 0.0
  %963 = vmatprep.subr.mxu0 0.0
  %964 = vmatpush2.msra.mxu0 0.0
  %965 = vmatprep.mubr.f32.mxu0 0.0
  %966 = vmatmul.mubr.f32.gmra.mxu0 %v796
  %v967 = vpop.f32.mrf.mxu0
  %v968 = vadd.f32 0.0, %v967
  %v969 = vpop.f32.mrf.mxu0
  %970 = vdwg.mxu0
  %v971 = vadd.f32 %v900, %v968
  %v972 = vxor.u32 %v971, 2147483648
  %v973 = vmul.f32 %v972, 1.442695
  %v974 = vpow.pop %v973
  %v975 = vadd.f32 %v974, 1.0
  %v976 = vrcp.pop %v975
  %v977 = vmul.f32 1.0, %v976
  %v978 = vtanh.pop %v971
  %v979 = vmul.f32 %v977, %v712
  %981 = vrot.lane.b32.xlu0 %v978, 104
  %v982 = vpop.permute.xlu0 %981
  %v984 = vmul.f32 %v977, %v982
  %986 = vrot.lane.b32.xlu0 %v984, 8
  %v987 = vpop.permute.xlu0 %986
  %v989 = vadd.f32 %v979, %v987
  %v990 = vtanh.pop %v989
  %992 = vrot.lane.b32.xlu0 %v990, 8
  %v993 = vpop.permute.xlu0 %992
  %v995 = vmul.f32 %v977, %v993
  %997 = vrot.lane.b32.xlu0 %v892, 120
  %v998 = vpop.permute.xlu0 %997
  %v999 = vsel %vm151, %v998, 0
  %1001 = vmatprep.subr.mxu0 0.0
  %1002 = vmatpush1.msra.mxu0 0.0
  %1003 = vmatprep.subr.mxu0 0.0
  %1004 = vmatpush1.msra.mxu0 0.0
  %1005 = vmatprep.subr.mxu0 0.0
  %1006 = vmatpush1.msra.mxu0 0.0
  %1007 = vmatprep.subr.mxu0 0.0
  %1008 = vmatpush1.msra.mxu0 0.0
  %1009 = vmatprep.subr.mxu0 0.0
  %1010 = vmatpush1.msra.mxu0 0.0
  %1011 = vmatprep.subr.mxu0 0.0
  %1012 = vmatpush1.msra.mxu0 0.0
  %1013 = vmatprep.subr.mxu0 0.0
  %1014 = vmatpush1.msra.mxu0 0.0
  %1015 = vmatprep.subr.mxu0 0.0
  %1016 = vmatpush1.msra.mxu0 0.0
  %1017 = vmatprep.subr.mxu0 0.0
  %1018 = vmatpush1.msra.mxu0 0.0
  %1019 = vmatprep.subr.mxu0 0.0
  %1020 = vmatpush1.msra.mxu0 0.0
  %1021 = vmatprep.subr.mxu0 0.0
  %1022 = vmatpush1.msra.mxu0 0.0
  %1023 = vmatprep.subr.mxu0 0.0
  %1024 = vmatpush1.msra.mxu0 0.0
  %1025 = vmatprep.subr.mxu0 0.0
  %1026 = vmatpush1.msra.mxu0 0.0
  %1027 = vmatprep.subr.mxu0 0.0
  %1028 = vmatpush1.msra.mxu0 0.0
  %1029 = vmatprep.subr.mxu0 0.0
  %1030 = vmatpush1.msra.mxu0 0.0
  %1031 = vmatprep.subr.mxu0 0.0
  %1032 = vmatpush1.msra.mxu0 %v156
  %1033 = vmatprep.subr.mxu0 0.0
  %1034 = vmatpush2.msra.mxu0 0.0
  %1035 = vmatprep.subr.mxu0 0.0
  %1036 = vmatpush2.msra.mxu0 0.0
  %1037 = vmatprep.subr.mxu0 0.0
  %1038 = vmatpush2.msra.mxu0 0.0
  %1039 = vmatprep.subr.mxu0 0.0
  %1040 = vmatpush2.msra.mxu0 0.0
  %1041 = vmatprep.subr.mxu0 0.0
  %1042 = vmatpush2.msra.mxu0 0.0
  %1043 = vmatprep.subr.mxu0 0.0
  %1044 = vmatpush2.msra.mxu0 0.0
  %1045 = vmatprep.subr.mxu0 0.0
  %1046 = vmatpush2.msra.mxu0 0.0
  %1047 = vmatprep.subr.mxu0 0.0
  %1048 = vmatpush2.msra.mxu0 0.0
  %1049 = vmatprep.subr.mxu0 0.0
  %1050 = vmatpush2.msra.mxu0 0.0
  %1051 = vmatprep.subr.mxu0 0.0
  %1052 = vmatpush2.msra.mxu0 0.0
  %1053 = vmatprep.subr.mxu0 0.0
  %1054 = vmatpush2.msra.mxu0 0.0
  %1055 = vmatprep.subr.mxu0 0.0
  %1056 = vmatpush2.msra.mxu0 0.0
  %1057 = vmatprep.subr.mxu0 0.0
  %1058 = vmatpush2.msra.mxu0 0.0
  %1059 = vmatprep.subr.mxu0 0.0
  %1060 = vmatpush2.msra.mxu0 0.0
  %1061 = vmatprep.subr.mxu0 0.0
  %1062 = vmatpush2.msra.mxu0 0.0
  %1063 = vmatprep.subr.mxu0 0.0
  %1064 = vmatpush2.msra.mxu0 0.0
  %1065 = vmatprep.mubr.f32.mxu0 0.0
  %1066 = vmatmul.mubr.f32.gmra.mxu0 %v999
  %v1067 = vpop.f32.mrf.mxu0
  %v1068 = vadd.f32 0.0, %v1067
  %v1069 = vpop.f32.mrf.mxu0
  %1070 = vdwg.mxu0
  %1072 = vrot.lane.b32.xlu0 %v995, 112
  %v1073 = vpop.permute.xlu0 %1072
  %v1074 = vsel %vm52, %v1073, 0
  %1076 = vmatprep.subr.mxu0 0.0
  %1077 = vmatpush1.msra.mxu0 0.0
  %1078 = vmatprep.subr.mxu0 0.0
  %1079 = vmatpush1.msra.mxu0 0.0
  %1080 = vmatprep.subr.mxu0 0.0
  %1081 = vmatpush1.msra.mxu0 0.0
  %1082 = vmatprep.subr.mxu0 0.0
  %1083 = vmatpush1.msra.mxu0 0.0
  %1084 = vmatprep.subr.mxu0 0.0
  %1085 = vmatpush1.msra.mxu0 0.0
  %1086 = vmatprep.subr.mxu0 0.0
  %1087 = vmatpush1.msra.mxu0 0.0
  %1088 = vmatprep.subr.mxu0 0.0
  %1089 = vmatpush1.msra.mxu0 0.0
  %1090 = vmatprep.subr.mxu0 0.0
  %1091 = vmatpush1.msra.mxu0 0.0
  %1092 = vmatprep.subr.mxu0 0.0
  %1093 = vmatpush1.msra.mxu0 0.0
  %1094 = vmatprep.subr.mxu0 0.0
  %1095 = vmatpush1.msra.mxu0 0.0
  %1096 = vmatprep.subr.mxu0 0.0
  %1097 = vmatpush1.msra.mxu0 0.0
  %1098 = vmatprep.subr.mxu0 0.0
  %1099 = vmatpush1.msra.mxu0 0.0
  %1100 = vmatprep.subr.mxu0 0.0
  %1101 = vmatpush1.msra.mxu0 0.0
  %1102 = vmatprep.subr.mxu0 0.0
  %1103 = vmatpush1.msra.mxu0 0.0
  %1104 = vmatprep.subr.mxu0 0.0
  %1105 = vmatpush1.msra.mxu0 0.0
  %1106 = vmatprep.subr.mxu0 0.0
  %1107 = vmatpush1.msra.mxu0 %v30
  %1108 = vmatprep.subr.mxu0 0.0
  %1109 = vmatpush2.msra.mxu0 0.0
  %1110 = vmatprep.subr.mxu0 0.0
  %1111 = vmatpush2.msra.mxu0 0.0
  %1112 = vmatprep.subr.mxu0 0.0
  %1113 = vmatpush2.msra.mxu0 0.0
  %1114 = vmatprep.subr.mxu0 0.0
  %1115 = vmatpush2.msra.mxu0 0.0
  %1116 = vmatprep.subr.mxu0 0.0
  %1117 = vmatpush2.msra.mxu0 0.0
  %1118 = vmatprep.subr.mxu0 0.0
  %1119 = vmatpush2.msra.mxu0 0.0
  %1120 = vmatprep.subr.mxu0 0.0
  %1121 = vmatpush2.msra.mxu0 0.0
  %1122 = vmatprep.subr.mxu0 0.0
  %1123 = vmatpush2.msra.mxu0 0.0
  %1124 = vmatprep.subr.mxu0 0.0
  %1125 = vmatpush2.msra.mxu0 0.0
  %1126 = vmatprep.subr.mxu0 0.0
  %1127 = vmatpush2.msra.mxu0 0.0
  %1128 = vmatprep.subr.mxu0 0.0
  %1129 = vmatpush2.msra.mxu0 0.0
  %1130 = vmatprep.subr.mxu0 0.0
  %1131 = vmatpush2.msra.mxu0 0.0
  %1132 = vmatprep.subr.mxu0 0.0
  %1133 = vmatpush2.msra.mxu0 0.0
  %1134 = vmatprep.subr.mxu0 0.0
  %1135 = vmatpush2.msra.mxu0 0.0
  %1136 = vmatprep.subr.mxu0 0.0
  %1137 = vmatpush2.msra.mxu0 0.0
  %1138 = vmatprep.subr.mxu0 0.0
  %1139 = vmatpush2.msra.mxu0 0.0
  %1140 = vmatprep.mubr.f32.mxu0 0.0
  %1141 = vmatmul.mubr.f32.gmra.mxu0 %v1074
  %v1142 = vpop.f32.mrf.mxu0
  %v1143 = vadd.f32 %v1068, %v1142
  %v1144 = vpop.f32.mrf.mxu0
  %1145 = vdwg.mxu0
  %v1146 = vadd.f32 %v1143, %v307
  %v1147 = vxor.u32 %v1146, 2147483648
  %v1148 = vmul.f32 %v1147, 1.442695
  %v1149 = vpow.pop %v1148
  %v1150 = vadd.f32 %v1149, 1.0
  %v1151 = vrcp.pop %v1150
  %v1152 = vmul.f32 1.0, %v1151
  %v1153 = vtanh.pop %v1146
  %v1154 = vmul.f32 %v1152, %v886
  %1156 = vrot.lane.b32.xlu0 %v1153, 116
  %v1157 = vpop.permute.xlu0 %1156
  %v1159 = vmul.f32 %v1152, %v1157
  %1161 = vrot.lane.b32.xlu0 %v1159, 4
  %v1162 = vpop.permute.xlu0 %1161
  %v1164 = vadd.f32 %v1154, %v1162
  %v1165 = vtanh.pop %v1164
  %1167 = vrot.lane.b32.xlu0 %v1165, 4
  %v1168 = vpop.permute.xlu0 %1167
  %v1170 = vmul.f32 %v1152, %v1168
  %1172 = vrot.lane.b32.xlu0 %v1170, 4
  %v1173 = vpop.permute.xlu0 %1172
  %vm1175 = vcmask 130144
  %1176 = vst.msk [vmem:[%s7] sm:$0xff] %vm1175, %v1173
  %1177 = vset.pattern.permute.xlu0 4
  %1178 = vperm.xlu0 %1177, %v26
  %v1179 = vpop.permute.xlu0 %1178
  %v1181 = vmul.f32 %v1179, %v42
  %v1182 = vadd.f32 %v1181, %v49
  %1183 = vmatprep.subr.mxu0 0.0
  %1184 = vmatpush1.msra.mxu0 0.0
  %1185 = vmatprep.subr.mxu0 0.0
  %1186 = vmatpush1.msra.mxu0 0.0
  %1187 = vmatprep.subr.mxu0 0.0
  %1188 = vmatpush1.msra.mxu0 0.0
  %1189 = vmatprep.subr.mxu0 0.0
  %1190 = vmatpush1.msra.mxu0 0.0
  %1191 = vmatprep.subr.mxu0 0.0
  %1192 = vmatpush1.msra.mxu0 0.0
  %1193 = vmatprep.subr.mxu0 0.0
  %1194 = vmatpush1.msra.mxu0 0.0
  %1195 = vmatprep.subr.mxu0 0.0
  %1196 = vmatpush1.msra.mxu0 0.0
  %1197 = vmatprep.subr.mxu0 0.0
  %1198 = vmatpush1.msra.mxu0 0.0
  %1199 = vmatprep.subr.mxu0 0.0
  %1200 = vmatpush1.msra.mxu0 0.0
  %1201 = vmatprep.subr.mxu0 0.0
  %1202 = vmatpush1.msra.mxu0 0.0
  %1203 = vmatprep.subr.mxu0 0.0
  %1204 = vmatpush1.msra.mxu0 0.0
  %1205 = vmatprep.subr.mxu0 0.0
  %1206 = vmatpush1.msra.mxu0 0.0
  %1207 = vmatprep.subr.mxu0 0.0
  %1208 = vmatpush1.msra.mxu0 0.0
  %1209 = vmatprep.subr.mxu0 0.0
  %1210 = vmatpush1.msra.mxu0 0.0
  %1211 = vmatprep.subr.mxu0 0.0
  %1212 = vmatpush1.msra.mxu0 0.0
  %1213 = vmatprep.subr.mxu0 0.0
  %1214 = vmatpush1.msra.mxu0 %v28
  %1215 = vmatprep.subr.mxu0 0.0
  %1216 = vmatpush2.msra.mxu0 0.0
  %1217 = vmatprep.subr.mxu0 0.0
  %1218 = vmatpush2.msra.mxu0 0.0
  %1219 = vmatprep.subr.mxu0 0.0
  %1220 = vmatpush2.msra.mxu0 0.0
  %1221 = vmatprep.subr.mxu0 0.0
  %1222 = vmatpush2.msra.mxu0 0.0
  %1223 = vmatprep.subr.mxu0 0.0
  %1224 = vmatpush2.msra.mxu0 0.0
  %1225 = vmatprep.subr.mxu0 0.0
  %1226 = vmatpush2.msra.mxu0 0.0
  %1227 = vmatprep.subr.mxu0 0.0
  %1228 = vmatpush2.msra.mxu0 0.0
  %1229 = vmatprep.subr.mxu0 0.0
  %1230 = vmatpush2.msra.mxu0 0.0
  %1231 = vmatprep.subr.mxu0 0.0
  %1232 = vmatpush2.msra.mxu0 0.0
  %1233 = vmatprep.subr.mxu0 0.0
  %1234 = vmatpush2.msra.mxu0 0.0
  %1235 = vmatprep.subr.mxu0 0.0
  %1236 = vmatpush2.msra.mxu0 0.0
  %1237 = vmatprep.subr.mxu0 0.0
  %1238 = vmatpush2.msra.mxu0 0.0
  %1239 = vmatprep.subr.mxu0 0.0
  %1240 = vmatpush2.msra.mxu0 0.0
  %1241 = vmatprep.subr.mxu0 0.0
  %1242 = vmatpush2.msra.mxu0 0.0
  %1243 = vmatprep.subr.mxu0 0.0
  %1244 = vmatpush2.msra.mxu0 0.0
  %1245 = vmatprep.subr.mxu0 0.0
  %1246 = vmatpush2.msra.mxu0 0.0
  %1247 = vmatprep.mubr.f32.mxu0 0.0
  %1248 = vmatmul.mubr.f32.gmra.mxu0 %v1074
  %v1249 = vpop.f32.mrf.mxu0
  %v1250 = vadd.f32 0.0, %v1249
  %v1251 = vpop.f32.mrf.mxu0
  %1252 = vdwg.mxu0
  %v1253 = vadd.f32 %v1182, %v1250
  %v1254 = vxor.u32 %v1253, 2147483648
  %v1255 = vmul.f32 %v1254, 1.442695
  %v1256 = vpow.pop %v1255
  %v1257 = vadd.f32 %v1256, 1.0
  %v1258 = vrcp.pop %v1257
  %v1259 = vmul.f32 1.0, %v1258
  %v1260 = vtanh.pop %v1253
  %v1261 = vmul.f32 %v1259, %v989
  %1263 = vrot.lane.b32.xlu0 %v1260, 104
  %v1264 = vpop.permute.xlu0 %1263
  %v1266 = vmul.f32 %v1259, %v1264
  %1268 = vrot.lane.b32.xlu0 %v1266, 8
  %v1269 = vpop.permute.xlu0 %1268
  %v1271 = vadd.f32 %v1261, %v1269
  %v1272 = vtanh.pop %v1271
  %1274 = vrot.lane.b32.xlu0 %v1272, 8
  %v1275 = vpop.permute.xlu0 %1274
  %v1277 = vmul.f32 %v1259, %v1275
  %1278 = vrot.lane.b32.xlu0 %v1170, 120
  %v1279 = vpop.permute.xlu0 %1278
  %v1280 = vsel %vm151, %v1279, 0
  %1282 = vmatprep.subr.mxu0 0.0
  %1283 = vmatpush1.msra.mxu0 0.0
  %1284 = vmatprep.subr.mxu0 0.0
  %1285 = vmatpush1.msra.mxu0 0.0
  %1286 = vmatprep.subr.mxu0 0.0
  %1287 = vmatpush1.msra.mxu0 0.0
  %1288 = vmatprep.subr.mxu0 0.0
  %1289 = vmatpush1.msra.mxu0 0.0
  %1290 = vmatprep.subr.mxu0 0.0
  %1291 = vmatpush1.msra.mxu0 0.0
  %1292 = vmatprep.subr.mxu0 0.0
  %1293 = vmatpush1.msra.mxu0 0.0
  %1294 = vmatprep.subr.mxu0 0.0
  %1295 = vmatpush1.msra.mxu0 0.0
  %1296 = vmatprep.subr.mxu0 0.0
  %1297 = vmatpush1.msra.mxu0 0.0
  %1298 = vmatprep.subr.mxu0 0.0
  %1299 = vmatpush1.msra.mxu0 0.0
  %1300 = vmatprep.subr.mxu0 0.0
  %1301 = vmatpush1.msra.mxu0 0.0
  %1302 = vmatprep.subr.mxu0 0.0
  %1303 = vmatpush1.msra.mxu0 0.0
  %1304 = vmatprep.subr.mxu0 0.0
  %1305 = vmatpush1.msra.mxu0 0.0
  %1306 = vmatprep.subr.mxu0 0.0
  %1307 = vmatpush1.msra.mxu0 0.0
  %1308 = vmatprep.subr.mxu0 0.0
  %1309 = vmatpush1.msra.mxu0 0.0
  %1310 = vmatprep.subr.mxu0 0.0
  %1311 = vmatpush1.msra.mxu0 0.0
  %1312 = vmatprep.subr.mxu0 0.0
  %1313 = vmatpush1.msra.mxu0 %v156
  %1314 = vmatprep.subr.mxu0 0.0
  %1315 = vmatpush2.msra.mxu0 0.0
  %1316 = vmatprep.subr.mxu0 0.0
  %1317 = vmatpush2.msra.mxu0 0.0
  %1318 = vmatprep.subr.mxu0 0.0
  %1319 = vmatpush2.msra.mxu0 0.0
  %1320 = vmatprep.subr.mxu0 0.0
  %1321 = vmatpush2.msra.mxu0 0.0
  %1322 = vmatprep.subr.mxu0 0.0
  %1323 = vmatpush2.msra.mxu0 0.0
  %1324 = vmatprep.subr.mxu0 0.0
  %1325 = vmatpush2.msra.mxu0 0.0
  %1326 = vmatprep.subr.mxu0 0.0
  %1327 = vmatpush2.msra.mxu0 0.0
  %1328 = vmatprep.subr.mxu0 0.0
  %1329 = vmatpush2.msra.mxu0 0.0
  %1330 = vmatprep.subr.mxu0 0.0
  %1331 = vmatpush2.msra.mxu0 0.0
  %1332 = vmatprep.subr.mxu0 0.0
  %1333 = vmatpush2.msra.mxu0 0.0
  %1334 = vmatprep.subr.mxu0 0.0
  %1335 = vmatpush2.msra.mxu0 0.0
  %1336 = vmatprep.subr.mxu0 0.0
  %1337 = vmatpush2.msra.mxu0 0.0
  %1338 = vmatprep.subr.mxu0 0.0
  %1339 = vmatpush2.msra.mxu0 0.0
  %1340 = vmatprep.subr.mxu0 0.0
  %1341 = vmatpush2.msra.mxu0 0.0
  %1342 = vmatprep.subr.mxu0 0.0
  %1343 = vmatpush2.msra.mxu0 0.0
  %1344 = vmatprep.subr.mxu0 0.0
  %1345 = vmatpush2.msra.mxu0 0.0
  %1346 = vmatprep.mubr.f32.mxu0 0.0
  %1347 = vmatmul.mubr.f32.gmra.mxu0 %v1280
  %v1348 = vpop.f32.mrf.mxu0
  %v1349 = vadd.f32 0.0, %v1348
  %v1350 = vpop.f32.mrf.mxu0
  %1351 = vdwg.mxu0
  %1353 = vrot.lane.b32.xlu0 %v1277, 112
  %v1354 = vpop.permute.xlu0 %1353
  %v1355 = vsel %vm52, %v1354, 0
  %1357 = vmatprep.subr.mxu0 0.0
  %1358 = vmatpush1.msra.mxu0 0.0
  %1359 = vmatprep.subr.mxu0 0.0
  %1360 = vmatpush1.msra.mxu0 0.0
  %1361 = vmatprep.subr.mxu0 0.0
  %1362 = vmatpush1.msra.mxu0 0.0
  %1363 = vmatprep.subr.mxu0 0.0
  %1364 = vmatpush1.msra.mxu0 0.0
  %1365 = vmatprep.subr.mxu0 0.0
  %1366 = vmatpush1.msra.mxu0 0.0
  %1367 = vmatprep.subr.mxu0 0.0
  %1368 = vmatpush1.msra.mxu0 0.0
  %1369 = vmatprep.subr.mxu0 0.0
  %1370 = vmatpush1.msra.mxu0 0.0
  %1371 = vmatprep.subr.mxu0 0.0
  %1372 = vmatpush1.msra.mxu0 0.0
  %1373 = vmatprep.subr.mxu0 0.0
  %1374 = vmatpush1.msra.mxu0 0.0
  %1375 = vmatprep.subr.mxu0 0.0
  %1376 = vmatpush1.msra.mxu0 0.0
  %1377 = vmatprep.subr.mxu0 0.0
  %1378 = vmatpush1.msra.mxu0 0.0
  %1379 = vmatprep.subr.mxu0 0.0
  %1380 = vmatpush1.msra.mxu0 0.0
  %1381 = vmatprep.subr.mxu0 0.0
  %1382 = vmatpush1.msra.mxu0 0.0
  %1383 = vmatprep.subr.mxu0 0.0
  %1384 = vmatpush1.msra.mxu0 0.0
  %1385 = vmatprep.subr.mxu0 0.0
  %1386 = vmatpush1.msra.mxu0 0.0
  %1387 = vmatprep.subr.mxu0 0.0
  %1388 = vmatpush1.msra.mxu0 %v30
  %1389 = vmatprep.subr.mxu0 0.0
  %1390 = vmatpush2.msra.mxu0 0.0
  %1391 = vmatprep.subr.mxu0 0.0
  %1392 = vmatpush2.msra.mxu0 0.0
  %1393 = vmatprep.subr.mxu0 0.0
  %1394 = vmatpush2.msra.mxu0 0.0
  %1395 = vmatprep.subr.mxu0 0.0
  %1396 = vmatpush2.msra.mxu0 0.0
  %1397 = vmatprep.subr.mxu0 0.0
  %1398 = vmatpush2.msra.mxu0 0.0
  %1399 = vmatprep.subr.mxu0 0.0
  %1400 = vmatpush2.msra.mxu0 0.0
  %1401 = vmatprep.subr.mxu0 0.0
  %1402 = vmatpush2.msra.mxu0 0.0
  %1403 = vmatprep.subr.mxu0 0.0
  %1404 = vmatpush2.msra.mxu0 0.0
  %1405 = vmatprep.subr.mxu0 0.0
  %1406 = vmatpush2.msra.mxu0 0.0
  %1407 = vmatprep.subr.mxu0 0.0
  %1408 = vmatpush2.msra.mxu0 0.0
  %1409 = vmatprep.subr.mxu0 0.0
  %1410 = vmatpush2.msra.mxu0 0.0
  %1411 = vmatprep.subr.mxu0 0.0
  %1412 = vmatpush2.msra.mxu0 0.0
  %1413 = vmatprep.subr.mxu0 0.0
  %1414 = vmatpush2.msra.mxu0 0.0
  %1415 = vmatprep.subr.mxu0 0.0
  %1416 = vmatpush2.msra.mxu0 0.0
  %1417 = vmatprep.subr.mxu0 0.0
  %1418 = vmatpush2.msra.mxu0 0.0
  %1419 = vmatprep.subr.mxu0 0.0
  %1420 = vmatpush2.msra.mxu0 0.0
  %1421 = vmatprep.mubr.f32.mxu0 0.0
  %1422 = vmatmul.mubr.f32.gmra.mxu0 %v1355
  %v1423 = vpop.f32.mrf.mxu0
  %v1424 = vadd.f32 %v1349, %v1423
  %v1425 = vpop.f32.mrf.mxu0
  %1426 = vdwg.mxu0
  %v1427 = vadd.f32 %v1424, %v307
  %v1428 = vxor.u32 %v1427, 2147483648
  %v1429 = vmul.f32 %v1428, 1.442695
  %v1430 = vpow.pop %v1429
  %v1431 = vadd.f32 %v1430, 1.0
  %v1432 = vrcp.pop %v1431
  %v1433 = vmul.f32 1.0, %v1432
  %v1434 = vtanh.pop %v1427
  %v1435 = vmul.f32 %v1433, %v1164
  %1437 = vrot.lane.b32.xlu0 %v1434, 116
  %v1438 = vpop.permute.xlu0 %1437
  %v1440 = vmul.f32 %v1433, %v1438
  %1442 = vrot.lane.b32.xlu0 %v1440, 4
  %v1443 = vpop.permute.xlu0 %1442
  %v1445 = vadd.f32 %v1435, %v1443
  %v1446 = vtanh.pop %v1445
  %1448 = vrot.lane.b32.xlu0 %v1446, 4
  %v1449 = vpop.permute.xlu0 %1448
  %v1451 = vmul.f32 %v1433, %v1449
  %1453 = vrot.lane.b32.xlu0 %v1451, 8
  %v1454 = vpop.permute.xlu0 %1453
  %vm1456 = vcmask 162944
  %1457 = vst.msk [vmem:[%s7] sm:$0xff] %vm1456, %v1454
  %1458 = vset.pattern.permute.xlu0 5
  %1459 = vperm.xlu0 %1458, %v26
  %v1460 = vpop.permute.xlu0 %1459
  %v1462 = vmul.f32 %v1460, %v42
  %v1463 = vadd.f32 %v1462, %v49
  %1464 = vmatprep.subr.mxu0 0.0
  %1465 = vmatpush1.msra.mxu0 0.0
  %1466 = vmatprep.subr.mxu0 0.0
  %1467 = vmatpush1.msra.mxu0 0.0
  %1468 = vmatprep.subr.mxu0 0.0
  %1469 = vmatpush1.msra.mxu0 0.0
  %1470 = vmatprep.subr.mxu0 0.0
  %1471 = vmatpush1.msra.mxu0 0.0
  %1472 = vmatprep.subr.mxu0 0.0
  %1473 = vmatpush1.msra.mxu0 0.0
  %1474 = vmatprep.subr.mxu0 0.0
  %1475 = vmatpush1.msra.mxu0 0.0
  %1476 = vmatprep.subr.mxu0 0.0
  %1477 = vmatpush1.msra.mxu0 0.0
  %1478 = vmatprep.subr.mxu0 0.0
  %1479 = vmatpush1.msra.mxu0 0.0
  %1480 = vmatprep.subr.mxu0 0.0
  %1481 = vmatpush1.msra.mxu0 0.0
  %1482 = vmatprep.subr.mxu0 0.0
  %1483 = vmatpush1.msra.mxu0 0.0
  %1484 = vmatprep.subr.mxu0 0.0
  %1485 = vmatpush1.msra.mxu0 0.0
  %1486 = vmatprep.subr.mxu0 0.0
  %1487 = vmatpush1.msra.mxu0 0.0
  %1488 = vmatprep.subr.mxu0 0.0
  %1489 = vmatpush1.msra.mxu0 0.0
  %1490 = vmatprep.subr.mxu0 0.0
  %1491 = vmatpush1.msra.mxu0 0.0
  %1492 = vmatprep.subr.mxu0 0.0
  %1493 = vmatpush1.msra.mxu0 0.0
  %1494 = vmatprep.subr.mxu0 0.0
  %1495 = vmatpush1.msra.mxu0 %v28
  %1496 = vmatprep.subr.mxu0 0.0
  %1497 = vmatpush2.msra.mxu0 0.0
  %1498 = vmatprep.subr.mxu0 0.0
  %1499 = vmatpush2.msra.mxu0 0.0
  %1500 = vmatprep.subr.mxu0 0.0
  %1501 = vmatpush2.msra.mxu0 0.0
  %1502 = vmatprep.subr.mxu0 0.0
  %1503 = vmatpush2.msra.mxu0 0.0
  %1504 = vmatprep.subr.mxu0 0.0
  %1505 = vmatpush2.msra.mxu0 0.0
  %1506 = vmatprep.subr.mxu0 0.0
  %1507 = vmatpush2.msra.mxu0 0.0
  %1508 = vmatprep.subr.mxu0 0.0
  %1509 = vmatpush2.msra.mxu0 0.0
  %1510 = vmatprep.subr.mxu0 0.0
  %1511 = vmatpush2.msra.mxu0 0.0
  %1512 = vmatprep.subr.mxu0 0.0
  %1513 = vmatpush2.msra.mxu0 0.0
  %1514 = vmatprep.subr.mxu0 0.0
  %1515 = vmatpush2.msra.mxu0 0.0
  %1516 = vmatprep.subr.mxu0 0.0
  %1517 = vmatpush2.msra.mxu0 0.0
  %1518 = vmatprep.subr.mxu0 0.0
  %1519 = vmatpush2.msra.mxu0 0.0
  %1520 = vmatprep.subr.mxu0 0.0
  %1521 = vmatpush2.msra.mxu0 0.0
  %1522 = vmatprep.subr.mxu0 0.0
  %1523 = vmatpush2.msra.mxu0 0.0
  %1524 = vmatprep.subr.mxu0 0.0
  %1525 = vmatpush2.msra.mxu0 0.0
  %1526 = vmatprep.subr.mxu0 0.0
  %1527 = vmatpush2.msra.mxu0 0.0
  %1528 = vmatprep.mubr.f32.mxu0 0.0
  %1529 = vmatmul.mubr.f32.gmra.mxu0 %v1355
  %v1530 = vpop.f32.mrf.mxu0
  %v1531 = vadd.f32 0.0, %v1530
  %v1532 = vpop.f32.mrf.mxu0
  %1533 = vdwg.mxu0
  %v1534 = vadd.f32 %v1463, %v1531
  %v1535 = vxor.u32 %v1534, 2147483648
  %v1536 = vmul.f32 %v1535, 1.442695
  %v1537 = vpow.pop %v1536
  %v1538 = vadd.f32 %v1537, 1.0
  %v1539 = vrcp.pop %v1538
  %v1540 = vmul.f32 1.0, %v1539
  %v1541 = vtanh.pop %v1534
  %v1542 = vmul.f32 %v1540, %v1271
  %1544 = vrot.lane.b32.xlu0 %v1541, 104
  %v1545 = vpop.permute.xlu0 %1544
  %v1547 = vmul.f32 %v1540, %v1545
  %1549 = vrot.lane.b32.xlu0 %v1547, 8
  %v1550 = vpop.permute.xlu0 %1549
  %v1552 = vadd.f32 %v1542, %v1550
  %v1553 = vtanh.pop %v1552
  %1555 = vrot.lane.b32.xlu0 %v1553, 8
  %v1556 = vpop.permute.xlu0 %1555
  %v1558 = vmul.f32 %v1540, %v1556
  %1559 = vrot.lane.b32.xlu0 %v1451, 120
  %v1560 = vpop.permute.xlu0 %1559
  %v1561 = vsel %vm151, %v1560, 0
  %1563 = vmatprep.subr.mxu0 0.0
  %1564 = vmatpush1.msra.mxu0 0.0
  %1565 = vmatprep.subr.mxu0 0.0
  %1566 = vmatpush1.msra.mxu0 0.0
  %1567 = vmatprep.subr.mxu0 0.0
  %1568 = vmatpush1.msra.mxu0 0.0
  %1569 = vmatprep.subr.mxu0 0.0
  %1570 = vmatpush1.msra.mxu0 0.0
  %1571 = vmatprep.subr.mxu0 0.0
  %1572 = vmatpush1.msra.mxu0 0.0
  %1573 = vmatprep.subr.mxu0 0.0
  %1574 = vmatpush1.msra.mxu0 0.0
  %1575 = vmatprep.subr.mxu0 0.0
  %1576 = vmatpush1.msra.mxu0 0.0
  %1577 = vmatprep.subr.mxu0 0.0
  %1578 = vmatpush1.msra.mxu0 0.0
  %1579 = vmatprep.subr.mxu0 0.0
  %1580 = vmatpush1.msra.mxu0 0.0
  %1581 = vmatprep.subr.mxu0 0.0
  %1582 = vmatpush1.msra.mxu0 0.0
  %1583 = vmatprep.subr.mxu0 0.0
  %1584 = vmatpush1.msra.mxu0 0.0
  %1585 = vmatprep.subr.mxu0 0.0
  %1586 = vmatpush1.msra.mxu0 0.0
  %1587 = vmatprep.subr.mxu0 0.0
  %1588 = vmatpush1.msra.mxu0 0.0
  %1589 = vmatprep.subr.mxu0 0.0
  %1590 = vmatpush1.msra.mxu0 0.0
  %1591 = vmatprep.subr.mxu0 0.0
  %1592 = vmatpush1.msra.mxu0 0.0
  %1593 = vmatprep.subr.mxu0 0.0
  %1594 = vmatpush1.msra.mxu0 %v156
  %1595 = vmatprep.subr.mxu0 0.0
  %1596 = vmatpush2.msra.mxu0 0.0
  %1597 = vmatprep.subr.mxu0 0.0
  %1598 = vmatpush2.msra.mxu0 0.0
  %1599 = vmatprep.subr.mxu0 0.0
  %1600 = vmatpush2.msra.mxu0 0.0
  %1601 = vmatprep.subr.mxu0 0.0
  %1602 = vmatpush2.msra.mxu0 0.0
  %1603 = vmatprep.subr.mxu0 0.0
  %1604 = vmatpush2.msra.mxu0 0.0
  %1605 = vmatprep.subr.mxu0 0.0
  %1606 = vmatpush2.msra.mxu0 0.0
  %1607 = vmatprep.subr.mxu0 0.0
  %1608 = vmatpush2.msra.mxu0 0.0
  %1609 = vmatprep.subr.mxu0 0.0
  %1610 = vmatpush2.msra.mxu0 0.0
  %1611 = vmatprep.subr.mxu0 0.0
  %1612 = vmatpush2.msra.mxu0 0.0
  %1613 = vmatprep.subr.mxu0 0.0
  %1614 = vmatpush2.msra.mxu0 0.0
  %1615 = vmatprep.subr.mxu0 0.0
  %1616 = vmatpush2.msra.mxu0 0.0
  %1617 = vmatprep.subr.mxu0 0.0
  %1618 = vmatpush2.msra.mxu0 0.0
  %1619 = vmatprep.subr.mxu0 0.0
  %1620 = vmatpush2.msra.mxu0 0.0
  %1621 = vmatprep.subr.mxu0 0.0
  %1622 = vmatpush2.msra.mxu0 0.0
  %1623 = vmatprep.subr.mxu0 0.0
  %1624 = vmatpush2.msra.mxu0 0.0
  %1625 = vmatprep.subr.mxu0 0.0
  %1626 = vmatpush2.msra.mxu0 0.0
  %1627 = vmatprep.mubr.f32.mxu0 0.0
  %1628 = vmatmul.mubr.f32.gmra.mxu0 %v1561
  %v1629 = vpop.f32.mrf.mxu0
  %v1630 = vadd.f32 0.0, %v1629
  %v1631 = vpop.f32.mrf.mxu0
  %1632 = vdwg.mxu0
  %1634 = vrot.lane.b32.xlu0 %v1558, 112
  %v1635 = vpop.permute.xlu0 %1634
  %v1636 = vsel %vm52, %v1635, 0
  %1638 = vmatprep.subr.mxu0 0.0
  %1639 = vmatpush1.msra.mxu0 0.0
  %1640 = vmatprep.subr.mxu0 0.0
  %1641 = vmatpush1.msra.mxu0 0.0
  %1642 = vmatprep.subr.mxu0 0.0
  %1643 = vmatpush1.msra.mxu0 0.0
  %1644 = vmatprep.subr.mxu0 0.0
  %1645 = vmatpush1.msra.mxu0 0.0
  %1646 = vmatprep.subr.mxu0 0.0
  %1647 = vmatpush1.msra.mxu0 0.0
  %1648 = vmatprep.subr.mxu0 0.0
  %1649 = vmatpush1.msra.mxu0 0.0
  %1650 = vmatprep.subr.mxu0 0.0
  %1651 = vmatpush1.msra.mxu0 0.0
  %1652 = vmatprep.subr.mxu0 0.0
  %1653 = vmatpush1.msra.mxu0 0.0
  %1654 = vmatprep.subr.mxu0 0.0
  %1655 = vmatpush1.msra.mxu0 0.0
  %1656 = vmatprep.subr.mxu0 0.0
  %1657 = vmatpush1.msra.mxu0 0.0
  %1658 = vmatprep.subr.mxu0 0.0
  %1659 = vmatpush1.msra.mxu0 0.0
  %1660 = vmatprep.subr.mxu0 0.0
  %1661 = vmatpush1.msra.mxu0 0.0
  %1662 = vmatprep.subr.mxu0 0.0
  %1663 = vmatpush1.msra.mxu0 0.0
  %1664 = vmatprep.subr.mxu0 0.0
  %1665 = vmatpush1.msra.mxu0 0.0
  %1666 = vmatprep.subr.mxu0 0.0
  %1667 = vmatpush1.msra.mxu0 0.0
  %1668 = vmatprep.subr.mxu0 0.0
  %1669 = vmatpush1.msra.mxu0 %v30
  %1670 = vmatprep.subr.mxu0 0.0
  %1671 = vmatpush2.msra.mxu0 0.0
  %1672 = vmatprep.subr.mxu0 0.0
  %1673 = vmatpush2.msra.mxu0 0.0
  %1674 = vmatprep.subr.mxu0 0.0
  %1675 = vmatpush2.msra.mxu0 0.0
  %1676 = vmatprep.subr.mxu0 0.0
  %1677 = vmatpush2.msra.mxu0 0.0
  %1678 = vmatprep.subr.mxu0 0.0
  %1679 = vmatpush2.msra.mxu0 0.0
  %1680 = vmatprep.subr.mxu0 0.0
  %1681 = vmatpush2.msra.mxu0 0.0
  %1682 = vmatprep.subr.mxu0 0.0
  %1683 = vmatpush2.msra.mxu0 0.0
  %1684 = vmatprep.subr.mxu0 0.0
  %1685 = vmatpush2.msra.mxu0 0.0
  %1686 = vmatprep.subr.mxu0 0.0
  %1687 = vmatpush2.msra.mxu0 0.0
  %1688 = vmatprep.subr.mxu0 0.0
  %1689 = vmatpush2.msra.mxu0 0.0
  %1690 = vmatprep.subr.mxu0 0.0
  %1691 = vmatpush2.msra.mxu0 0.0
  %1692 = vmatprep.subr.mxu0 0.0
  %1693 = vmatpush2.msra.mxu0 0.0
  %1694 = vmatprep.subr.mxu0 0.0
  %1695 = vmatpush2.msra.mxu0 0.0
  %1696 = vmatprep.subr.mxu0 0.0
  %1697 = vmatpush2.msra.mxu0 0.0
  %1698 = vmatprep.subr.mxu0 0.0
  %1699 = vmatpush2.msra.mxu0 0.0
  %1700 = vmatprep.subr.mxu0 0.0
  %1701 = vmatpush2.msra.mxu0 0.0
  %1702 = vmatprep.mubr.f32.mxu0 0.0
  %1703 = vmatmul.mubr.f32.gmra.mxu0 %v1636
  %v1704 = vpop.f32.mrf.mxu0
  %v1705 = vadd.f32 %v1630, %v1704
  %v1706 = vpop.f32.mrf.mxu0
  %1707 = vdwg.mxu0
  %v1708 = vadd.f32 %v1705, %v307
  %v1709 = vxor.u32 %v1708, 2147483648
  %v1710 = vmul.f32 %v1709, 1.442695
  %v1711 = vpow.pop %v1710
  %v1712 = vadd.f32 %v1711, 1.0
  %v1713 = vrcp.pop %v1712
  %v1714 = vmul.f32 1.0, %v1713
  %v1715 = vtanh.pop %v1708
  %v1716 = vmul.f32 %v1714, %v1445
  %1718 = vrot.lane.b32.xlu0 %v1715, 116
  %v1719 = vpop.permute.xlu0 %1718
  %v1721 = vmul.f32 %v1714, %v1719
  %1723 = vrot.lane.b32.xlu0 %v1721, 4
  %v1724 = vpop.permute.xlu0 %1723
  %v1726 = vadd.f32 %v1716, %v1724
  %v1727 = vtanh.pop %v1726
  %1729 = vrot.lane.b32.xlu0 %v1727, 4
  %v1730 = vpop.permute.xlu0 %1729
  %v1732 = vmul.f32 %v1714, %v1730
  %1734 = vrot.lane.b32.xlu0 %v1732, 12
  %v1735 = vpop.permute.xlu0 %1734
  %vm1737 = vcmask 195744
  %1738 = vst.msk [vmem:[%s7] sm:$0xff] %vm1737, %v1735
  %1739 = vset.pattern.permute.xlu0 6
  %1740 = vperm.xlu0 %1739, %v26
  %v1741 = vpop.permute.xlu0 %1740
  %v1743 = vmul.f32 %v1741, %v42
  %v1744 = vadd.f32 %v1743, %v49
  %1745 = vmatprep.subr.mxu0 0.0
  %1746 = vmatpush1.msra.mxu0 0.0
  %1747 = vmatprep.subr.mxu0 0.0
  %1748 = vmatpush1.msra.mxu0 0.0
  %1749 = vmatprep.subr.mxu0 0.0
  %1750 = vmatpush1.msra.mxu0 0.0
  %1751 = vmatprep.subr.mxu0 0.0
  %1752 = vmatpush1.msra.mxu0 0.0
  %1753 = vmatprep.subr.mxu0 0.0
  %1754 = vmatpush1.msra.mxu0 0.0
  %1755 = vmatprep.subr.mxu0 0.0
  %1756 = vmatpush1.msra.mxu0 0.0
  %1757 = vmatprep.subr.mxu0 0.0
  %1758 = vmatpush1.msra.mxu0 0.0
  %1759 = vmatprep.subr.mxu0 0.0
  %1760 = vmatpush1.msra.mxu0 0.0
  %1761 = vmatprep.subr.mxu0 0.0
  %1762 = vmatpush1.msra.mxu0 0.0
  %1763 = vmatprep.subr.mxu0 0.0
  %1764 = vmatpush1.msra.mxu0 0.0
  %1765 = vmatprep.subr.mxu0 0.0
  %1766 = vmatpush1.msra.mxu0 0.0
  %1767 = vmatprep.subr.mxu0 0.0
  %1768 = vmatpush1.msra.mxu0 0.0
  %1769 = vmatprep.subr.mxu0 0.0
  %1770 = vmatpush1.msra.mxu0 0.0
  %1771 = vmatprep.subr.mxu0 0.0
  %1772 = vmatpush1.msra.mxu0 0.0
  %1773 = vmatprep.subr.mxu0 0.0
  %1774 = vmatpush1.msra.mxu0 0.0
  %1775 = vmatprep.subr.mxu0 0.0
  %1776 = vmatpush1.msra.mxu0 %v28
  %1777 = vmatprep.subr.mxu0 0.0
  %1778 = vmatpush2.msra.mxu0 0.0
  %1779 = vmatprep.subr.mxu0 0.0
  %1780 = vmatpush2.msra.mxu0 0.0
  %1781 = vmatprep.subr.mxu0 0.0
  %1782 = vmatpush2.msra.mxu0 0.0
  %1783 = vmatprep.subr.mxu0 0.0
  %1784 = vmatpush2.msra.mxu0 0.0
  %1785 = vmatprep.subr.mxu0 0.0
  %1786 = vmatpush2.msra.mxu0 0.0
  %1787 = vmatprep.subr.mxu0 0.0
  %1788 = vmatpush2.msra.mxu0 0.0
  %1789 = vmatprep.subr.mxu0 0.0
  %1790 = vmatpush2.msra.mxu0 0.0
  %1791 = vmatprep.subr.mxu0 0.0
  %1792 = vmatpush2.msra.mxu0 0.0
  %1793 = vmatprep.subr.mxu0 0.0
  %1794 = vmatpush2.msra.mxu0 0.0
  %1795 = vmatprep.subr.mxu0 0.0
  %1796 = vmatpush2.msra.mxu0 0.0
  %1797 = vmatprep.subr.mxu0 0.0
  %1798 = vmatpush2.msra.mxu0 0.0
  %1799 = vmatprep.subr.mxu0 0.0
  %1800 = vmatpush2.msra.mxu0 0.0
  %1801 = vmatprep.subr.mxu0 0.0
  %1802 = vmatpush2.msra.mxu0 0.0
  %1803 = vmatprep.subr.mxu0 0.0
  %1804 = vmatpush2.msra.mxu0 0.0
  %1805 = vmatprep.subr.mxu0 0.0
  %1806 = vmatpush2.msra.mxu0 0.0
  %1807 = vmatprep.subr.mxu0 0.0
  %1808 = vmatpush2.msra.mxu0 0.0
  %1809 = vmatprep.mubr.f32.mxu0 0.0
  %1810 = vmatmul.mubr.f32.gmra.mxu0 %v1636
  %v1811 = vpop.f32.mrf.mxu0
  %v1812 = vadd.f32 0.0, %v1811
  %v1813 = vpop.f32.mrf.mxu0
  %1814 = vdwg.mxu0
  %v1815 = vadd.f32 %v1744, %v1812
  %v1816 = vxor.u32 %v1815, 2147483648
  %v1817 = vmul.f32 %v1816, 1.442695
  %v1818 = vpow.pop %v1817
  %v1819 = vadd.f32 %v1818, 1.0
  %v1820 = vrcp.pop %v1819
  %v1821 = vmul.f32 1.0, %v1820
  %v1822 = vtanh.pop %v1815
  %v1823 = vmul.f32 %v1821, %v1552
  %1825 = vrot.lane.b32.xlu0 %v1822, 104
  %v1826 = vpop.permute.xlu0 %1825
  %v1828 = vmul.f32 %v1821, %v1826
  %1830 = vrot.lane.b32.xlu0 %v1828, 8
  %v1831 = vpop.permute.xlu0 %1830
  %v1833 = vadd.f32 %v1823, %v1831
  %v1834 = vtanh.pop %v1833
  %1836 = vrot.lane.b32.xlu0 %v1834, 8
  %v1837 = vpop.permute.xlu0 %1836
  %v1839 = vmul.f32 %v1821, %v1837
  %1840 = vrot.lane.b32.xlu0 %v1732, 120
  %v1841 = vpop.permute.xlu0 %1840
  %v1842 = vsel %vm151, %v1841, 0
  %1844 = vmatprep.subr.mxu0 0.0
  %1845 = vmatpush1.msra.mxu0 0.0
  %1846 = vmatprep.subr.mxu0 0.0
  %1847 = vmatpush1.msra.mxu0 0.0
  %1848 = vmatprep.subr.mxu0 0.0
  %1849 = vmatpush1.msra.mxu0 0.0
  %1850 = vmatprep.subr.mxu0 0.0
  %1851 = vmatpush1.msra.mxu0 0.0
  %1852 = vmatprep.subr.mxu0 0.0
  %1853 = vmatpush1.msra.mxu0 0.0
  %1854 = vmatprep.subr.mxu0 0.0
  %1855 = vmatpush1.msra.mxu0 0.0
  %1856 = vmatprep.subr.mxu0 0.0
  %1857 = vmatpush1.msra.mxu0 0.0
  %1858 = vmatprep.subr.mxu0 0.0
  %1859 = vmatpush1.msra.mxu0 0.0
  %1860 = vmatprep.subr.mxu0 0.0
  %1861 = vmatpush1.msra.mxu0 0.0
  %1862 = vmatprep.subr.mxu0 0.0
  %1863 = vmatpush1.msra.mxu0 0.0
  %1864 = vmatprep.subr.mxu0 0.0
  %1865 = vmatpush1.msra.mxu0 0.0
  %1866 = vmatprep.subr.mxu0 0.0
  %1867 = vmatpush1.msra.mxu0 0.0
  %1868 = vmatprep.subr.mxu0 0.0
  %1869 = vmatpush1.msra.mxu0 0.0
  %1870 = vmatprep.subr.mxu0 0.0
  %1871 = vmatpush1.msra.mxu0 0.0
  %1872 = vmatprep.subr.mxu0 0.0
  %1873 = vmatpush1.msra.mxu0 0.0
  %1874 = vmatprep.subr.mxu0 0.0
  %1875 = vmatpush1.msra.mxu0 %v156
  %1876 = vmatprep.subr.mxu0 0.0
  %1877 = vmatpush2.msra.mxu0 0.0
  %1878 = vmatprep.subr.mxu0 0.0
  %1879 = vmatpush2.msra.mxu0 0.0
  %1880 = vmatprep.subr.mxu0 0.0
  %1881 = vmatpush2.msra.mxu0 0.0
  %1882 = vmatprep.subr.mxu0 0.0
  %1883 = vmatpush2.msra.mxu0 0.0
  %1884 = vmatprep.subr.mxu0 0.0
  %1885 = vmatpush2.msra.mxu0 0.0
  %1886 = vmatprep.subr.mxu0 0.0
  %1887 = vmatpush2.msra.mxu0 0.0
  %1888 = vmatprep.subr.mxu0 0.0
  %1889 = vmatpush2.msra.mxu0 0.0
  %1890 = vmatprep.subr.mxu0 0.0
  %1891 = vmatpush2.msra.mxu0 0.0
  %1892 = vmatprep.subr.mxu0 0.0
  %1893 = vmatpush2.msra.mxu0 0.0
  %1894 = vmatprep.subr.mxu0 0.0
  %1895 = vmatpush2.msra.mxu0 0.0
  %1896 = vmatprep.subr.mxu0 0.0
  %1897 = vmatpush2.msra.mxu0 0.0
  %1898 = vmatprep.subr.mxu0 0.0
  %1899 = vmatpush2.msra.mxu0 0.0
  %1900 = vmatprep.subr.mxu0 0.0
  %1901 = vmatpush2.msra.mxu0 0.0
  %1902 = vmatprep.subr.mxu0 0.0
  %1903 = vmatpush2.msra.mxu0 0.0
  %1904 = vmatprep.subr.mxu0 0.0
  %1905 = vmatpush2.msra.mxu0 0.0
  %1906 = vmatprep.subr.mxu0 0.0
  %1907 = vmatpush2.msra.mxu0 0.0
  %1908 = vmatprep.mubr.f32.mxu0 0.0
  %1909 = vmatmul.mubr.f32.gmra.mxu0 %v1842
  %v1910 = vpop.f32.mrf.mxu0
  %v1911 = vadd.f32 0.0, %v1910
  %v1912 = vpop.f32.mrf.mxu0
  %1913 = vdwg.mxu0
  %1915 = vrot.lane.b32.xlu0 %v1839, 112
  %v1916 = vpop.permute.xlu0 %1915
  %v1917 = vsel %vm52, %v1916, 0
  %1919 = vmatprep.subr.mxu0 0.0
  %1920 = vmatpush1.msra.mxu0 0.0
  %1921 = vmatprep.subr.mxu0 0.0
  %1922 = vmatpush1.msra.mxu0 0.0
  %1923 = vmatprep.subr.mxu0 0.0
  %1924 = vmatpush1.msra.mxu0 0.0
  %1925 = vmatprep.subr.mxu0 0.0
  %1926 = vmatpush1.msra.mxu0 0.0
  %1927 = vmatprep.subr.mxu0 0.0
  %1928 = vmatpush1.msra.mxu0 0.0
  %1929 = vmatprep.subr.mxu0 0.0
  %1930 = vmatpush1.msra.mxu0 0.0
  %1931 = vmatprep.subr.mxu0 0.0
  %1932 = vmatpush1.msra.mxu0 0.0
  %1933 = vmatprep.subr.mxu0 0.0
  %1934 = vmatpush1.msra.mxu0 0.0
  %1935 = vmatprep.subr.mxu0 0.0
  %1936 = vmatpush1.msra.mxu0 0.0
  %1937 = vmatprep.subr.mxu0 0.0
  %1938 = vmatpush1.msra.mxu0 0.0
  %1939 = vmatprep.subr.mxu0 0.0
  %1940 = vmatpush1.msra.mxu0 0.0
  %1941 = vmatprep.subr.mxu0 0.0
  %1942 = vmatpush1.msra.mxu0 0.0
  %1943 = vmatprep.subr.mxu0 0.0
  %1944 = vmatpush1.msra.mxu0 0.0
  %1945 = vmatprep.subr.mxu0 0.0
  %1946 = vmatpush1.msra.mxu0 0.0
  %1947 = vmatprep.subr.mxu0 0.0
  %1948 = vmatpush1.msra.mxu0 0.0
  %1949 = vmatprep.subr.mxu0 0.0
  %1950 = vmatpush1.msra.mxu0 %v30
  %1951 = vmatprep.subr.mxu0 0.0
  %1952 = vmatpush2.msra.mxu0 0.0
  %1953 = vmatprep.subr.mxu0 0.0
  %1954 = vmatpush2.msra.mxu0 0.0
  %1955 = vmatprep.subr.mxu0 0.0
  %1956 = vmatpush2.msra.mxu0 0.0
  %1957 = vmatprep.subr.mxu0 0.0
  %1958 = vmatpush2.msra.mxu0 0.0
  %1959 = vmatprep.subr.mxu0 0.0
  %1960 = vmatpush2.msra.mxu0 0.0
  %1961 = vmatprep.subr.mxu0 0.0
  %1962 = vmatpush2.msra.mxu0 0.0
  %1963 = vmatprep.subr.mxu0 0.0
  %1964 = vmatpush2.msra.mxu0 0.0
  %1965 = vmatprep.subr.mxu0 0.0
  %1966 = vmatpush2.msra.mxu0 0.0
  %1967 = vmatprep.subr.mxu0 0.0
  %1968 = vmatpush2.msra.mxu0 0.0
  %1969 = vmatprep.subr.mxu0 0.0
  %1970 = vmatpush2.msra.mxu0 0.0
  %1971 = vmatprep.subr.mxu0 0.0
  %1972 = vmatpush2.msra.mxu0 0.0
  %1973 = vmatprep.subr.mxu0 0.0
  %1974 = vmatpush2.msra.mxu0 0.0
  %1975 = vmatprep.subr.mxu0 0.0
  %1976 = vmatpush2.msra.mxu0 0.0
  %1977 = vmatprep.subr.mxu0 0.0
  %1978 = vmatpush2.msra.mxu0 0.0
  %1979 = vmatprep.subr.mxu0 0.0
  %1980 = vmatpush2.msra.mxu0 0.0
  %1981 = vmatprep.subr.mxu0 0.0
  %1982 = vmatpush2.msra.mxu0 0.0
  %1983 = vmatprep.mubr.f32.mxu0 0.0
  %1984 = vmatmul.mubr.f32.gmra.mxu0 %v1917
  %v1985 = vpop.f32.mrf.mxu0
  %v1986 = vadd.f32 %v1911, %v1985
  %v1987 = vpop.f32.mrf.mxu0
  %1988 = vdwg.mxu0
  %v1989 = vadd.f32 %v1986, %v307
  %v1990 = vxor.u32 %v1989, 2147483648
  %v1991 = vmul.f32 %v1990, 1.442695
  %v1992 = vpow.pop %v1991
  %v1993 = vadd.f32 %v1992, 1.0
  %v1994 = vrcp.pop %v1993
  %v1995 = vmul.f32 1.0, %v1994
  %v1996 = vtanh.pop %v1989
  %v1997 = vmul.f32 %v1995, %v1726
  %1999 = vrot.lane.b32.xlu0 %v1996, 116
  %v2000 = vpop.permute.xlu0 %1999
  %v2002 = vmul.f32 %v1995, %v2000
  %2004 = vrot.lane.b32.xlu0 %v2002, 4
  %v2005 = vpop.permute.xlu0 %2004
  %v2007 = vadd.f32 %v1997, %v2005
  %v2008 = vtanh.pop %v2007
  %2010 = vrot.lane.b32.xlu0 %v2008, 4
  %v2011 = vpop.permute.xlu0 %2010
  %v2013 = vmul.f32 %v1995, %v2011
  %2015 = vrot.lane.b32.xlu0 %v2013, 16
  %v2016 = vpop.permute.xlu0 %2015
  %vm2018 = vcmask 228544
  %2019 = vst.msk [vmem:[%s7] sm:$0xff] %vm2018, %v2016
  %2020 = vset.pattern.permute.xlu0 7
  %2021 = vperm.xlu0 %2020, %v26
  %v2022 = vpop.permute.xlu0 %2021
  %v2024 = vmul.f32 %v2022, %v42
  %v2025 = vadd.f32 %v2024, %v49
  %2026 = vmatprep.subr.mxu0 0.0
  %2027 = vmatpush1.msra.mxu0 0.0
  %2028 = vmatprep.subr.mxu0 0.0
  %2029 = vmatpush1.msra.mxu0 0.0
  %2030 = vmatprep.subr.mxu0 0.0
  %2031 = vmatpush1.msra.mxu0 0.0
  %2032 = vmatprep.subr.mxu0 0.0
  %2033 = vmatpush1.msra.mxu0 0.0
  %2034 = vmatprep.subr.mxu0 0.0
  %2035 = vmatpush1.msra.mxu0 0.0
  %2036 = vmatprep.subr.mxu0 0.0
  %2037 = vmatpush1.msra.mxu0 0.0
  %2038 = vmatprep.subr.mxu0 0.0
  %2039 = vmatpush1.msra.mxu0 0.0
  %2040 = vmatprep.subr.mxu0 0.0
  %2041 = vmatpush1.msra.mxu0 0.0
  %2042 = vmatprep.subr.mxu0 0.0
  %2043 = vmatpush1.msra.mxu0 0.0
  %2044 = vmatprep.subr.mxu0 0.0
  %2045 = vmatpush1.msra.mxu0 0.0
  %2046 = vmatprep.subr.mxu0 0.0
  %2047 = vmatpush1.msra.mxu0 0.0
  %2048 = vmatprep.subr.mxu0 0.0
  %2049 = vmatpush1.msra.mxu0 0.0
  %2050 = vmatprep.subr.mxu0 0.0
  %2051 = vmatpush1.msra.mxu0 0.0
  %2052 = vmatprep.subr.mxu0 0.0
  %2053 = vmatpush1.msra.mxu0 0.0
  %2054 = vmatprep.subr.mxu0 0.0
  %2055 = vmatpush1.msra.mxu0 0.0
  %2056 = vmatprep.subr.mxu0 0.0
  %2057 = vmatpush1.msra.mxu0 %v28
  %2058 = vmatprep.subr.mxu0 0.0
  %2059 = vmatpush2.msra.mxu0 0.0
  %2060 = vmatprep.subr.mxu0 0.0
  %2061 = vmatpush2.msra.mxu0 0.0
  %2062 = vmatprep.subr.mxu0 0.0
  %2063 = vmatpush2.msra.mxu0 0.0
  %2064 = vmatprep.subr.mxu0 0.0
  %2065 = vmatpush2.msra.mxu0 0.0
  %2066 = vmatprep.subr.mxu0 0.0
  %2067 = vmatpush2.msra.mxu0 0.0
  %2068 = vmatprep.subr.mxu0 0.0
  %2069 = vmatpush2.msra.mxu0 0.0
  %2070 = vmatprep.subr.mxu0 0.0
  %2071 = vmatpush2.msra.mxu0 0.0
  %2072 = vmatprep.subr.mxu0 0.0
  %2073 = vmatpush2.msra.mxu0 0.0
  %2074 = vmatprep.subr.mxu0 0.0
  %2075 = vmatpush2.msra.mxu0 0.0
  %2076 = vmatprep.subr.mxu0 0.0
  %2077 = vmatpush2.msra.mxu0 0.0
  %2078 = vmatprep.subr.mxu0 0.0
  %2079 = vmatpush2.msra.mxu0 0.0
  %2080 = vmatprep.subr.mxu0 0.0
  %2081 = vmatpush2.msra.mxu0 0.0
  %2082 = vmatprep.subr.mxu0 0.0
  %2083 = vmatpush2.msra.mxu0 0.0
  %2084 = vmatprep.subr.mxu0 0.0
  %2085 = vmatpush2.msra.mxu0 0.0
  %2086 = vmatprep.subr.mxu0 0.0
  %2087 = vmatpush2.msra.mxu0 0.0
  %2088 = vmatprep.subr.mxu0 0.0
  %2089 = vmatpush2.msra.mxu0 0.0
  %2090 = vmatprep.mubr.f32.mxu0 0.0
  %2091 = vmatmul.mubr.f32.gmra.mxu0 %v1917
  %v2092 = vpop.f32.mrf.mxu0
  %v2093 = vadd.f32 0.0, %v2092
  %v2094 = vpop.f32.mrf.mxu0
  %2095 = vdwg.mxu0
  %v2096 = vadd.f32 %v2025, %v2093
  %v2097 = vxor.u32 %v2096, 2147483648
  %v2098 = vmul.f32 %v2097, 1.442695
  %v2099 = vpow.pop %v2098
  %v2100 = vadd.f32 %v2099, 1.0
  %v2101 = vrcp.pop %v2100
  %v2102 = vmul.f32 1.0, %v2101
  %v2103 = vtanh.pop %v2096
  %v2104 = vmul.f32 %v2102, %v1833
  %2106 = vrot.lane.b32.xlu0 %v2103, 104
  %v2107 = vpop.permute.xlu0 %2106
  %v2109 = vmul.f32 %v2102, %v2107
  %2111 = vrot.lane.b32.xlu0 %v2109, 8
  %v2112 = vpop.permute.xlu0 %2111
  %v2114 = vadd.f32 %v2104, %v2112
  %v2115 = vtanh.pop %v2114
  %2117 = vrot.lane.b32.xlu0 %v2115, 8
  %v2118 = vpop.permute.xlu0 %2117
  %v2120 = vmul.f32 %v2102, %v2118
  %2121 = vrot.lane.b32.xlu0 %v2013, 120
  %v2122 = vpop.permute.xlu0 %2121
  %v2123 = vsel %vm151, %v2122, 0
  %2125 = vmatprep.subr.mxu0 0.0
  %2126 = vmatpush1.msra.mxu0 0.0
  %2127 = vmatprep.subr.mxu0 0.0
  %2128 = vmatpush1.msra.mxu0 0.0
  %2129 = vmatprep.subr.mxu0 0.0
  %2130 = vmatpush1.msra.mxu0 0.0
  %2131 = vmatprep.subr.mxu0 0.0
  %2132 = vmatpush1.msra.mxu0 0.0
  %2133 = vmatprep.subr.mxu0 0.0
  %2134 = vmatpush1.msra.mxu0 0.0
  %2135 = vmatprep.subr.mxu0 0.0
  %2136 = vmatpush1.msra.mxu0 0.0
  %2137 = vmatprep.subr.mxu0 0.0
  %2138 = vmatpush1.msra.mxu0 0.0
  %2139 = vmatprep.subr.mxu0 0.0
  %2140 = vmatpush1.msra.mxu0 0.0
  %2141 = vmatprep.subr.mxu0 0.0
  %2142 = vmatpush1.msra.mxu0 0.0
  %2143 = vmatprep.subr.mxu0 0.0
  %2144 = vmatpush1.msra.mxu0 0.0
  %2145 = vmatprep.subr.mxu0 0.0
  %2146 = vmatpush1.msra.mxu0 0.0
  %2147 = vmatprep.subr.mxu0 0.0
  %2148 = vmatpush1.msra.mxu0 0.0
  %2149 = vmatprep.subr.mxu0 0.0
  %2150 = vmatpush1.msra.mxu0 0.0
  %2151 = vmatprep.subr.mxu0 0.0
  %2152 = vmatpush1.msra.mxu0 0.0
  %2153 = vmatprep.subr.mxu0 0.0
  %2154 = vmatpush1.msra.mxu0 0.0
  %2155 = vmatprep.subr.mxu0 0.0
  %2156 = vmatpush1.msra.mxu0 %v156
  %2157 = vmatprep.subr.mxu0 0.0
  %2158 = vmatpush2.msra.mxu0 0.0
  %2159 = vmatprep.subr.mxu0 0.0
  %2160 = vmatpush2.msra.mxu0 0.0
  %2161 = vmatprep.subr.mxu0 0.0
  %2162 = vmatpush2.msra.mxu0 0.0
  %2163 = vmatprep.subr.mxu0 0.0
  %2164 = vmatpush2.msra.mxu0 0.0
  %2165 = vmatprep.subr.mxu0 0.0
  %2166 = vmatpush2.msra.mxu0 0.0
  %2167 = vmatprep.subr.mxu0 0.0
  %2168 = vmatpush2.msra.mxu0 0.0
  %2169 = vmatprep.subr.mxu0 0.0
  %2170 = vmatpush2.msra.mxu0 0.0
  %2171 = vmatprep.subr.mxu0 0.0
  %2172 = vmatpush2.msra.mxu0 0.0
  %2173 = vmatprep.subr.mxu0 0.0
  %2174 = vmatpush2.msra.mxu0 0.0
  %2175 = vmatprep.subr.mxu0 0.0
  %2176 = vmatpush2.msra.mxu0 0.0
  %2177 = vmatprep.subr.mxu0 0.0
  %2178 = vmatpush2.msra.mxu0 0.0
  %2179 = vmatprep.subr.mxu0 0.0
  %2180 = vmatpush2.msra.mxu0 0.0
  %2181 = vmatprep.subr.mxu0 0.0
  %2182 = vmatpush2.msra.mxu0 0.0
  %2183 = vmatprep.subr.mxu0 0.0
  %2184 = vmatpush2.msra.mxu0 0.0
  %2185 = vmatprep.subr.mxu0 0.0
  %2186 = vmatpush2.msra.mxu0 0.0
  %2187 = vmatprep.subr.mxu0 0.0
  %2188 = vmatpush2.msra.mxu0 0.0
  %2189 = vmatprep.mubr.f32.mxu0 0.0
  %2190 = vmatmul.mubr.f32.gmra.mxu0 %v2123
  %v2191 = vpop.f32.mrf.mxu0
  %v2192 = vadd.f32 0.0, %v2191
  %v2193 = vpop.f32.mrf.mxu0
  %2194 = vdwg.mxu0
  %2196 = vrot.lane.b32.xlu0 %v2120, 112
  %v2197 = vpop.permute.xlu0 %2196
  %v2198 = vsel %vm52, %v2197, 0
  %2200 = vmatprep.subr.mxu0 0.0
  %2201 = vmatpush1.msra.mxu0 0.0
  %2202 = vmatprep.subr.mxu0 0.0
  %2203 = vmatpush1.msra.mxu0 0.0
  %2204 = vmatprep.subr.mxu0 0.0
  %2205 = vmatpush1.msra.mxu0 0.0
  %2206 = vmatprep.subr.mxu0 0.0
  %2207 = vmatpush1.msra.mxu0 0.0
  %2208 = vmatprep.subr.mxu0 0.0
  %2209 = vmatpush1.msra.mxu0 0.0
  %2210 = vmatprep.subr.mxu0 0.0
  %2211 = vmatpush1.msra.mxu0 0.0
  %2212 = vmatprep.subr.mxu0 0.0
  %2213 = vmatpush1.msra.mxu0 0.0
  %2214 = vmatprep.subr.mxu0 0.0
  %2215 = vmatpush1.msra.mxu0 0.0
  %2216 = vmatprep.subr.mxu0 0.0
  %2217 = vmatpush1.msra.mxu0 0.0
  %2218 = vmatprep.subr.mxu0 0.0
  %2219 = vmatpush1.msra.mxu0 0.0
  %2220 = vmatprep.subr.mxu0 0.0
  %2221 = vmatpush1.msra.mxu0 0.0
  %2222 = vmatprep.subr.mxu0 0.0
  %2223 = vmatpush1.msra.mxu0 0.0
  %2224 = vmatprep.subr.mxu0 0.0
  %2225 = vmatpush1.msra.mxu0 0.0
  %2226 = vmatprep.subr.mxu0 0.0
  %2227 = vmatpush1.msra.mxu0 0.0
  %2228 = vmatprep.subr.mxu0 0.0
  %2229 = vmatpush1.msra.mxu0 0.0
  %2230 = vmatprep.subr.mxu0 0.0
  %2231 = vmatpush1.msra.mxu0 %v30
  %2232 = vmatprep.subr.mxu0 0.0
  %2233 = vmatpush2.msra.mxu0 0.0
  %2234 = vmatprep.subr.mxu0 0.0
  %2235 = vmatpush2.msra.mxu0 0.0
  %2236 = vmatprep.subr.mxu0 0.0
  %2237 = vmatpush2.msra.mxu0 0.0
  %2238 = vmatprep.subr.mxu0 0.0
  %2239 = vmatpush2.msra.mxu0 0.0
  %2240 = vmatprep.subr.mxu0 0.0
  %2241 = vmatpush2.msra.mxu0 0.0
  %2242 = vmatprep.subr.mxu0 0.0
  %2243 = vmatpush2.msra.mxu0 0.0
  %2244 = vmatprep.subr.mxu0 0.0
  %2245 = vmatpush2.msra.mxu0 0.0
  %2246 = vmatprep.subr.mxu0 0.0
  %2247 = vmatpush2.msra.mxu0 0.0
  %2248 = vmatprep.subr.mxu0 0.0
  %2249 = vmatpush2.msra.mxu0 0.0
  %2250 = vmatprep.subr.mxu0 0.0
  %2251 = vmatpush2.msra.mxu0 0.0
  %2252 = vmatprep.subr.mxu0 0.0
  %2253 = vmatpush2.msra.mxu0 0.0
  %2254 = vmatprep.subr.mxu0 0.0
  %2255 = vmatpush2.msra.mxu0 0.0
  %2256 = vmatprep.subr.mxu0 0.0
  %2257 = vmatpush2.msra.mxu0 0.0
  %2258 = vmatprep.subr.mxu0 0.0
  %2259 = vmatpush2.msra.mxu0 0.0
  %2260 = vmatprep.subr.mxu0 0.0
  %2261 = vmatpush2.msra.mxu0 0.0
  %2262 = vmatprep.subr.mxu0 0.0
  %2263 = vmatpush2.msra.mxu0 0.0
  %2264 = vmatprep.mubr.f32.mxu0 0.0
  %2265 = vmatmul.mubr.f32.gmra.mxu0 %v2198
  %v2266 = vpop.f32.mrf.mxu0
  %v2267 = vadd.f32 %v2192, %v2266
  %v2268 = vpop.f32.mrf.mxu0
  %2269 = vdwg.mxu0
  %v2270 = vadd.f32 %v2267, %v307
  %v2271 = vxor.u32 %v2270, 2147483648
  %v2272 = vmul.f32 %v2271, 1.442695
  %v2273 = vpow.pop %v2272
  %v2274 = vadd.f32 %v2273, 1.0
  %v2275 = vrcp.pop %v2274
  %v2276 = vmul.f32 1.0, %v2275
  %v2277 = vtanh.pop %v2270
  %v2278 = vmul.f32 %v2276, %v2007
  %2280 = vrot.lane.b32.xlu0 %v2277, 116
  %v2281 = vpop.permute.xlu0 %2280
  %v2283 = vmul.f32 %v2276, %v2281
  %2285 = vrot.lane.b32.xlu0 %v2283, 4
  %v2286 = vpop.permute.xlu0 %2285
  %v2288 = vadd.f32 %v2278, %v2286
  %v2289 = vtanh.pop %v2288
  %2291 = vrot.lane.b32.xlu0 %v2289, 4
  %v2292 = vpop.permute.xlu0 %2291
  %v2294 = vmul.f32 %v2276, %v2292
  %2296 = vrot.lane.b32.xlu0 %v2294, 20
  %v2297 = vpop.permute.xlu0 %2296
  %vm2299 = vcmask 261344
  %2300 = vst.msk [vmem:[%s7] sm:$0xff] %vm2299, %v2297
  // Predicated region
  $region30: #{graphsage_forward.4} parent=0 // pred_check
    _
  $region31: #{graphsage_forward.4} parent=0 // pred_check_branch
    %2302 = sbr.rel (0) target = $region33
  $region32: #{graphsage_forward.4} parent=0 // pred_region
    _
  $region33: #{graphsage_forward.4} parent=0 // pred_fallthru
    _
  // Predicated region
  $region34: #{graphsage_forward.4} parent=0 // pred_check
    _
  $region35: #{graphsage_forward.4} parent=0 // pred_check_branch
    %2304 = sbr.rel (0) target = $region37
  $region36: #{graphsage_forward.4} parent=0 // pred_region
    _
  $region37: #{graphsage_forward.4} parent=0 // pred_fallthru
    _

</llo_original>
